<compile_context>
chip_gen: v6e
topology: v6e:2x2x1
jax: 0.10.0
libtpu: 0.0.40
codegen_flags: <defaults>
</compile_context>

<pallas_src>
import jax
import jax.numpy as jnp
from jax.experimental import pallas as pl
from jax.experimental.pallas import tpu as pltpu


# ---------------------------------------------------------------------------
# Fused ResBlock kernel: one grid step == one image.
# ---------------------------------------------------------------------------
def resblock_kernel(xp_ref, w1_ref, b1_ref, w2_ref, b2_ref, out_ref, h1p_ref):
    """Fused conv1+bn1+relu -> conv2+bn2+identity+relu for one image.

    xp_ref : (1, H+2, W+2, C)   zero-padded input activations, bf16
    w1_ref : (9*C, Cout)        conv1 weights with bn1 scale folded in, bf16
    b1_ref : (1, Cout)          folded bn1 bias, f32
    w2_ref : (9*Cout, Cout)     conv2 weights with bn2 scale folded in, bf16
    b2_ref : (1, Cout)          folded bn2 bias, f32
    out_ref: (H*W, Cout)        output rows for this image, f32
    h1p_ref: (H+2, W+2, Cout)   VMEM scratch: zero-padded stage-1 output, bf16
    """
    Hp, Wp, C = xp_ref.shape[1], xp_ref.shape[2], xp_ref.shape[3]
    H, W = Hp - 2, Wp - 2
    Cout = out_ref.shape[-1]
    M = H * W

    xp = xp_ref[0]                                     # (Hp, Wp, C) bf16

    # ---- stage 1: conv1 (bn1 scale pre-folded into w1) + bias + ReLU --------
    acc = jnp.zeros((M, Cout), jnp.float32)
    for ky in range(3):
        for kx in range(3):
            t = ky * 3 + kx
            patch = xp[ky:ky + H, kx:kx + W, :].reshape(M, C)        # bf16
            w_tap = w1_ref[t * C:(t + 1) * C, :]                     # (C, Cout)
            acc = acc + jnp.dot(patch, w_tap,
                                preferred_element_type=jnp.float32)
    h1 = jnp.maximum(acc + b1_ref[...], 0.0)           # (M, Cout) f32

    # Stage-1 result stays VMEM-resident; build its zero halo for conv2.
    h1p_ref[...] = jnp.zeros_like(h1p_ref)
    h1p_ref[1:H + 1, 1:W + 1, :] = h1.reshape(H, W, Cout).astype(h1p_ref.dtype)
    h1p = h1p_ref[...]                                 # (Hp, Wp, Cout) bf16

    # ---- stage 2: conv2 (bn2 scale folded) + bias + identity + ReLU ---------
    acc = jnp.zeros((M, Cout), jnp.float32)
    for ky in range(3):
        for kx in range(3):
            t = ky * 3 + kx
            patch = h1p[ky:ky + H, kx:kx + W, :].reshape(M, Cout)
            w_tap = w2_ref[t * Cout:(t + 1) * Cout, :]
            acc = acc + jnp.dot(patch, w_tap,
                                preferred_element_type=jnp.float32)
    identity = xp[1:H + 1, 1:W + 1, :].reshape(M, C).astype(jnp.float32)
    y = jnp.maximum(acc + b2_ref[...] + identity, 0.0)
    out_ref[...] = y.astype(out_ref.dtype)


# ---------------------------------------------------------------------------
# Wrapper: NCHW -> NHWC, pad once, bf16 cast, one pallas_call over the batch.
# ---------------------------------------------------------------------------
def resblock_forward(x_nchw, params):
    x = jnp.transpose(x_nchw, (0, 2, 3, 1))            # NCHW -> NHWC
    N, H, W, C = x.shape
    Cout = params["b1"].shape[-1]
    assert C == Cout, "identity residual requires in_channels == out_channels"

    # Zero-pad spatially once in XLA and cast activations to bf16 (halves the
    # dominant HBM stream; matmul accumulation stays f32 in the kernel).
    xp = jnp.pad(x, ((0, 0), (1, 1), (1, 1), (0, 0))).astype(jnp.bfloat16)

    out2d = pl.pallas_call(
        resblock_kernel,
        out_shape=jax.ShapeDtypeStruct((N * H * W, Cout), jnp.float32),
        grid=(N,),
        in_specs=[
            pl.BlockSpec((1, H + 2, W + 2, C), lambda b: (b, 0, 0, 0)),
            pl.BlockSpec((9 * C, Cout), lambda b: (0, 0)),
            pl.BlockSpec((1, Cout), lambda b: (0, 0)),
            pl.BlockSpec((9 * Cout, Cout), lambda b: (0, 0)),
            pl.BlockSpec((1, Cout), lambda b: (0, 0)),
        ],
        out_specs=pl.BlockSpec((H * W, Cout), lambda b: (b, 0)),
        scratch_shapes=[pltpu.VMEM((H + 2, W + 2, Cout), jnp.bfloat16)],
        compiler_params=pltpu.CompilerParams(
            dimension_semantics=("parallel",)),
    )(xp, params["w1f"], params["b1"], params["w2f"], params["b2"])

    out = out2d.reshape(N, H, W, Cout)
    return jnp.transpose(out, (0, 3, 1, 2))            # back to NCHW


# ---------------------------------------------------------------------------
# Deterministic parameters (BN folded, scale pre-multiplied into weights)
# ---------------------------------------------------------------------------
def make_params(key, cin, cout, eps=1e-5):
    ks = jax.random.split(key, 10)
    w1 = jax.random.normal(ks[0], (3, 3, cin, cout), jnp.float32) * 0.1   # HWIO
    w2 = jax.random.normal(ks[1], (3, 3, cout, cout), jnp.float32) * 0.1

    def bn_fold(kg, kb, km, kv, c):
        gamma = 1.0 + 0.1 * jax.random.normal(kg, (c,), jnp.float32)
        beta = 0.1 * jax.random.normal(kb, (c,), jnp.float32)
        rmean = 0.1 * jax.random.normal(km, (c,), jnp.float32)
        rvar = 0.5 + jnp.abs(jax.random.normal(kv, (c,), jnp.float32)) * 0.5
        scale = gamma / jnp.sqrt(rvar + eps)
        bias = beta - rmean * scale
        return scale, bias

    s1, b1 = bn_fold(ks[2], ks[3], ks[4], ks[5], cout)
    s2, b2 = bn_fold(ks[6], ks[7], ks[8], ks[9], cout)

    # Fold BN scale into the conv weights (conv is linear in w), bf16 for MXU.
    w1f = (w1 * s1[None, None, None, :]).reshape(9 * cin, cout).astype(jnp.bfloat16)
    w2f = (w2 * s2[None, None, None, :]).reshape(9 * cout, cout).astype(jnp.bfloat16)

    return dict(
        w1=w1, w2=w2, s1=s1, s2=s2,
        w1f=w1f, w2f=w2f,
        b1=b1.reshape(1, cout), b2=b2.reshape(1, cout),
    )


# ---------------------------------------------------------------------------
# Pure-JAX f32 reference (matches the PyTorch module in eval mode)
# ---------------------------------------------------------------------------
def resblock_reference(x_nchw, params):
    x = jnp.transpose(x_nchw, (0, 2, 3, 1)).astype(jnp.float32)

    def conv(a, w):
        return jax.lax.conv_general_dilated(
            a, w, window_strides=(1, 1), padding="SAME",
            dimension_numbers=("NHWC", "HWIO", "NHWC"),
            precision=jax.lax.Precision.HIGHEST)

    h = jnp.maximum(conv(x, params["w1"]) * params["s1"] + params["b1"][0], 0.0)
    y = conv(h, params["w2"]) * params["s2"] + params["b2"][0] + x
    y = jnp.maximum(y, 0.0)
    return jnp.transpose(y, (0, 3, 1, 2))


# ---------------------------------------------------------------------------
if __name__ == "__main__":
    key = jax.random.PRNGKey(0)
    kx, kp = jax.random.split(key)

    N, C, H, W = 2, 4, 16, 16          # in_channels == out_channels == 4
    x = jax.random.normal(kx, (N, C, H, W), jnp.float32)
    params = make_params(kp, C, C)

    out = jax.jit(resblock_forward)(x, params)
    out = jax.block_until_ready(out)

    ref = resblock_reference(x, params)
    assert out.shape == (N, C, H, W)
    max_err = float(jnp.max(jnp.abs(out - ref)))
    # bf16 matmul operands with f32 accumulation -> loosened tolerance.
    assert jnp.allclose(out, ref, atol=5e-2, rtol=5e-2), max_err

    print("KERNEL_OK")
</pallas_src>

<mosaic_0001>
module attributes {stable_mosaic.version = 11 : i64} {
  func.func @resblock_kernel(%arg0: i32, %arg1: memref<1x18x18x4xbf16, #tpu.memory_space<vmem>>, %arg2: memref<36x4xbf16, #tpu.memory_space<vmem>>, %arg3: memref<1x4xf32, #tpu.memory_space<vmem>>, %arg4: memref<36x4xbf16, #tpu.memory_space<vmem>>, %arg5: memref<1x4xf32, #tpu.memory_space<vmem>>, %arg6: memref<256x4xf32, #tpu.memory_space<vmem>>, %arg7: memref<18x18x4xbf16, #tpu.memory_space<vmem>>) attributes {dimension_semantics = [#tpu.dimension_semantics<parallel>], iteration_bounds = array<i64: 2>, scalar_prefetch = 0 : i64, scratch_operands = 1 : i64, tpu.core_type = #tpu.core_type<tc>, window_params = [{transform_indices = @transform_0, window_bounds = array<i64: 1, 18, 18, 4>}, {pipeline_mode = #tpu.pipeline_mode<synchronous>, transform_indices = @transform_1, window_bounds = array<i64: 36, 4>}, {pipeline_mode = #tpu.pipeline_mode<synchronous>, transform_indices = @transform_2, window_bounds = array<i64: 1, 4>}, {pipeline_mode = #tpu.pipeline_mode<synchronous>, transform_indices = @transform_3, window_bounds = array<i64: 36, 4>}, {pipeline_mode = #tpu.pipeline_mode<synchronous>, transform_indices = @transform_4, window_bounds = array<i64: 1, 4>}, {transform_indices = @transform_5, window_bounds = array<i64: 256, 4>}]} {
    %c0 = arith.constant 0 : index
    %c0_0 = arith.constant 0 : index
    %c0_1 = arith.constant 0 : index
    %c0_2 = arith.constant 0 : index
    %0 = vector.load %arg1[%c0, %c0_0, %c0_1, %c0_2] : memref<1x18x18x4xbf16, #tpu.memory_space<vmem>>, vector<1x18x18x4xbf16>
    %1 = vector.shape_cast %0 : vector<1x18x18x4xbf16> to vector<18x18x4xbf16>
    %cst = arith.constant 0.000000e+00 : f32
    %2 = vector.broadcast %cst : f32 to vector<256x4xf32>
    %3 = vector.extract_strided_slice %1 {offsets = [0, 0, 0], sizes = [16, 16, 4], strides = [1, 1, 1]} : vector<18x18x4xbf16> to vector<16x16x4xbf16>
    %4 = vector.shape_cast %3 : vector<16x16x4xbf16> to vector<256x4xbf16>
    %c0_3 = arith.constant 0 : index
    %c0_4 = arith.constant 0 : index
    %5 = vector.load %arg2[%c0_3, %c0_4] : memref<36x4xbf16, #tpu.memory_space<vmem>>, vector<4x4xbf16>
    %cst_5 = arith.constant dense<0.000000e+00> : vector<256x4xf32>
    %6 = tpu.matmul %4, %5, %cst_5 {dimension_numbers = #tpu.dot_dimension_numbers<[1], [0], [0], [1], [0, 0, 1, 1], [], []>} : vector<256x4xbf16>, vector<4x4xbf16>, vector<256x4xf32> -> vector<256x4xf32>
    %7 = arith.addf %2, %6 : vector<256x4xf32>
    %8 = vector.extract_strided_slice %1 {offsets = [0, 1, 0], sizes = [16, 16, 4], strides = [1, 1, 1]} : vector<18x18x4xbf16> to vector<16x16x4xbf16>
    %9 = vector.shape_cast %8 : vector<16x16x4xbf16> to vector<256x4xbf16>
    %c4 = arith.constant 4 : index
    %c0_6 = arith.constant 0 : index
    %10 = vector.load %arg2[%c4, %c0_6] : memref<36x4xbf16, #tpu.memory_space<vmem>>, vector<4x4xbf16>
    %cst_7 = arith.constant dense<0.000000e+00> : vector<256x4xf32>
    %11 = tpu.matmul %9, %10, %cst_7 {dimension_numbers = #tpu.dot_dimension_numbers<[1], [0], [0], [1], [0, 0, 1, 1], [], []>} : vector<256x4xbf16>, vector<4x4xbf16>, vector<256x4xf32> -> vector<256x4xf32>
    %12 = arith.addf %7, %11 : vector<256x4xf32>
    %13 = vector.extract_strided_slice %1 {offsets = [0, 2, 0], sizes = [16, 16, 4], strides = [1, 1, 1]} : vector<18x18x4xbf16> to vector<16x16x4xbf16>
    %14 = vector.shape_cast %13 : vector<16x16x4xbf16> to vector<256x4xbf16>
    %c8 = arith.constant 8 : index
    %c0_8 = arith.constant 0 : index
    %15 = vector.load %arg2[%c8, %c0_8] : memref<36x4xbf16, #tpu.memory_space<vmem>>, vector<4x4xbf16>
    %cst_9 = arith.constant dense<0.000000e+00> : vector<256x4xf32>
    %16 = tpu.matmul %14, %15, %cst_9 {dimension_numbers = #tpu.dot_dimension_numbers<[1], [0], [0], [1], [0, 0, 1, 1], [], []>} : vector<256x4xbf16>, vector<4x4xbf16>, vector<256x4xf32> -> vector<256x4xf32>
    %17 = arith.addf %12, %16 : vector<256x4xf32>
    %18 = vector.extract_strided_slice %1 {offsets = [1, 0, 0], sizes = [16, 16, 4], strides = [1, 1, 1]} : vector<18x18x4xbf16> to vector<16x16x4xbf16>
    %19 = vector.shape_cast %18 : vector<16x16x4xbf16> to vector<256x4xbf16>
    %c12 = arith.constant 12 : index
    %c0_10 = arith.constant 0 : index
    %20 = vector.load %arg2[%c12, %c0_10] : memref<36x4xbf16, #tpu.memory_space<vmem>>, vector<4x4xbf16>
    %cst_11 = arith.constant dense<0.000000e+00> : vector<256x4xf32>
    %21 = tpu.matmul %19, %20, %cst_11 {dimension_numbers = #tpu.dot_dimension_numbers<[1], [0], [0], [1], [0, 0, 1, 1], [], []>} : vector<256x4xbf16>, vector<4x4xbf16>, vector<256x4xf32> -> vector<256x4xf32>
    %22 = arith.addf %17, %21 : vector<256x4xf32>
    %23 = vector.extract_strided_slice %1 {offsets = [1, 1, 0], sizes = [16, 16, 4], strides = [1, 1, 1]} : vector<18x18x4xbf16> to vector<16x16x4xbf16>
    %24 = vector.shape_cast %23 : vector<16x16x4xbf16> to vector<256x4xbf16>
    %c16 = arith.constant 16 : index
    %c0_12 = arith.constant 0 : index
    %25 = vector.load %arg2[%c16, %c0_12] : memref<36x4xbf16, #tpu.memory_space<vmem>>, vector<4x4xbf16>
    %cst_13 = arith.constant dense<0.000000e+00> : vector<256x4xf32>
    %26 = tpu.matmul %24, %25, %cst_13 {dimension_numbers = #tpu.dot_dimension_numbers<[1], [0], [0], [1], [0, 0, 1, 1], [], []>} : vector<256x4xbf16>, vector<4x4xbf16>, vector<256x4xf32> -> vector<256x4xf32>
    %27 = arith.addf %22, %26 : vector<256x4xf32>
    %28 = vector.extract_strided_slice %1 {offsets = [1, 2, 0], sizes = [16, 16, 4], strides = [1, 1, 1]} : vector<18x18x4xbf16> to vector<16x16x4xbf16>
    %29 = vector.shape_cast %28 : vector<16x16x4xbf16> to vector<256x4xbf16>
    %c20 = arith.constant 20 : index
    %c0_14 = arith.constant 0 : index
    %30 = vector.load %arg2[%c20, %c0_14] : memref<36x4xbf16, #tpu.memory_space<vmem>>, vector<4x4xbf16>
    %cst_15 = arith.constant dense<0.000000e+00> : vector<256x4xf32>
    %31 = tpu.matmul %29, %30, %cst_15 {dimension_numbers = #tpu.dot_dimension_numbers<[1], [0], [0], [1], [0, 0, 1, 1], [], []>} : vector<256x4xbf16>, vector<4x4xbf16>, vector<256x4xf32> -> vector<256x4xf32>
    %32 = arith.addf %27, %31 : vector<256x4xf32>
    %33 = vector.extract_strided_slice %1 {offsets = [2, 0, 0], sizes = [16, 16, 4], strides = [1, 1, 1]} : vector<18x18x4xbf16> to vector<16x16x4xbf16>
    %34 = vector.shape_cast %33 : vector<16x16x4xbf16> to vector<256x4xbf16>
    %c24 = arith.constant 24 : index
    %c0_16 = arith.constant 0 : index
    %35 = vector.load %arg2[%c24, %c0_16] : memref<36x4xbf16, #tpu.memory_space<vmem>>, vector<4x4xbf16>
    %cst_17 = arith.constant dense<0.000000e+00> : vector<256x4xf32>
    %36 = tpu.matmul %34, %35, %cst_17 {dimension_numbers = #tpu.dot_dimension_numbers<[1], [0], [0], [1], [0, 0, 1, 1], [], []>} : vector<256x4xbf16>, vector<4x4xbf16>, vector<256x4xf32> -> vector<256x4xf32>
    %37 = arith.addf %32, %36 : vector<256x4xf32>
    %38 = vector.extract_strided_slice %1 {offsets = [2, 1, 0], sizes = [16, 16, 4], strides = [1, 1, 1]} : vector<18x18x4xbf16> to vector<16x16x4xbf16>
    %39 = vector.shape_cast %38 : vector<16x16x4xbf16> to vector<256x4xbf16>
    %c28 = arith.constant 28 : index
    %c0_18 = arith.constant 0 : index
    %40 = vector.load %arg2[%c28, %c0_18] : memref<36x4xbf16, #tpu.memory_space<vmem>>, vector<4x4xbf16>
    %cst_19 = arith.constant dense<0.000000e+00> : vector<256x4xf32>
    %41 = tpu.matmul %39, %40, %cst_19 {dimension_numbers = #tpu.dot_dimension_numbers<[1], [0], [0], [1], [0, 0, 1, 1], [], []>} : vector<256x4xbf16>, vector<4x4xbf16>, vector<256x4xf32> -> vector<256x4xf32>
    %42 = arith.addf %37, %41 : vector<256x4xf32>
    %43 = vector.extract_strided_slice %1 {offsets = [2, 2, 0], sizes = [16, 16, 4], strides = [1, 1, 1]} : vector<18x18x4xbf16> to vector<16x16x4xbf16>
    %44 = vector.shape_cast %43 : vector<16x16x4xbf16> to vector<256x4xbf16>
    %c32 = arith.constant 32 : index
    %c0_20 = arith.constant 0 : index
    %45 = vector.load %arg2[%c32, %c0_20] : memref<36x4xbf16, #tpu.memory_space<vmem>>, vector<4x4xbf16>
    %cst_21 = arith.constant dense<0.000000e+00> : vector<256x4xf32>
    %46 = tpu.matmul %44, %45, %cst_21 {dimension_numbers = #tpu.dot_dimension_numbers<[1], [0], [0], [1], [0, 0, 1, 1], [], []>} : vector<256x4xbf16>, vector<4x4xbf16>, vector<256x4xf32> -> vector<256x4xf32>
    %47 = arith.addf %42, %46 : vector<256x4xf32>
    %c0_22 = arith.constant 0 : index
    %c0_23 = arith.constant 0 : index
    %48 = vector.load %arg3[%c0_22, %c0_23] : memref<1x4xf32, #tpu.memory_space<vmem>>, vector<1x4xf32>
    %49 = vector.broadcast %48 : vector<1x4xf32> to vector<256x4xf32>
    %50 = arith.addf %47, %49 : vector<256x4xf32>
    %cst_24 = arith.constant 0.000000e+00 : f32
    %51 = vector.broadcast %cst_24 : f32 to vector<256x4xf32>
    %52 = arith.maximumf %50, %51 : vector<256x4xf32>
    %cst_25 = arith.constant 0.000000e+00 : bf16
    %53 = vector.broadcast %cst_25 : bf16 to vector<18x18x4xbf16>
    %c0_26 = arith.constant 0 : index
    %c0_27 = arith.constant 0 : index
    %c0_28 = arith.constant 0 : index
    %54 = vector.load %arg7[%c0_26, %c0_27, %c0_28] : memref<18x18x4xbf16, #tpu.memory_space<vmem>>, vector<18x18x4xbf16>
    tpu.vector_store %arg7[%c0_26, %c0_27, %c0_28], %53 {strides = array<i32>} : memref<18x18x4xbf16, #tpu.memory_space<vmem>>, vector<18x18x4xbf16>,
    %55 = vector.shape_cast %52 : vector<256x4xf32> to vector<16x16x4xf32>
    %56 = arith.truncf %55 : vector<16x16x4xf32> to vector<16x16x4xbf16>
    %c1 = arith.constant 1 : index
    %c1_29 = arith.constant 1 : index
    %c0_30 = arith.constant 0 : index
    %57 = vector.load %arg7[%c1, %c1_29, %c0_30] : memref<18x18x4xbf16, #tpu.memory_space<vmem>>, vector<16x16x4xbf16>
    tpu.vector_store %arg7[%c1, %c1_29, %c0_30], %56 {strides = array<i32>} : memref<18x18x4xbf16, #tpu.memory_space<vmem>>, vector<16x16x4xbf16>,
    %c0_31 = arith.constant 0 : index
    %c0_32 = arith.constant 0 : index
    %c0_33 = arith.constant 0 : index
    %58 = vector.load %arg7[%c0_31, %c0_32, %c0_33] : memref<18x18x4xbf16, #tpu.memory_space<vmem>>, vector<18x18x4xbf16>
    %cst_34 = arith.constant 0.000000e+00 : f32
    %59 = vector.broadcast %cst_34 : f32 to vector<256x4xf32>
    %60 = vector.extract_strided_slice %58 {offsets = [0, 0, 0], sizes = [16, 16, 4], strides = [1, 1, 1]} : vector<18x18x4xbf16> to vector<16x16x4xbf16>
    %61 = vector.shape_cast %60 : vector<16x16x4xbf16> to vector<256x4xbf16>
    %c0_35 = arith.constant 0 : index
    %c0_36 = arith.constant 0 : index
    %62 = vector.load %arg4[%c0_35, %c0_36] : memref<36x4xbf16, #tpu.memory_space<vmem>>, vector<4x4xbf16>
    %cst_37 = arith.constant dense<0.000000e+00> : vector<256x4xf32>
    %63 = tpu.matmul %61, %62, %cst_37 {dimension_numbers = #tpu.dot_dimension_numbers<[1], [0], [0], [1], [0, 0, 1, 1], [], []>} : vector<256x4xbf16>, vector<4x4xbf16>, vector<256x4xf32> -> vector<256x4xf32>
    %64 = arith.addf %59, %63 : vector<256x4xf32>
    %65 = vector.extract_strided_slice %58 {offsets = [0, 1, 0], sizes = [16, 16, 4], strides = [1, 1, 1]} : vector<18x18x4xbf16> to vector<16x16x4xbf16>
    %66 = vector.shape_cast %65 : vector<16x16x4xbf16> to vector<256x4xbf16>
    %c4_38 = arith.constant 4 : index
    %c0_39 = arith.constant 0 : index
    %67 = vector.load %arg4[%c4_38, %c0_39] : memref<36x4xbf16, #tpu.memory_space<vmem>>, vector<4x4xbf16>
    %cst_40 = arith.constant dense<0.000000e+00> : vector<256x4xf32>
    %68 = tpu.matmul %66, %67, %cst_40 {dimension_numbers = #tpu.dot_dimension_numbers<[1], [0], [0], [1], [0, 0, 1, 1], [], []>} : vector<256x4xbf16>, vector<4x4xbf16>, vector<256x4xf32> -> vector<256x4xf32>
    %69 = arith.addf %64, %68 : vector<256x4xf32>
    %70 = vector.extract_strided_slice %58 {offsets = [0, 2, 0], sizes = [16, 16, 4], strides = [1, 1, 1]} : vector<18x18x4xbf16> to vector<16x16x4xbf16>
    %71 = vector.shape_cast %70 : vector<16x16x4xbf16> to vector<256x4xbf16>
    %c8_41 = arith.constant 8 : index
    %c0_42 = arith.constant 0 : index
    %72 = vector.load %arg4[%c8_41, %c0_42] : memref<36x4xbf16, #tpu.memory_space<vmem>>, vector<4x4xbf16>
    %cst_43 = arith.constant dense<0.000000e+00> : vector<256x4xf32>
    %73 = tpu.matmul %71, %72, %cst_43 {dimension_numbers = #tpu.dot_dimension_numbers<[1], [0], [0], [1], [0, 0, 1, 1], [], []>} : vector<256x4xbf16>, vector<4x4xbf16>, vector<256x4xf32> -> vector<256x4xf32>
    %74 = arith.addf %69, %73 : vector<256x4xf32>
    %75 = vector.extract_strided_slice %58 {offsets = [1, 0, 0], sizes = [16, 16, 4], strides = [1, 1, 1]} : vector<18x18x4xbf16> to vector<16x16x4xbf16>
    %76 = vector.shape_cast %75 : vector<16x16x4xbf16> to vector<256x4xbf16>
    %c12_44 = arith.constant 12 : index
    %c0_45 = arith.constant 0 : index
    %77 = vector.load %arg4[%c12_44, %c0_45] : memref<36x4xbf16, #tpu.memory_space<vmem>>, vector<4x4xbf16>
    %cst_46 = arith.constant dense<0.000000e+00> : vector<256x4xf32>
    %78 = tpu.matmul %76, %77, %cst_46 {dimension_numbers = #tpu.dot_dimension_numbers<[1], [0], [0], [1], [0, 0, 1, 1], [], []>} : vector<256x4xbf16>, vector<4x4xbf16>, vector<256x4xf32> -> vector<256x4xf32>
    %79 = arith.addf %74, %78 : vector<256x4xf32>
    %80 = vector.extract_strided_slice %58 {offsets = [1, 1, 0], sizes = [16, 16, 4], strides = [1, 1, 1]} : vector<18x18x4xbf16> to vector<16x16x4xbf16>
    %81 = vector.shape_cast %80 : vector<16x16x4xbf16> to vector<256x4xbf16>
    %c16_47 = arith.constant 16 : index
    %c0_48 = arith.constant 0 : index
    %82 = vector.load %arg4[%c16_47, %c0_48] : memref<36x4xbf16, #tpu.memory_space<vmem>>, vector<4x4xbf16>
    %cst_49 = arith.constant dense<0.000000e+00> : vector<256x4xf32>
    %83 = tpu.matmul %81, %82, %cst_49 {dimension_numbers = #tpu.dot_dimension_numbers<[1], [0], [0], [1], [0, 0, 1, 1], [], []>} : vector<256x4xbf16>, vector<4x4xbf16>, vector<256x4xf32> -> vector<256x4xf32>
    %84 = arith.addf %79, %83 : vector<256x4xf32>
    %85 = vector.extract_strided_slice %58 {offsets = [1, 2, 0], sizes = [16, 16, 4], strides = [1, 1, 1]} : vector<18x18x4xbf16> to vector<16x16x4xbf16>
    %86 = vector.shape_cast %85 : vector<16x16x4xbf16> to vector<256x4xbf16>
    %c20_50 = arith.constant 20 : index
    %c0_51 = arith.constant 0 : index
    %87 = vector.load %arg4[%c20_50, %c0_51] : memref<36x4xbf16, #tpu.memory_space<vmem>>, vector<4x4xbf16>
    %cst_52 = arith.constant dense<0.000000e+00> : vector<256x4xf32>
    %88 = tpu.matmul %86, %87, %cst_52 {dimension_numbers = #tpu.dot_dimension_numbers<[1], [0], [0], [1], [0, 0, 1, 1], [], []>} : vector<256x4xbf16>, vector<4x4xbf16>, vector<256x4xf32> -> vector<256x4xf32>
    %89 = arith.addf %84, %88 : vector<256x4xf32>
    %90 = vector.extract_strided_slice %58 {offsets = [2, 0, 0], sizes = [16, 16, 4], strides = [1, 1, 1]} : vector<18x18x4xbf16> to vector<16x16x4xbf16>
    %91 = vector.shape_cast %90 : vector<16x16x4xbf16> to vector<256x4xbf16>
    %c24_53 = arith.constant 24 : index
    %c0_54 = arith.constant 0 : index
    %92 = vector.load %arg4[%c24_53, %c0_54] : memref<36x4xbf16, #tpu.memory_space<vmem>>, vector<4x4xbf16>
    %cst_55 = arith.constant dense<0.000000e+00> : vector<256x4xf32>
    %93 = tpu.matmul %91, %92, %cst_55 {dimension_numbers = #tpu.dot_dimension_numbers<[1], [0], [0], [1], [0, 0, 1, 1], [], []>} : vector<256x4xbf16>, vector<4x4xbf16>, vector<256x4xf32> -> vector<256x4xf32>
    %94 = arith.addf %89, %93 : vector<256x4xf32>
    %95 = vector.extract_strided_slice %58 {offsets = [2, 1, 0], sizes = [16, 16, 4], strides = [1, 1, 1]} : vector<18x18x4xbf16> to vector<16x16x4xbf16>
    %96 = vector.shape_cast %95 : vector<16x16x4xbf16> to vector<256x4xbf16>
    %c28_56 = arith.constant 28 : index
    %c0_57 = arith.constant 0 : index
    %97 = vector.load %arg4[%c28_56, %c0_57] : memref<36x4xbf16, #tpu.memory_space<vmem>>, vector<4x4xbf16>
    %cst_58 = arith.constant dense<0.000000e+00> : vector<256x4xf32>
    %98 = tpu.matmul %96, %97, %cst_58 {dimension_numbers = #tpu.dot_dimension_numbers<[1], [0], [0], [1], [0, 0, 1, 1], [], []>} : vector<256x4xbf16>, vector<4x4xbf16>, vector<256x4xf32> -> vector<256x4xf32>
    %99 = arith.addf %94, %98 : vector<256x4xf32>
    %100 = vector.extract_strided_slice %58 {offsets = [2, 2, 0], sizes = [16, 16, 4], strides = [1, 1, 1]} : vector<18x18x4xbf16> to vector<16x16x4xbf16>
    %101 = vector.shape_cast %100 : vector<16x16x4xbf16> to vector<256x4xbf16>
    %c32_59 = arith.constant 32 : index
    %c0_60 = arith.constant 0 : index
    %102 = vector.load %arg4[%c32_59, %c0_60] : memref<36x4xbf16, #tpu.memory_space<vmem>>, vector<4x4xbf16>
    %cst_61 = arith.constant dense<0.000000e+00> : vector<256x4xf32>
    %103 = tpu.matmul %101, %102, %cst_61 {dimension_numbers = #tpu.dot_dimension_numbers<[1], [0], [0], [1], [0, 0, 1, 1], [], []>} : vector<256x4xbf16>, vector<4x4xbf16>, vector<256x4xf32> -> vector<256x4xf32>
    %104 = arith.addf %99, %103 : vector<256x4xf32>
    %105 = vector.extract_strided_slice %1 {offsets = [1, 1, 0], sizes = [16, 16, 4], strides = [1, 1, 1]} : vector<18x18x4xbf16> to vector<16x16x4xbf16>
    %106 = vector.shape_cast %105 : vector<16x16x4xbf16> to vector<256x4xbf16>
    %107 = arith.extf %106 : vector<256x4xbf16> to vector<256x4xf32>
    %c0_62 = arith.constant 0 : index
    %c0_63 = arith.constant 0 : index
    %108 = vector.load %arg5[%c0_62, %c0_63] : memref<1x4xf32, #tpu.memory_space<vmem>>, vector<1x4xf32>
    %109 = vector.broadcast %108 : vector<1x4xf32> to vector<256x4xf32>
    %110 = arith.addf %104, %109 : vector<256x4xf32>
    %111 = arith.addf %110, %107 : vector<256x4xf32>
    %cst_64 = arith.constant 0.000000e+00 : f32
    %112 = vector.broadcast %cst_64 : f32 to vector<256x4xf32>
    %113 = arith.maximumf %111, %112 : vector<256x4xf32>
    %c0_65 = arith.constant 0 : index
    %c0_66 = arith.constant 0 : index
    %114 = vector.load %arg6[%c0_65, %c0_66] : memref<256x4xf32, #tpu.memory_space<vmem>>, vector<256x4xf32>
    tpu.vector_store %arg6[%c0_65, %c0_66], %113 {strides = array<i32>} : memref<256x4xf32, #tpu.memory_space<vmem>>, vector<256x4xf32>,
    return
  }
  func.func @transform_0(%arg0: i32) -> (i32, i32, i32, i32) {
    %c0_i32 = arith.constant 0 : i32
    %c0_i32_0 = arith.constant 0 : i32
    %c0_i32_1 = arith.constant 0 : i32
    %c0_i32_2 = arith.constant 0 : i32
    return %arg0, %c0_i32, %c0_i32_0, %c0_i32_1 : i32, i32, i32, i32
  }
  func.func @transform_1(%arg0: i32) -> (i32, i32) {
    %c0_i32 = arith.constant 0 : i32
    %c0_i32_0 = arith.constant 0 : i32
    %c0_i32_1 = arith.constant 0 : i32
    return %c0_i32, %c0_i32_0 : i32, i32
  }
  func.func @transform_2(%arg0: i32) -> (i32, i32) {
    %c0_i32 = arith.constant 0 : i32
    %c0_i32_0 = arith.constant 0 : i32
    %c0_i32_1 = arith.constant 0 : i32
    return %c0_i32, %c0_i32_0 : i32, i32
  }
  func.func @transform_3(%arg0: i32) -> (i32, i32) {
    %c0_i32 = arith.constant 0 : i32
    %c0_i32_0 = arith.constant 0 : i32
    %c0_i32_1 = arith.constant 0 : i32
    return %c0_i32, %c0_i32_0 : i32, i32
  }
  func.func @transform_4(%arg0: i32) -> (i32, i32) {
    %c0_i32 = arith.constant 0 : i32
    %c0_i32_0 = arith.constant 0 : i32
    %c0_i32_1 = arith.constant 0 : i32
    return %c0_i32, %c0_i32_0 : i32, i32
  }
  func.func @transform_5(%arg0: i32) -> (i32, i32) {
    %c0_i32 = arith.constant 0 : i32
    %c0_i32_0 = arith.constant 0 : i32
    return %arg0, %c0_i32 : i32, i32
  }
}

</mosaic_0001>

<llo_original>
// kernel: resblock_forward.1
$region0: #{resblock_forward.1}
  #allocation0 [shape = 'u32[]', space=smem, size = 0x4, offset = 0x4, fixed_abs, tag = 'smem constant byte address 0x4 - core index']
  #allocation1 [shape = 'u32[144,128]{1,0:T(1,128)}', space=vmem, size = 0x12000, scoped, tag = 'internal scratch']
  #allocation2 [shape = 'bf16[18,18,4]{2,1,0:T(8,128)(2,1)}', space=vmem, size = 0x1b000, scoped, tag = 'scratch operand']
  %s0 = inlined_call_operand.vmem [shape: bf16[2,18,18,4], index: 0, kind: input, shape index: {}]
  %s1 = inlined_call_operand.vmem [shape: bf16[36,4], index: 1, kind: input, shape index: {}]
  %s2 = inlined_call_operand.vmem [shape: f32[1,4], index: 2, kind: input, shape index: {}]
  %s3 = inlined_call_operand.vmem [shape: bf16[36,4], index: 3, kind: input, shape index: {}]
  %s4 = inlined_call_operand.vmem [shape: f32[1,4], index: 4, kind: input, shape index: {}]
  %s5 = inlined_call_operand.vmem [shape: f32[512,4], index: 5, kind: output, shape index: {}]
  %s6 = sld [smem:[#allocation0]]
  $region53: #{resblock_forward.1} parent=0
    _
  %s8 = ssub.s32 1, %s6
  %s9 = scalar_select 0, %s8, %s6
  loop: start=0, step=1, limit=4
  $region2: #{resblock_forward.1} parent=0 // loop_pre_header
    _
  $region3: #{resblock_forward.1} parent=0 // loop_header
    %s11 = sphi 0, %s15
    %p12 = scmp.ge.s32.totalorder %s11, 4
    %s21 = sphi 0, %s23
    %s24 = sphi 0, %s21
    %s25 = sphi 0, %s24
    %s41 = sphi 0, %s25
    %s45 = sphi 0, %s45
    %s47 = sphi 0, %s45
    %s48 = sphi 0, %s47
    %s62 = sphi 0, %s48
    %s66 = sphi 0, %s66
    %s68 = sphi 0, %s66
    %s69 = sphi 0, %s68
    %s83 = sphi 0, %s69
    %s87 = sphi 0, %s87
    %s89 = sphi 0, %s87
    %s90 = sphi 0, %s89
    %s104 = sphi 0, %s90
    %s108 = sphi 0, %s108
    %s110 = sphi 0, %s108
    %s111 = sphi 0, %s110
    %s125 = sphi 0, %s111
    %s131 = sphi 0, %s133
    %s134 = sphi 0, %s131
    %s135 = sphi 0, %s134
    %s151 = sphi 0, %s135
  $region4: #{resblock_forward.1} parent=0 // loop_header_branch
    %14 = sbr.rel (%p12) target = $region8
  $region5: #{resblock_forward.1} parent=0 // loop_body
    %s16 = ssub.s32 %s11, 1
    %s17 = ssub.s32 %s11, 2
    %s18 = sadd.s32 %s11, 1
    %s19 = ssub.s32 %s11, %s18
    %p20 = scmp.eq.s32.totalorder %s19, 0
    %s22 = sadd.s32 %s21, 1
    %s23 = scalar_select %p20, %s21, %s22
    %p26 = pneg %p20
    %p27 = scmp.eq.s32.totalorder %s11, 1
    %p28 = por %p26, %p27
    %p29 = scmp.ne.s32.totalorder %s21, %s24
    %p30 = scmp.eq.s32.totalorder %s11, 0
    %p31 = por %p29, %p30
    %p32 = scmp.ne.s32.totalorder %s21, %s24
    %p33 = scmp.eq.s32.totalorder %s16, 1
    %p34 = por %p32, %p33
    %p35 = scmp.ne.s32.totalorder %s24, %s25
    %p36 = scmp.eq.s32.totalorder %s16, 0
    %p37 = por %p35, %p36
    %p38 = scmp.ne.s32.totalorder %s24, %s25
    %p39 = scmp.eq.s32.totalorder %s17, 1
    %p40 = por %p38, %p39
    %p42 = scmp.ne.s32.totalorder %s25, %s41
    %p43 = scmp.eq.s32.totalorder %s17, 0
    %p44 = por %p42, %p43
    %s46 = sadd.s32 %s45, 1
    %p49 = scmp.eq.s32.totalorder %s11, 1
    %p50 = scmp.ne.s32.totalorder %s45, %s47
    %p51 = scmp.eq.s32.totalorder %s11, 0
    %p52 = por %p50, %p51
    %p53 = scmp.ne.s32.totalorder %s45, %s47
    %p54 = scmp.eq.s32.totalorder %s16, 1
    %p55 = por %p53, %p54
    %p56 = scmp.ne.s32.totalorder %s47, %s48
    %p57 = scmp.eq.s32.totalorder %s16, 0
    %p58 = por %p56, %p57
    %p59 = scmp.ne.s32.totalorder %s47, %s48
    %p60 = scmp.eq.s32.totalorder %s17, 1
    %p61 = por %p59, %p60
    %p63 = scmp.ne.s32.totalorder %s48, %s62
    %p64 = scmp.eq.s32.totalorder %s17, 0
    %p65 = por %p63, %p64
    %s67 = sadd.s32 %s66, 1
    %p70 = scmp.eq.s32.totalorder %s11, 1
    %p71 = scmp.ne.s32.totalorder %s66, %s68
    %p72 = scmp.eq.s32.totalorder %s11, 0
    %p73 = por %p71, %p72
    %p74 = scmp.ne.s32.totalorder %s66, %s68
    %p75 = scmp.eq.s32.totalorder %s16, 1
    %p76 = por %p74, %p75
    %p77 = scmp.ne.s32.totalorder %s68, %s69
    %p78 = scmp.eq.s32.totalorder %s16, 0
    %p79 = por %p77, %p78
    %p80 = scmp.ne.s32.totalorder %s68, %s69
    %p81 = scmp.eq.s32.totalorder %s17, 1
    %p82 = por %p80, %p81
    %p84 = scmp.ne.s32.totalorder %s69, %s83
    %p85 = scmp.eq.s32.totalorder %s17, 0
    %p86 = por %p84, %p85
    %s88 = sadd.s32 %s87, 1
    %p91 = scmp.eq.s32.totalorder %s11, 1
    %p92 = scmp.ne.s32.totalorder %s87, %s89
    %p93 = scmp.eq.s32.totalorder %s11, 0
    %p94 = por %p92, %p93
    %p95 = scmp.ne.s32.totalorder %s87, %s89
    %p96 = scmp.eq.s32.totalorder %s16, 1
    %p97 = por %p95, %p96
    %p98 = scmp.ne.s32.totalorder %s89, %s90
    %p99 = scmp.eq.s32.totalorder %s16, 0
    %p100 = por %p98, %p99
    %p101 = scmp.ne.s32.totalorder %s89, %s90
    %p102 = scmp.eq.s32.totalorder %s17, 1
    %p103 = por %p101, %p102
    %p105 = scmp.ne.s32.totalorder %s90, %s104
    %p106 = scmp.eq.s32.totalorder %s17, 0
    %p107 = por %p105, %p106
    %s109 = sadd.s32 %s108, 1
    %p112 = scmp.eq.s32.totalorder %s11, 1
    %p113 = scmp.ne.s32.totalorder %s108, %s110
    %p114 = scmp.eq.s32.totalorder %s11, 0
    %p115 = por %p113, %p114
    %p116 = scmp.ne.s32.totalorder %s108, %s110
    %p117 = scmp.eq.s32.totalorder %s16, 1
    %p118 = por %p116, %p117
    %p119 = scmp.ne.s32.totalorder %s110, %s111
    %p120 = scmp.eq.s32.totalorder %s16, 0
    %p121 = por %p119, %p120
    %p122 = scmp.ne.s32.totalorder %s110, %s111
    %p123 = scmp.eq.s32.totalorder %s17, 1
    %p124 = por %p122, %p123
    %p126 = scmp.ne.s32.totalorder %s111, %s125
    %p127 = scmp.eq.s32.totalorder %s17, 0
    %p128 = por %p126, %p127
    %s129 = ssub.s32 %s11, %s18
    %p130 = scmp.eq.s32.totalorder %s129, 0
    %s132 = sadd.s32 %s131, 1
    %s133 = scalar_select %p130, %s131, %s132
    %p136 = pneg %p130
    %p137 = scmp.eq.s32.totalorder %s11, 1
    %p138 = por %p136, %p137
    %p139 = scmp.ne.s32.totalorder %s131, %s134
    %p140 = scmp.eq.s32.totalorder %s11, 0
    %p141 = por %p139, %p140
    %p142 = scmp.ne.s32.totalorder %s131, %s134
    %p143 = scmp.eq.s32.totalorder %s16, 1
    %p144 = por %p142, %p143
    %p145 = scmp.ne.s32.totalorder %s134, %s135
    %p146 = scmp.eq.s32.totalorder %s16, 0
    %p147 = por %p145, %p146
    %p148 = scmp.ne.s32.totalorder %s134, %s135
    %p149 = scmp.eq.s32.totalorder %s17, 1
    %p150 = por %p148, %p149
    %p152 = scmp.ne.s32.totalorder %s135, %s151
    %p153 = scmp.eq.s32.totalorder %s17, 0
    %p154 = por %p152, %p153
    %p155 = scmp.le.s32.totalorder 1, %s11
    %p156 = scmp.lt.s32.totalorder %s11, 3
    %p157 = pnand %p155, %p156
    %p158 = pneg %p157
    // Predicated region
    $region9: #{resblock_forward.1} parent=5 // pred_check
      _
    $region10: #{resblock_forward.1} parent=5 // pred_check_branch
      %160 = sbr.rel (%p157) target = $region12
    $region11: #{resblock_forward.1} parent=5 // pred_region
      %s161 = ssub.s32 %s11, 1
      // Predicated region
      $region13: #{resblock_forward.1} parent=11 // pred_check
        %p162 = pneg %p58
      $region14: #{resblock_forward.1} parent=11 // pred_check_branch
        %164 = sbr.rel (%p162) target = $region16
      $region15: #{resblock_forward.1} parent=11 // pred_region
        _
      $region16: #{resblock_forward.1} parent=11 // pred_fallthru
        _
      // Predicated region
      $region17: #{resblock_forward.1} parent=11 // pred_check
        %p165 = pneg %p79
      $region18: #{resblock_forward.1} parent=11 // pred_check_branch
        %167 = sbr.rel (%p165) target = $region20
      $region19: #{resblock_forward.1} parent=11 // pred_region
        _
      $region20: #{resblock_forward.1} parent=11 // pred_fallthru
        _
      // Predicated region
      $region21: #{resblock_forward.1} parent=11 // pred_check
        %p168 = pneg %p100
      $region22: #{resblock_forward.1} parent=11 // pred_check_branch
        %170 = sbr.rel (%p168) target = $region24
      $region23: #{resblock_forward.1} parent=11 // pred_region
        _
      $region24: #{resblock_forward.1} parent=11 // pred_fallthru
        _
      // Predicated region
      $region25: #{resblock_forward.1} parent=11 // pred_check
        %p171 = pneg %p121
      $region26: #{resblock_forward.1} parent=11 // pred_check_branch
        %173 = sbr.rel (%p171) target = $region28
      $region27: #{resblock_forward.1} parent=11 // pred_region
        _
      $region28: #{resblock_forward.1} parent=11 // pred_fallthru
        _
    $region12: #{resblock_forward.1} parent=5 // pred_fallthru
      _
    %p174 = scmp.lt.s32.totalorder %s11, 2
    // Predicated region
    $region29: #{resblock_forward.1} parent=5 // pred_check
      %p175 = pneg %p174
    $region30: #{resblock_forward.1} parent=5 // pred_check_branch
      %177 = sbr.rel (%p175) target = $region32
    $region31: #{resblock_forward.1} parent=5 // pred_region
      // Predicated region
      $region33: #{resblock_forward.1} parent=31 // pred_check
        %p178 = pneg %p31
      $region34: #{resblock_forward.1} parent=31 // pred_check_branch
        %180 = sbr.rel (%p178) target = $region36
      $region35: #{resblock_forward.1} parent=31 // pred_region
        %p181 = scmp.lt.s32.totalorder %s11, 1
        %s182 = scalar_select %p181, %s11, 1
        %s183 = smul.addr %s182, 54
        %s184 = smul.addr %s183, 4
        %s185 = scalar_lea.vmem %s0, %s184
      $region36: #{resblock_forward.1} parent=31 // pred_fallthru
        _
    $region32: #{resblock_forward.1} parent=5 // pred_fallthru
      _
    %p186 = scmp.le.s32.totalorder 1, %s11
    %p187 = scmp.lt.s32.totalorder %s11, 3
    %p188 = pnand %p186, %p187
    %p189 = pneg %p188
    // Predicated region
    $region37: #{resblock_forward.1} parent=5 // pred_check
      _
    $region38: #{resblock_forward.1} parent=5 // pred_check_branch
      %191 = sbr.rel (%p188) target = $region40
    $region39: #{resblock_forward.1} parent=5 // pred_region
      %s192 = ssub.s32 %s11, 1
      %p193 = scmp.lt.s32.totalorder %s16, 1
      %s194 = scalar_select %p193, %s16, 1
      %s195 = smul.addr %s194, 54
      %s196 = smul.addr %s195, 4
      %s197 = scalar_lea.vmem %s0, %s196
      %p198 = pneg %p37
      %p199 = pneg %p34
      %p200 = pneg %p58
      %p201 = pneg %p55
      %p202 = pneg %p79
      %p203 = pneg %p76
      %p204 = pneg %p100
      %p205 = pneg %p97
      %p206 = pneg %p121
      %p207 = pneg %p118
      %p208 = pneg %p147
      %p209 = pneg %p144
      %s210 = smul.u32 32, %s16
      %p211 = scmp.lt.s32.totalorder %s210, 63
      %s212 = scalar_select %p211, %s210, 63
      %s213 = smul.addr %s212, 8
      %s214 = scalar_lea.vmem %s5, %s213
      %p215 = scmp.lt.s32.totalorder %s16, 1
      %s216 = scalar_select %p215, %s16, 1
      %s217 = smul.addr %s216, 54
      %s218 = smul.addr %s217, 4
      %s219 = scalar_lea.vmem %s0, %s218
      %s220 = smul.u32 32, %s16
      %p221 = scmp.lt.s32.totalorder %s220, 63
      %s222 = scalar_select %p221, %s220, 63
      %s223 = smul.addr %s222, 8
      %s224 = scalar_lea.vmem %s5, %s223
      %s225 = smul.u32 32, %s16
      %v227 = vld [vmem:[%s219] sm:$0xf]
      %v228 = vld [vmem:[%s219 + $0x4] sm:$0xf]
      %v229 = vld [vmem:[%s219 + $0x8] sm:$0x1]
      %v230 = vld [vmem:[%s219 + $0xc] sm:$0xf]
      %v231 = vld [vmem:[%s219 + $0x10] sm:$0xf]
      %v232 = vld [vmem:[%s219 + $0x14] sm:$0x1]
      %v233 = vld [vmem:[%s219 + $0x18] sm:$0xf]
      %v234 = vld [vmem:[%s219 + $0x1c] sm:$0xf]
      %v235 = vld [vmem:[%s219 + $0x20] sm:$0x1]
      %v236 = vld [vmem:[%s219 + $0x24] sm:$0xf]
      %v237 = vld [vmem:[%s219 + $0x28] sm:$0xf]
      %v238 = vld [vmem:[%s219 + $0x2c] sm:$0x1]
      %v239 = vld [vmem:[%s219 + $0x30] sm:$0xf]
      %v240 = vld [vmem:[%s219 + $0x34] sm:$0xf]
      %v241 = vld [vmem:[%s219 + $0x38] sm:$0x1]
      %v242 = vld [vmem:[%s219 + $0x3c] sm:$0xf]
      %v243 = vld [vmem:[%s219 + $0x40] sm:$0xf]
      %v244 = vld [vmem:[%s219 + $0x44] sm:$0x1]
      %v245 = vld [vmem:[%s219 + $0x48] sm:$0xf]
      %v246 = vld [vmem:[%s219 + $0x4c] sm:$0xf]
      %v247 = vld [vmem:[%s219 + $0x50] sm:$0x1]
      %v248 = vld [vmem:[%s219 + $0x54] sm:$0xf]
      %v249 = vld [vmem:[%s219 + $0x58] sm:$0xf]
      %v250 = vld [vmem:[%s219 + $0x5c] sm:$0x1]
      %v251 = vld [vmem:[%s219 + $0x60] sm:$0xf]
      %v252 = vld [vmem:[%s219 + $0x64] sm:$0xf]
      %v253 = vld [vmem:[%s219 + $0x68] sm:$0x1]
      %v254 = vld [vmem:[%s219 + $0x6c] sm:$0xf]
      %v255 = vld [vmem:[%s219 + $0x70] sm:$0xf]
      %v256 = vld [vmem:[%s219 + $0x74] sm:$0x1]
      %v257 = vld [vmem:[%s219 + $0x78] sm:$0xf]
      %v258 = vld [vmem:[%s219 + $0x7c] sm:$0xf]
      %v259 = vld [vmem:[%s219 + $0x80] sm:$0x1]
      %v260 = vld [vmem:[%s219 + $0x84] sm:$0xf]
      %v261 = vld [vmem:[%s219 + $0x88] sm:$0xf]
      %v262 = vld [vmem:[%s219 + $0x8c] sm:$0x1]
      %v263 = vld [vmem:[%s219 + $0x90] sm:$0xf]
      %v264 = vld [vmem:[%s219 + $0x94] sm:$0xf]
      %v265 = vld [vmem:[%s219 + $0x98] sm:$0x1]
      %v266 = vld [vmem:[%s219 + $0x9c] sm:$0xf]
      %v267 = vld [vmem:[%s219 + $0xa0] sm:$0xf]
      %v268 = vld [vmem:[%s219 + $0xa4] sm:$0x1]
      %v269 = vld [vmem:[%s219 + $0xa8] sm:$0xf]
      %v270 = vld [vmem:[%s219 + $0xac] sm:$0xf]
      %v271 = vld [vmem:[%s219 + $0xb0] sm:$0x1]
      %v272 = vld [vmem:[%s219 + $0xb4] sm:$0xf]
      %v273 = vld [vmem:[%s219 + $0xb8] sm:$0xf]
      %v274 = vld [vmem:[%s219 + $0xbc] sm:$0x1]
      %v275 = vld [vmem:[%s219 + $0xc0] sm:$0xf]
      %v276 = vld [vmem:[%s219 + $0xc4] sm:$0xf]
      %v277 = vld [vmem:[%s219 + $0xc8] sm:$0x1]
      %v278 = vld [vmem:[%s219 + $0xcc] sm:$0xf]
      %v279 = vld [vmem:[%s219 + $0xd0] sm:$0xf]
      %v280 = vld [vmem:[%s219 + $0xd4] sm:$0x1]
      %v281 = vld [vmem:[%s1] sm:$0x3]
      %vm282 = vsmask.f32 3328
      %vm283 = vsmask.f32 7440
      %vm284 = vmor %vm282, %vm283
      %v286 = vshrl.u32 %v227, 16
      %v288 = vrot.slane %v286, 4
      %v289 = vshll.u32 %v227, 16
      %v291 = vrot.slane %v289, 5
      %v292 = vor.u32 %v288, %v291
      %v293 = vrot.slane %v292, 4
      %v295 = vshll.u32 %v228, 16
      %v297 = vrot.slane %v295, 5
      %v298 = vsel %vm284, %v293, %v297
      %v299 = vshrl.u32 %v228, 16
      %v301 = vrot.slane %v299, 4
      %v302 = vor.u32 %v301, %v297
      %v303 = vrot.slane %v302, 4
      %v305 = vshll.u32 %v229, 16
      %v307 = vrot.slane %v305, 5
      %v308 = vsel %vm284, %v303, %v307
      %v310 = vshrl.u32 %v230, 16
      %v312 = vrot.slane %v310, 4
      %v313 = vshll.u32 %v230, 16
      %v315 = vrot.slane %v313, 5
      %v316 = vor.u32 %v312, %v315
      %v317 = vrot.slane %v316, 4
      %v319 = vshll.u32 %v231, 16
      %v321 = vrot.slane %v319, 5
      %v322 = vsel %vm284, %v317, %v321
      %v323 = vshrl.u32 %v231, 16
      %v325 = vrot.slane %v323, 4
      %v326 = vor.u32 %v325, %v321
      %v327 = vrot.slane %v326, 4
      %v329 = vshll.u32 %v232, 16
      %v331 = vrot.slane %v329, 5
      %v332 = vsel %vm284, %v327, %v331
      %v334 = vshrl.u32 %v233, 16
      %v336 = vrot.slane %v334, 4
      %v337 = vshll.u32 %v233, 16
      %v339 = vrot.slane %v337, 5
      %v340 = vor.u32 %v336, %v339
      %v341 = vrot.slane %v340, 4
      %v343 = vshll.u32 %v234, 16
      %v345 = vrot.slane %v343, 5
      %v346 = vsel %vm284, %v341, %v345
      %v347 = vshrl.u32 %v234, 16
      %v349 = vrot.slane %v347, 4
      %v350 = vor.u32 %v349, %v345
      %v351 = vrot.slane %v350, 4
      %v353 = vshll.u32 %v235, 16
      %v355 = vrot.slane %v353, 5
      %v356 = vsel %vm284, %v351, %v355
      %v358 = vshrl.u32 %v236, 16
      %v360 = vrot.slane %v358, 4
      %v361 = vshll.u32 %v236, 16
      %v363 = vrot.slane %v361, 5
      %v364 = vor.u32 %v360, %v363
      %v365 = vrot.slane %v364, 4
      %v367 = vshll.u32 %v237, 16
      %v369 = vrot.slane %v367, 5
      %v370 = vsel %vm284, %v365, %v369
      %v371 = vshrl.u32 %v237, 16
      %v373 = vrot.slane %v371, 4
      %v374 = vor.u32 %v373, %v369
      %v375 = vrot.slane %v374, 4
      %v377 = vshll.u32 %v238, 16
      %v379 = vrot.slane %v377, 5
      %v380 = vsel %vm284, %v375, %v379
      %v382 = vshrl.u32 %v239, 16
      %v384 = vrot.slane %v382, 4
      %v385 = vshll.u32 %v239, 16
      %v387 = vrot.slane %v385, 5
      %v388 = vor.u32 %v384, %v387
      %v389 = vrot.slane %v388, 4
      %v391 = vshll.u32 %v240, 16
      %v393 = vrot.slane %v391, 5
      %v394 = vsel %vm284, %v389, %v393
      %v395 = vshrl.u32 %v240, 16
      %v397 = vrot.slane %v395, 4
      %v398 = vor.u32 %v397, %v393
      %v399 = vrot.slane %v398, 4
      %v401 = vshll.u32 %v241, 16
      %v403 = vrot.slane %v401, 5
      %v404 = vsel %vm284, %v399, %v403
      %v406 = vshrl.u32 %v242, 16
      %v408 = vrot.slane %v406, 4
      %v409 = vshll.u32 %v242, 16
      %v411 = vrot.slane %v409, 5
      %v412 = vor.u32 %v408, %v411
      %v413 = vrot.slane %v412, 4
      %v415 = vshll.u32 %v243, 16
      %v417 = vrot.slane %v415, 5
      %v418 = vsel %vm284, %v413, %v417
      %v419 = vshrl.u32 %v243, 16
      %v421 = vrot.slane %v419, 4
      %v422 = vor.u32 %v421, %v417
      %v423 = vrot.slane %v422, 4
      %v425 = vshll.u32 %v244, 16
      %v427 = vrot.slane %v425, 5
      %v428 = vsel %vm284, %v423, %v427
      %v430 = vshrl.u32 %v245, 16
      %v432 = vrot.slane %v430, 4
      %v433 = vshll.u32 %v245, 16
      %v435 = vrot.slane %v433, 5
      %v436 = vor.u32 %v432, %v435
      %v437 = vrot.slane %v436, 4
      %v439 = vshll.u32 %v246, 16
      %v441 = vrot.slane %v439, 5
      %v442 = vsel %vm284, %v437, %v441
      %v443 = vshrl.u32 %v246, 16
      %v445 = vrot.slane %v443, 4
      %v446 = vor.u32 %v445, %v441
      %v447 = vrot.slane %v446, 4
      %v449 = vshll.u32 %v247, 16
      %v451 = vrot.slane %v449, 5
      %v452 = vsel %vm284, %v447, %v451
      %v454 = vshrl.u32 %v248, 16
      %v456 = vrot.slane %v454, 4
      %v457 = vshll.u32 %v248, 16
      %v459 = vrot.slane %v457, 5
      %v460 = vor.u32 %v456, %v459
      %v461 = vrot.slane %v460, 4
      %v463 = vshll.u32 %v249, 16
      %v465 = vrot.slane %v463, 5
      %v466 = vsel %vm284, %v461, %v465
      %v467 = vshrl.u32 %v249, 16
      %v469 = vrot.slane %v467, 4
      %v470 = vor.u32 %v469, %v465
      %v471 = vrot.slane %v470, 4
      %v473 = vshll.u32 %v250, 16
      %v475 = vrot.slane %v473, 5
      %v476 = vsel %vm284, %v471, %v475
      %v478 = vshrl.u32 %v251, 16
      %v480 = vrot.slane %v478, 4
      %v481 = vshll.u32 %v251, 16
      %v483 = vrot.slane %v481, 5
      %v484 = vor.u32 %v480, %v483
      %v485 = vrot.slane %v484, 4
      %v487 = vshll.u32 %v252, 16
      %v489 = vrot.slane %v487, 5
      %v490 = vsel %vm284, %v485, %v489
      %v491 = vshrl.u32 %v252, 16
      %v493 = vrot.slane %v491, 4
      %v494 = vor.u32 %v493, %v489
      %v495 = vrot.slane %v494, 4
      %v497 = vshll.u32 %v253, 16
      %v499 = vrot.slane %v497, 5
      %v500 = vsel %vm284, %v495, %v499
      %v502 = vshrl.u32 %v254, 16
      %v504 = vrot.slane %v502, 4
      %v505 = vshll.u32 %v254, 16
      %v507 = vrot.slane %v505, 5
      %v508 = vor.u32 %v504, %v507
      %v509 = vrot.slane %v508, 4
      %v511 = vshll.u32 %v255, 16
      %v513 = vrot.slane %v511, 5
      %v514 = vsel %vm284, %v509, %v513
      %v515 = vshrl.u32 %v255, 16
      %v517 = vrot.slane %v515, 4
      %v518 = vor.u32 %v517, %v513
      %v519 = vrot.slane %v518, 4
      %v521 = vshll.u32 %v256, 16
      %v523 = vrot.slane %v521, 5
      %v524 = vsel %vm284, %v519, %v523
      %v526 = vshrl.u32 %v257, 16
      %v528 = vrot.slane %v526, 4
      %v529 = vshll.u32 %v257, 16
      %v531 = vrot.slane %v529, 5
      %v532 = vor.u32 %v528, %v531
      %v533 = vrot.slane %v532, 4
      %v535 = vshll.u32 %v258, 16
      %v537 = vrot.slane %v535, 5
      %v538 = vsel %vm284, %v533, %v537
      %v539 = vshrl.u32 %v258, 16
      %v541 = vrot.slane %v539, 4
      %v542 = vor.u32 %v541, %v537
      %v543 = vrot.slane %v542, 4
      %v545 = vshll.u32 %v259, 16
      %v547 = vrot.slane %v545, 5
      %v548 = vsel %vm284, %v543, %v547
      %v550 = vshrl.u32 %v260, 16
      %v552 = vrot.slane %v550, 4
      %v553 = vshll.u32 %v260, 16
      %v555 = vrot.slane %v553, 5
      %v556 = vor.u32 %v552, %v555
      %v557 = vrot.slane %v556, 4
      %v559 = vshll.u32 %v261, 16
      %v561 = vrot.slane %v559, 5
      %v562 = vsel %vm284, %v557, %v561
      %v563 = vshrl.u32 %v261, 16
      %v565 = vrot.slane %v563, 4
      %v566 = vor.u32 %v565, %v561
      %v567 = vrot.slane %v566, 4
      %v569 = vshll.u32 %v262, 16
      %v571 = vrot.slane %v569, 5
      %v572 = vsel %vm284, %v567, %v571
      %v574 = vshrl.u32 %v263, 16
      %v576 = vrot.slane %v574, 4
      %v577 = vshll.u32 %v263, 16
      %v579 = vrot.slane %v577, 5
      %v580 = vor.u32 %v576, %v579
      %v581 = vrot.slane %v580, 4
      %v583 = vshll.u32 %v264, 16
      %v585 = vrot.slane %v583, 5
      %v586 = vsel %vm284, %v581, %v585
      %v587 = vshrl.u32 %v264, 16
      %v589 = vrot.slane %v587, 4
      %v590 = vor.u32 %v589, %v585
      %v591 = vrot.slane %v590, 4
      %v593 = vshll.u32 %v265, 16
      %v595 = vrot.slane %v593, 5
      %v596 = vsel %vm284, %v591, %v595
      %v598 = vshrl.u32 %v266, 16
      %v600 = vrot.slane %v598, 4
      %v601 = vshll.u32 %v266, 16
      %v603 = vrot.slane %v601, 5
      %v604 = vor.u32 %v600, %v603
      %v605 = vrot.slane %v604, 4
      %v607 = vshll.u32 %v267, 16
      %v609 = vrot.slane %v607, 5
      %v610 = vsel %vm284, %v605, %v609
      %v611 = vshrl.u32 %v267, 16
      %v613 = vrot.slane %v611, 4
      %v614 = vor.u32 %v613, %v609
      %v615 = vrot.slane %v614, 4
      %v617 = vshll.u32 %v268, 16
      %v619 = vrot.slane %v617, 5
      %v620 = vsel %vm284, %v615, %v619
      %v622 = vshrl.u32 %v269, 16
      %v624 = vrot.slane %v622, 4
      %v625 = vshll.u32 %v269, 16
      %v627 = vrot.slane %v625, 5
      %v628 = vor.u32 %v624, %v627
      %v629 = vrot.slane %v628, 4
      %v631 = vshll.u32 %v270, 16
      %v633 = vrot.slane %v631, 5
      %v634 = vsel %vm284, %v629, %v633
      %v635 = vshrl.u32 %v270, 16
      %v637 = vrot.slane %v635, 4
      %v638 = vor.u32 %v637, %v633
      %v639 = vrot.slane %v638, 4
      %v641 = vshll.u32 %v271, 16
      %v643 = vrot.slane %v641, 5
      %v644 = vsel %vm284, %v639, %v643
      %v646 = vshrl.u32 %v272, 16
      %v648 = vrot.slane %v646, 4
      %v649 = vshll.u32 %v272, 16
      %v651 = vrot.slane %v649, 5
      %v652 = vor.u32 %v648, %v651
      %v653 = vrot.slane %v652, 4
      %v655 = vshll.u32 %v273, 16
      %v657 = vrot.slane %v655, 5
      %v658 = vsel %vm284, %v653, %v657
      %v659 = vshrl.u32 %v273, 16
      %v661 = vrot.slane %v659, 4
      %v662 = vor.u32 %v661, %v657
      %v663 = vrot.slane %v662, 4
      %v665 = vshll.u32 %v274, 16
      %v667 = vrot.slane %v665, 5
      %v668 = vsel %vm284, %v663, %v667
      %v669 = vld [vmem:[%s1] sm:$0xc]
      %v670 = vunpack.c.l.b16 %v298
      %v671 = vunpack.c.l.b16 %v308
      %v672 = vunpack.c.l.b16 %v322
      %v673 = vunpack.c.l.b16 %v332
      %v674 = vunpack.c.l.b16 %v346
      %v675 = vunpack.c.l.b16 %v356
      %v676 = vunpack.c.l.b16 %v370
      %v677 = vunpack.c.l.b16 %v380
      %v678 = vunpack.c.l.b16 %v394
      %v679 = vunpack.c.l.b16 %v404
      %v680 = vunpack.c.l.b16 %v418
      %v681 = vunpack.c.l.b16 %v428
      %v682 = vunpack.c.l.b16 %v442
      %v683 = vunpack.c.l.b16 %v452
      %v684 = vunpack.c.l.b16 %v466
      %v685 = vunpack.c.l.b16 %v476
      %v686 = vunpack.c.l.b16 %v490
      %v687 = vunpack.c.l.b16 %v500
      %v688 = vunpack.c.l.b16 %v514
      %v689 = vunpack.c.l.b16 %v524
      %v690 = vunpack.c.l.b16 %v538
      %v691 = vunpack.c.l.b16 %v548
      %v692 = vunpack.c.l.b16 %v562
      %v693 = vunpack.c.l.b16 %v572
      %v694 = vunpack.c.l.b16 %v586
      %v695 = vunpack.c.l.b16 %v596
      %v696 = vunpack.c.l.b16 %v610
      %v697 = vunpack.c.l.b16 %v620
      %v698 = vunpack.c.l.b16 %v634
      %v699 = vunpack.c.l.b16 %v644
      %v700 = vunpack.c.l.b16 %v658
      %v701 = vunpack.c.l.b16 %v668
      %v702 = vpack.c.b16 %v671, %v670
      %v703 = vpack.c.b16 %v673, %v672
      %v704 = vpack.c.b16 %v675, %v674
      %v705 = vpack.c.b16 %v677, %v676
      %v706 = vpack.c.b16 %v679, %v678
      %v707 = vpack.c.b16 %v681, %v680
      %v708 = vpack.c.b16 %v683, %v682
      %v709 = vpack.c.b16 %v685, %v684
      %v710 = vpack.c.b16 %v687, %v686
      %v711 = vpack.c.b16 %v689, %v688
      %v712 = vpack.c.b16 %v691, %v690
      %v713 = vpack.c.b16 %v693, %v692
      %v714 = vpack.c.b16 %v695, %v694
      %v715 = vpack.c.b16 %v697, %v696
      %v716 = vpack.c.b16 %v699, %v698
      %v717 = vpack.c.b16 %v701, %v700
      %v719 = vunpack.c.l.b16 %v669
      %v720 = vpack.c.b16 %v719, %v719
      %v721 = vrot.slane %v720, 2
      %vm722 = vcmask 31744
      %v724 = vsel %vm722, %v702, 0
      %v727 = vsel %vm722, %v703, 0
      %v730 = vsel %vm722, %v704, 0
      %v733 = vsel %vm722, %v705, 0
      %v736 = vsel %vm722, %v706, 0
      %v739 = vsel %vm722, %v707, 0
      %v742 = vsel %vm722, %v708, 0
      %v745 = vsel %vm722, %v709, 0
      %v748 = vsel %vm722, %v710, 0
      %v751 = vsel %vm722, %v711, 0
      %v754 = vsel %vm722, %v712, 0
      %v757 = vsel %vm722, %v713, 0
      %v760 = vsel %vm722, %v714, 0
      %v763 = vsel %vm722, %v715, 0
      %v766 = vsel %vm722, %v716, 0
      %v769 = vsel %vm722, %v717, 0
      %vm771 = vcmask 1041408
      %v773 = vsel %vm771, %v721, 0
      %775 = vmatprep.subr.bf16.mxu0 0
      %776 = vmatpush1.bf16.msra.mxu0 0
      %777 = vmatprep.subr.bf16.mxu0 0
      %778 = vmatpush1.bf16.msra.mxu0 0
      %779 = vmatprep.subr.bf16.mxu0 0
      %780 = vmatpush1.bf16.msra.mxu0 0
      %781 = vmatprep.subr.bf16.mxu0 0
      %782 = vmatpush1.bf16.msra.mxu0 0
      %783 = vmatprep.subr.bf16.mxu0 0
      %784 = vmatpush1.bf16.msra.mxu0 0
      %785 = vmatprep.subr.bf16.mxu0 0
      %786 = vmatpush1.bf16.msra.mxu0 0
      %787 = vmatprep.subr.bf16.mxu0 0
      %788 = vmatpush1.bf16.msra.mxu0 0
      %789 = vmatprep.subr.bf16.mxu0 0
      %790 = vmatpush1.bf16.msra.mxu0 %v773
      %791 = vmatprep.subr.bf16.mxu0 0
      %792 = vmatpush2.bf16.msra.mxu0 0
      %793 = vmatprep.subr.bf16.mxu0 0
      %794 = vmatpush2.bf16.msra.mxu0 0
      %795 = vmatprep.subr.bf16.mxu0 0
      %796 = vmatpush2.bf16.msra.mxu0 0
      %797 = vmatprep.subr.bf16.mxu0 0
      %798 = vmatpush2.bf16.msra.mxu0 0
      %799 = vmatprep.subr.bf16.mxu0 0
      %800 = vmatpush2.bf16.msra.mxu0 0
      %801 = vmatprep.subr.bf16.mxu0 0
      %802 = vmatpush2.bf16.msra.mxu0 0
      %803 = vmatprep.subr.bf16.mxu0 0
      %804 = vmatpush2.bf16.msra.mxu0 0
      %805 = vmatprep.subr.bf16.mxu0 0
      %806 = vmatpush2.bf16.msra.mxu0 0
      %807 = vmatprep.mubr.bf16.mxu0 0
      %808 = vmatmul.mubr.bf16.gmra.mxu0 %v724
      %v809 = vpop.f32.mrf.mxu0
      %v810 = vadd.f32 0.0, %v809
      %v811 = vpop.f32.mrf.mxu0
      %v812 = vpop.f32.mrf.mxu0
      %v813 = vadd.f32 0.0, %v812
      %v814 = vpop.f32.mrf.mxu0
      %815 = vmatprep.mubr.bf16.mxu0 0
      %816 = vmatmul.mubr.bf16.gmra.mxu0 %v727
      %v817 = vpop.f32.mrf.mxu0
      %v818 = vadd.f32 0.0, %v817
      %v819 = vpop.f32.mrf.mxu0
      %v820 = vpop.f32.mrf.mxu0
      %v821 = vadd.f32 0.0, %v820
      %v822 = vpop.f32.mrf.mxu0
      %823 = vmatprep.mubr.bf16.mxu0 0
      %824 = vmatmul.mubr.bf16.gmra.mxu0 %v730
      %v825 = vpop.f32.mrf.mxu0
      %v826 = vadd.f32 0.0, %v825
      %v827 = vpop.f32.mrf.mxu0
      %v828 = vpop.f32.mrf.mxu0
      %v829 = vadd.f32 0.0, %v828
      %v830 = vpop.f32.mrf.mxu0
      %831 = vmatprep.mubr.bf16.mxu0 0
      %832 = vmatmul.mubr.bf16.gmra.mxu0 %v733
      %v833 = vpop.f32.mrf.mxu0
      %v834 = vadd.f32 0.0, %v833
      %v835 = vpop.f32.mrf.mxu0
      %v836 = vpop.f32.mrf.mxu0
      %v837 = vadd.f32 0.0, %v836
      %v838 = vpop.f32.mrf.mxu0
      %839 = vmatprep.mubr.bf16.mxu0 0
      %840 = vmatmul.mubr.bf16.gmra.mxu0 %v736
      %v841 = vpop.f32.mrf.mxu0
      %v842 = vadd.f32 0.0, %v841
      %v843 = vpop.f32.mrf.mxu0
      %v844 = vpop.f32.mrf.mxu0
      %v845 = vadd.f32 0.0, %v844
      %v846 = vpop.f32.mrf.mxu0
      %847 = vmatprep.mubr.bf16.mxu0 0
      %848 = vmatmul.mubr.bf16.gmra.mxu0 %v739
      %v849 = vpop.f32.mrf.mxu0
      %v850 = vadd.f32 0.0, %v849
      %v851 = vpop.f32.mrf.mxu0
      %v852 = vpop.f32.mrf.mxu0
      %v853 = vadd.f32 0.0, %v852
      %v854 = vpop.f32.mrf.mxu0
      %855 = vmatprep.mubr.bf16.mxu0 0
      %856 = vmatmul.mubr.bf16.gmra.mxu0 %v742
      %v857 = vpop.f32.mrf.mxu0
      %v858 = vadd.f32 0.0, %v857
      %v859 = vpop.f32.mrf.mxu0
      %v860 = vpop.f32.mrf.mxu0
      %v861 = vadd.f32 0.0, %v860
      %v862 = vpop.f32.mrf.mxu0
      %863 = vmatprep.mubr.bf16.mxu0 0
      %864 = vmatmul.mubr.bf16.gmra.mxu0 %v745
      %v865 = vpop.f32.mrf.mxu0
      %v866 = vadd.f32 0.0, %v865
      %v867 = vpop.f32.mrf.mxu0
      %v868 = vpop.f32.mrf.mxu0
      %v869 = vadd.f32 0.0, %v868
      %v870 = vpop.f32.mrf.mxu0
      %871 = vmatprep.mubr.bf16.mxu0 0
      %872 = vmatmul.mubr.bf16.gmra.mxu0 %v748
      %v873 = vpop.f32.mrf.mxu0
      %v874 = vadd.f32 0.0, %v873
      %v875 = vpop.f32.mrf.mxu0
      %v876 = vpop.f32.mrf.mxu0
      %v877 = vadd.f32 0.0, %v876
      %v878 = vpop.f32.mrf.mxu0
      %879 = vmatprep.mubr.bf16.mxu0 0
      %880 = vmatmul.mubr.bf16.gmra.mxu0 %v751
      %v881 = vpop.f32.mrf.mxu0
      %v882 = vadd.f32 0.0, %v881
      %v883 = vpop.f32.mrf.mxu0
      %v884 = vpop.f32.mrf.mxu0
      %v885 = vadd.f32 0.0, %v884
      %v886 = vpop.f32.mrf.mxu0
      %887 = vmatprep.mubr.bf16.mxu0 0
      %888 = vmatmul.mubr.bf16.gmra.mxu0 %v754
      %v889 = vpop.f32.mrf.mxu0
      %v890 = vadd.f32 0.0, %v889
      %v891 = vpop.f32.mrf.mxu0
      %v892 = vpop.f32.mrf.mxu0
      %v893 = vadd.f32 0.0, %v892
      %v894 = vpop.f32.mrf.mxu0
      %895 = vmatprep.mubr.bf16.mxu0 0
      %896 = vmatmul.mubr.bf16.gmra.mxu0 %v757
      %v897 = vpop.f32.mrf.mxu0
      %v898 = vadd.f32 0.0, %v897
      %v899 = vpop.f32.mrf.mxu0
      %v900 = vpop.f32.mrf.mxu0
      %v901 = vadd.f32 0.0, %v900
      %v902 = vpop.f32.mrf.mxu0
      %903 = vmatprep.mubr.bf16.mxu0 0
      %904 = vmatmul.mubr.bf16.gmra.mxu0 %v760
      %v905 = vpop.f32.mrf.mxu0
      %v906 = vadd.f32 0.0, %v905
      %v907 = vpop.f32.mrf.mxu0
      %v908 = vpop.f32.mrf.mxu0
      %v909 = vadd.f32 0.0, %v908
      %v910 = vpop.f32.mrf.mxu0
      %911 = vmatprep.mubr.bf16.mxu0 0
      %912 = vmatmul.mubr.bf16.gmra.mxu0 %v763
      %v913 = vpop.f32.mrf.mxu0
      %v914 = vadd.f32 0.0, %v913
      %v915 = vpop.f32.mrf.mxu0
      %v916 = vpop.f32.mrf.mxu0
      %v917 = vadd.f32 0.0, %v916
      %v918 = vpop.f32.mrf.mxu0
      %919 = vmatprep.mubr.bf16.mxu0 0
      %920 = vmatmul.mubr.bf16.gmra.mxu0 %v766
      %v921 = vpop.f32.mrf.mxu0
      %v922 = vadd.f32 0.0, %v921
      %v923 = vpop.f32.mrf.mxu0
      %v924 = vpop.f32.mrf.mxu0
      %v925 = vadd.f32 0.0, %v924
      %v926 = vpop.f32.mrf.mxu0
      %927 = vmatprep.mubr.bf16.mxu0 0
      %928 = vmatmul.mubr.bf16.gmra.mxu0 %v769
      %v929 = vpop.f32.mrf.mxu0
      %v930 = vadd.f32 0.0, %v929
      %v931 = vpop.f32.mrf.mxu0
      %v932 = vpop.f32.mrf.mxu0
      %v933 = vadd.f32 0.0, %v932
      %v934 = vpop.f32.mrf.mxu0
      %935 = vdwg.mxu0
      %v968 = vunpack.c.l.b16 %v227
      %v969 = vunpack.c.l.b16 %v228
      %v970 = vunpack.c.l.b16 %v230
      %v971 = vunpack.c.l.b16 %v231
      %v972 = vunpack.c.l.b16 %v233
      %v973 = vunpack.c.l.b16 %v234
      %v974 = vunpack.c.l.b16 %v236
      %v975 = vunpack.c.l.b16 %v237
      %v976 = vunpack.c.l.b16 %v239
      %v977 = vunpack.c.l.b16 %v240
      %v978 = vunpack.c.l.b16 %v242
      %v979 = vunpack.c.l.b16 %v243
      %v980 = vunpack.c.l.b16 %v245
      %v981 = vunpack.c.l.b16 %v246
      %v982 = vunpack.c.l.b16 %v248
      %v983 = vunpack.c.l.b16 %v249
      %v984 = vunpack.c.l.b16 %v251
      %v985 = vunpack.c.l.b16 %v252
      %v986 = vunpack.c.l.b16 %v254
      %v987 = vunpack.c.l.b16 %v255
      %v988 = vunpack.c.l.b16 %v257
      %v989 = vunpack.c.l.b16 %v258
      %v990 = vunpack.c.l.b16 %v260
      %v991 = vunpack.c.l.b16 %v261
      %v992 = vunpack.c.l.b16 %v263
      %v993 = vunpack.c.l.b16 %v264
      %v994 = vunpack.c.l.b16 %v266
      %v995 = vunpack.c.l.b16 %v267
      %v996 = vunpack.c.l.b16 %v269
      %v997 = vunpack.c.l.b16 %v270
      %v998 = vunpack.c.l.b16 %v272
      %v999 = vunpack.c.l.b16 %v273
      %v1000 = vpack.c.b16 %v969, %v968
      %v1001 = vpack.c.b16 %v971, %v970
      %v1002 = vpack.c.b16 %v973, %v972
      %v1003 = vpack.c.b16 %v975, %v974
      %v1004 = vpack.c.b16 %v977, %v976
      %v1005 = vpack.c.b16 %v979, %v978
      %v1006 = vpack.c.b16 %v981, %v980
      %v1007 = vpack.c.b16 %v983, %v982
      %v1008 = vpack.c.b16 %v985, %v984
      %v1009 = vpack.c.b16 %v987, %v986
      %v1010 = vpack.c.b16 %v989, %v988
      %v1011 = vpack.c.b16 %v991, %v990
      %v1012 = vpack.c.b16 %v993, %v992
      %v1013 = vpack.c.b16 %v995, %v994
      %v1014 = vpack.c.b16 %v997, %v996
      %v1015 = vpack.c.b16 %v999, %v998
      %v1017 = vsel %vm722, %v1000, 0
      %v1020 = vsel %vm722, %v1001, 0
      %v1023 = vsel %vm722, %v1002, 0
      %v1026 = vsel %vm722, %v1003, 0
      %v1029 = vsel %vm722, %v1004, 0
      %v1032 = vsel %vm722, %v1005, 0
      %v1035 = vsel %vm722, %v1006, 0
      %v1038 = vsel %vm722, %v1007, 0
      %v1041 = vsel %vm722, %v1008, 0
      %v1044 = vsel %vm722, %v1009, 0
      %v1047 = vsel %vm722, %v1010, 0
      %v1050 = vsel %vm722, %v1011, 0
      %v1053 = vsel %vm722, %v1012, 0
      %v1056 = vsel %vm722, %v1013, 0
      %v1059 = vsel %vm722, %v1014, 0
      %v1062 = vsel %vm722, %v1015, 0
      %v1065 = vsel %vm771, %v281, 0
      %1067 = vmatprep.subr.bf16.mxu0 0
      %1068 = vmatpush1.bf16.msra.mxu0 0
      %1069 = vmatprep.subr.bf16.mxu0 0
      %1070 = vmatpush1.bf16.msra.mxu0 0
      %1071 = vmatprep.subr.bf16.mxu0 0
      %1072 = vmatpush1.bf16.msra.mxu0 0
      %1073 = vmatprep.subr.bf16.mxu0 0
      %1074 = vmatpush1.bf16.msra.mxu0 0
      %1075 = vmatprep.subr.bf16.mxu0 0
      %1076 = vmatpush1.bf16.msra.mxu0 0
      %1077 = vmatprep.subr.bf16.mxu0 0
      %1078 = vmatpush1.bf16.msra.mxu0 0
      %1079 = vmatprep.subr.bf16.mxu0 0
      %1080 = vmatpush1.bf16.msra.mxu0 0
      %1081 = vmatprep.subr.bf16.mxu0 0
      %1082 = vmatpush1.bf16.msra.mxu0 %v1065
      %1083 = vmatprep.subr.bf16.mxu0 0
      %1084 = vmatpush2.bf16.msra.mxu0 0
      %1085 = vmatprep.subr.bf16.mxu0 0
      %1086 = vmatpush2.bf16.msra.mxu0 0
      %1087 = vmatprep.subr.bf16.mxu0 0
      %1088 = vmatpush2.bf16.msra.mxu0 0
      %1089 = vmatprep.subr.bf16.mxu0 0
      %1090 = vmatpush2.bf16.msra.mxu0 0
      %1091 = vmatprep.subr.bf16.mxu0 0
      %1092 = vmatpush2.bf16.msra.mxu0 0
      %1093 = vmatprep.subr.bf16.mxu0 0
      %1094 = vmatpush2.bf16.msra.mxu0 0
      %1095 = vmatprep.subr.bf16.mxu0 0
      %1096 = vmatpush2.bf16.msra.mxu0 0
      %1097 = vmatprep.subr.bf16.mxu0 0
      %1098 = vmatpush2.bf16.msra.mxu0 0
      %1099 = vmatprep.mubr.bf16.mxu0 0
      %1100 = vmatmul.mubr.bf16.gmra.mxu0 %v1017
      %v1101 = vpop.f32.mrf.mxu0
      %v1102 = vadd.f32 %v810, %v1101
      %v1103 = vpop.f32.mrf.mxu0
      %v1104 = vpop.f32.mrf.mxu0
      %v1105 = vadd.f32 %v813, %v1104
      %v1106 = vpop.f32.mrf.mxu0
      %1107 = vmatprep.mubr.bf16.mxu0 0
      %1108 = vmatmul.mubr.bf16.gmra.mxu0 %v1020
      %v1109 = vpop.f32.mrf.mxu0
      %v1110 = vadd.f32 %v818, %v1109
      %v1111 = vpop.f32.mrf.mxu0
      %v1112 = vpop.f32.mrf.mxu0
      %v1113 = vadd.f32 %v821, %v1112
      %v1114 = vpop.f32.mrf.mxu0
      %1115 = vmatprep.mubr.bf16.mxu0 0
      %1116 = vmatmul.mubr.bf16.gmra.mxu0 %v1023
      %v1117 = vpop.f32.mrf.mxu0
      %v1118 = vadd.f32 %v826, %v1117
      %v1119 = vpop.f32.mrf.mxu0
      %v1120 = vpop.f32.mrf.mxu0
      %v1121 = vadd.f32 %v829, %v1120
      %v1122 = vpop.f32.mrf.mxu0
      %1123 = vmatprep.mubr.bf16.mxu0 0
      %1124 = vmatmul.mubr.bf16.gmra.mxu0 %v1026
      %v1125 = vpop.f32.mrf.mxu0
      %v1126 = vadd.f32 %v834, %v1125
      %v1127 = vpop.f32.mrf.mxu0
      %v1128 = vpop.f32.mrf.mxu0
      %v1129 = vadd.f32 %v837, %v1128
      %v1130 = vpop.f32.mrf.mxu0
      %1131 = vmatprep.mubr.bf16.mxu0 0
      %1132 = vmatmul.mubr.bf16.gmra.mxu0 %v1029
      %v1133 = vpop.f32.mrf.mxu0
      %v1134 = vadd.f32 %v842, %v1133
      %v1135 = vpop.f32.mrf.mxu0
      %v1136 = vpop.f32.mrf.mxu0
      %v1137 = vadd.f32 %v845, %v1136
      %v1138 = vpop.f32.mrf.mxu0
      %1139 = vmatprep.mubr.bf16.mxu0 0
      %1140 = vmatmul.mubr.bf16.gmra.mxu0 %v1032
      %v1141 = vpop.f32.mrf.mxu0
      %v1142 = vadd.f32 %v850, %v1141
      %v1143 = vpop.f32.mrf.mxu0
      %v1144 = vpop.f32.mrf.mxu0
      %v1145 = vadd.f32 %v853, %v1144
      %v1146 = vpop.f32.mrf.mxu0
      %1147 = vmatprep.mubr.bf16.mxu0 0
      %1148 = vmatmul.mubr.bf16.gmra.mxu0 %v1035
      %v1149 = vpop.f32.mrf.mxu0
      %v1150 = vadd.f32 %v858, %v1149
      %v1151 = vpop.f32.mrf.mxu0
      %v1152 = vpop.f32.mrf.mxu0
      %v1153 = vadd.f32 %v861, %v1152
      %v1154 = vpop.f32.mrf.mxu0
      %1155 = vmatprep.mubr.bf16.mxu0 0
      %1156 = vmatmul.mubr.bf16.gmra.mxu0 %v1038
      %v1157 = vpop.f32.mrf.mxu0
      %v1158 = vadd.f32 %v866, %v1157
      %v1159 = vpop.f32.mrf.mxu0
      %v1160 = vpop.f32.mrf.mxu0
      %v1161 = vadd.f32 %v869, %v1160
      %v1162 = vpop.f32.mrf.mxu0
      %1163 = vmatprep.mubr.bf16.mxu0 0
      %1164 = vmatmul.mubr.bf16.gmra.mxu0 %v1041
      %v1165 = vpop.f32.mrf.mxu0
      %v1166 = vadd.f32 %v874, %v1165
      %v1167 = vpop.f32.mrf.mxu0
      %v1168 = vpop.f32.mrf.mxu0
      %v1169 = vadd.f32 %v877, %v1168
      %v1170 = vpop.f32.mrf.mxu0
      %1171 = vmatprep.mubr.bf16.mxu0 0
      %1172 = vmatmul.mubr.bf16.gmra.mxu0 %v1044
      %v1173 = vpop.f32.mrf.mxu0
      %v1174 = vadd.f32 %v882, %v1173
      %v1175 = vpop.f32.mrf.mxu0
      %v1176 = vpop.f32.mrf.mxu0
      %v1177 = vadd.f32 %v885, %v1176
      %v1178 = vpop.f32.mrf.mxu0
      %1179 = vmatprep.mubr.bf16.mxu0 0
      %1180 = vmatmul.mubr.bf16.gmra.mxu0 %v1047
      %v1181 = vpop.f32.mrf.mxu0
      %v1182 = vadd.f32 %v890, %v1181
      %v1183 = vpop.f32.mrf.mxu0
      %v1184 = vpop.f32.mrf.mxu0
      %v1185 = vadd.f32 %v893, %v1184
      %v1186 = vpop.f32.mrf.mxu0
      %1187 = vmatprep.mubr.bf16.mxu0 0
      %1188 = vmatmul.mubr.bf16.gmra.mxu0 %v1050
      %v1189 = vpop.f32.mrf.mxu0
      %v1190 = vadd.f32 %v898, %v1189
      %v1191 = vpop.f32.mrf.mxu0
      %v1192 = vpop.f32.mrf.mxu0
      %v1193 = vadd.f32 %v901, %v1192
      %v1194 = vpop.f32.mrf.mxu0
      %1195 = vmatprep.mubr.bf16.mxu0 0
      %1196 = vmatmul.mubr.bf16.gmra.mxu0 %v1053
      %v1197 = vpop.f32.mrf.mxu0
      %v1198 = vadd.f32 %v906, %v1197
      %v1199 = vpop.f32.mrf.mxu0
      %v1200 = vpop.f32.mrf.mxu0
      %v1201 = vadd.f32 %v909, %v1200
      %v1202 = vpop.f32.mrf.mxu0
      %1203 = vmatprep.mubr.bf16.mxu0 0
      %1204 = vmatmul.mubr.bf16.gmra.mxu0 %v1056
      %v1205 = vpop.f32.mrf.mxu0
      %v1206 = vadd.f32 %v914, %v1205
      %v1207 = vpop.f32.mrf.mxu0
      %v1208 = vpop.f32.mrf.mxu0
      %v1209 = vadd.f32 %v917, %v1208
      %v1210 = vpop.f32.mrf.mxu0
      %1211 = vmatprep.mubr.bf16.mxu0 0
      %1212 = vmatmul.mubr.bf16.gmra.mxu0 %v1059
      %v1213 = vpop.f32.mrf.mxu0
      %v1214 = vadd.f32 %v922, %v1213
      %v1215 = vpop.f32.mrf.mxu0
      %v1216 = vpop.f32.mrf.mxu0
      %v1217 = vadd.f32 %v925, %v1216
      %v1218 = vpop.f32.mrf.mxu0
      %1219 = vmatprep.mubr.bf16.mxu0 0
      %1220 = vmatmul.mubr.bf16.gmra.mxu0 %v1062
      %v1221 = vpop.f32.mrf.mxu0
      %v1222 = vadd.f32 %v930, %v1221
      %v1223 = vpop.f32.mrf.mxu0
      %v1224 = vpop.f32.mrf.mxu0
      %v1225 = vadd.f32 %v933, %v1224
      %v1226 = vpop.f32.mrf.mxu0
      %1227 = vdwg.mxu0
      %vm1244 = vcmask 1042432
      %vm1245 = vcmask 1046532
      %vm1246 = vmor %vm1244, %vm1245
      %v1247 = vrot.slane %v227, 5
      %v1248 = vrot.slane %v1247, 4
      %v1249 = vrot.slane %v228, 5
      %v1250 = vsel %vm1246, %v1248, %v1249
      %v1251 = vrot.slane %v1249, 4
      %v1252 = vrot.slane %v229, 5
      %v1253 = vsel %vm1246, %v1251, %v1252
      %v1254 = vrot.slane %v230, 5
      %v1255 = vrot.slane %v1254, 4
      %v1256 = vrot.slane %v231, 5
      %v1257 = vsel %vm1246, %v1255, %v1256
      %v1258 = vrot.slane %v1256, 4
      %v1259 = vrot.slane %v232, 5
      %v1260 = vsel %vm1246, %v1258, %v1259
      %v1261 = vrot.slane %v233, 5
      %v1262 = vrot.slane %v1261, 4
      %v1263 = vrot.slane %v234, 5
      %v1264 = vsel %vm1246, %v1262, %v1263
      %v1265 = vrot.slane %v1263, 4
      %v1266 = vrot.slane %v235, 5
      %v1267 = vsel %vm1246, %v1265, %v1266
      %v1268 = vrot.slane %v236, 5
      %v1269 = vrot.slane %v1268, 4
      %v1270 = vrot.slane %v237, 5
      %v1271 = vsel %vm1246, %v1269, %v1270
      %v1272 = vrot.slane %v1270, 4
      %v1273 = vrot.slane %v238, 5
      %v1274 = vsel %vm1246, %v1272, %v1273
      %v1275 = vrot.slane %v239, 5
      %v1276 = vrot.slane %v1275, 4
      %v1277 = vrot.slane %v240, 5
      %v1278 = vsel %vm1246, %v1276, %v1277
      %v1279 = vrot.slane %v1277, 4
      %v1280 = vrot.slane %v241, 5
      %v1281 = vsel %vm1246, %v1279, %v1280
      %v1282 = vrot.slane %v242, 5
      %v1283 = vrot.slane %v1282, 4
      %v1284 = vrot.slane %v243, 5
      %v1285 = vsel %vm1246, %v1283, %v1284
      %v1286 = vrot.slane %v1284, 4
      %v1287 = vrot.slane %v244, 5
      %v1288 = vsel %vm1246, %v1286, %v1287
      %v1289 = vrot.slane %v245, 5
      %v1290 = vrot.slane %v1289, 4
      %v1291 = vrot.slane %v246, 5
      %v1292 = vsel %vm1246, %v1290, %v1291
      %v1293 = vrot.slane %v1291, 4
      %v1294 = vrot.slane %v247, 5
      %v1295 = vsel %vm1246, %v1293, %v1294
      %v1296 = vrot.slane %v248, 5
      %v1297 = vrot.slane %v1296, 4
      %v1298 = vrot.slane %v249, 5
      %v1299 = vsel %vm1246, %v1297, %v1298
      %v1300 = vrot.slane %v1298, 4
      %v1301 = vrot.slane %v250, 5
      %v1302 = vsel %vm1246, %v1300, %v1301
      %v1303 = vrot.slane %v251, 5
      %v1304 = vrot.slane %v1303, 4
      %v1305 = vrot.slane %v252, 5
      %v1306 = vsel %vm1246, %v1304, %v1305
      %v1307 = vrot.slane %v1305, 4
      %v1308 = vrot.slane %v253, 5
      %v1309 = vsel %vm1246, %v1307, %v1308
      %v1310 = vrot.slane %v254, 5
      %v1311 = vrot.slane %v1310, 4
      %v1312 = vrot.slane %v255, 5
      %v1313 = vsel %vm1246, %v1311, %v1312
      %v1314 = vrot.slane %v1312, 4
      %v1315 = vrot.slane %v256, 5
      %v1316 = vsel %vm1246, %v1314, %v1315
      %v1317 = vrot.slane %v257, 5
      %v1318 = vrot.slane %v1317, 4
      %v1319 = vrot.slane %v258, 5
      %v1320 = vsel %vm1246, %v1318, %v1319
      %v1321 = vrot.slane %v1319, 4
      %v1322 = vrot.slane %v259, 5
      %v1323 = vsel %vm1246, %v1321, %v1322
      %v1324 = vrot.slane %v260, 5
      %v1325 = vrot.slane %v1324, 4
      %v1326 = vrot.slane %v261, 5
      %v1327 = vsel %vm1246, %v1325, %v1326
      %v1328 = vrot.slane %v1326, 4
      %v1329 = vrot.slane %v262, 5
      %v1330 = vsel %vm1246, %v1328, %v1329
      %v1331 = vrot.slane %v263, 5
      %v1332 = vrot.slane %v1331, 4
      %v1333 = vrot.slane %v264, 5
      %v1334 = vsel %vm1246, %v1332, %v1333
      %v1335 = vrot.slane %v1333, 4
      %v1336 = vrot.slane %v265, 5
      %v1337 = vsel %vm1246, %v1335, %v1336
      %v1338 = vrot.slane %v266, 5
      %v1339 = vrot.slane %v1338, 4
      %v1340 = vrot.slane %v267, 5
      %v1341 = vsel %vm1246, %v1339, %v1340
      %v1342 = vrot.slane %v1340, 4
      %v1343 = vrot.slane %v268, 5
      %v1344 = vsel %vm1246, %v1342, %v1343
      %v1345 = vrot.slane %v269, 5
      %v1346 = vrot.slane %v1345, 4
      %v1347 = vrot.slane %v270, 5
      %v1348 = vsel %vm1246, %v1346, %v1347
      %v1349 = vrot.slane %v1347, 4
      %v1350 = vrot.slane %v271, 5
      %v1351 = vsel %vm1246, %v1349, %v1350
      %v1352 = vrot.slane %v272, 5
      %v1353 = vrot.slane %v1352, 4
      %v1354 = vrot.slane %v273, 5
      %v1355 = vsel %vm1246, %v1353, %v1354
      %v1356 = vrot.slane %v1354, 4
      %v1357 = vrot.slane %v274, 5
      %v1358 = vsel %vm1246, %v1356, %v1357
      %v1359 = vld [vmem:[%s1 + $0x4] sm:$0x3]
      %v1360 = vunpack.c.l.b16 %v1250
      %v1361 = vunpack.c.l.b16 %v1253
      %v1362 = vunpack.c.l.b16 %v1257
      %v1363 = vunpack.c.l.b16 %v1260
      %v1364 = vunpack.c.l.b16 %v1264
      %v1365 = vunpack.c.l.b16 %v1267
      %v1366 = vunpack.c.l.b16 %v1271
      %v1367 = vunpack.c.l.b16 %v1274
      %v1368 = vunpack.c.l.b16 %v1278
      %v1369 = vunpack.c.l.b16 %v1281
      %v1370 = vunpack.c.l.b16 %v1285
      %v1371 = vunpack.c.l.b16 %v1288
      %v1372 = vunpack.c.l.b16 %v1292
      %v1373 = vunpack.c.l.b16 %v1295
      %v1374 = vunpack.c.l.b16 %v1299
      %v1375 = vunpack.c.l.b16 %v1302
      %v1376 = vunpack.c.l.b16 %v1306
      %v1377 = vunpack.c.l.b16 %v1309
      %v1378 = vunpack.c.l.b16 %v1313
      %v1379 = vunpack.c.l.b16 %v1316
      %v1380 = vunpack.c.l.b16 %v1320
      %v1381 = vunpack.c.l.b16 %v1323
      %v1382 = vunpack.c.l.b16 %v1327
      %v1383 = vunpack.c.l.b16 %v1330
      %v1384 = vunpack.c.l.b16 %v1334
      %v1385 = vunpack.c.l.b16 %v1337
      %v1386 = vunpack.c.l.b16 %v1341
      %v1387 = vunpack.c.l.b16 %v1344
      %v1388 = vunpack.c.l.b16 %v1348
      %v1389 = vunpack.c.l.b16 %v1351
      %v1390 = vunpack.c.l.b16 %v1355
      %v1391 = vunpack.c.l.b16 %v1358
      %v1392 = vpack.c.b16 %v1361, %v1360
      %v1393 = vpack.c.b16 %v1363, %v1362
      %v1394 = vpack.c.b16 %v1365, %v1364
      %v1395 = vpack.c.b16 %v1367, %v1366
      %v1396 = vpack.c.b16 %v1369, %v1368
      %v1397 = vpack.c.b16 %v1371, %v1370
      %v1398 = vpack.c.b16 %v1373, %v1372
      %v1399 = vpack.c.b16 %v1375, %v1374
      %v1400 = vpack.c.b16 %v1377, %v1376
      %v1401 = vpack.c.b16 %v1379, %v1378
      %v1402 = vpack.c.b16 %v1381, %v1380
      %v1403 = vpack.c.b16 %v1383, %v1382
      %v1404 = vpack.c.b16 %v1385, %v1384
      %v1405 = vpack.c.b16 %v1387, %v1386
      %v1406 = vpack.c.b16 %v1389, %v1388
      %v1407 = vpack.c.b16 %v1391, %v1390
      %v1409 = vsel %vm722, %v1392, 0
      %v1412 = vsel %vm722, %v1393, 0
      %v1415 = vsel %vm722, %v1394, 0
      %v1418 = vsel %vm722, %v1395, 0
      %v1421 = vsel %vm722, %v1396, 0
      %v1424 = vsel %vm722, %v1397, 0
      %v1427 = vsel %vm722, %v1398, 0
      %v1430 = vsel %vm722, %v1399, 0
      %v1433 = vsel %vm722, %v1400, 0
      %v1436 = vsel %vm722, %v1401, 0
      %v1439 = vsel %vm722, %v1402, 0
      %v1442 = vsel %vm722, %v1403, 0
      %v1445 = vsel %vm722, %v1404, 0
      %v1448 = vsel %vm722, %v1405, 0
      %v1451 = vsel %vm722, %v1406, 0
      %v1454 = vsel %vm722, %v1407, 0
      %v1457 = vsel %vm771, %v1359, 0
      %1459 = vmatprep.subr.bf16.mxu0 0
      %1460 = vmatpush1.bf16.msra.mxu0 0
      %1461 = vmatprep.subr.bf16.mxu0 0
      %1462 = vmatpush1.bf16.msra.mxu0 0
      %1463 = vmatprep.subr.bf16.mxu0 0
      %1464 = vmatpush1.bf16.msra.mxu0 0
      %1465 = vmatprep.subr.bf16.mxu0 0
      %1466 = vmatpush1.bf16.msra.mxu0 0
      %1467 = vmatprep.subr.bf16.mxu0 0
      %1468 = vmatpush1.bf16.msra.mxu0 0
      %1469 = vmatprep.subr.bf16.mxu0 0
      %1470 = vmatpush1.bf16.msra.mxu0 0
      %1471 = vmatprep.subr.bf16.mxu0 0
      %1472 = vmatpush1.bf16.msra.mxu0 0
      %1473 = vmatprep.subr.bf16.mxu0 0
      %1474 = vmatpush1.bf16.msra.mxu0 %v1457
      %1475 = vmatprep.subr.bf16.mxu0 0
      %1476 = vmatpush2.bf16.msra.mxu0 0
      %1477 = vmatprep.subr.bf16.mxu0 0
      %1478 = vmatpush2.bf16.msra.mxu0 0
      %1479 = vmatprep.subr.bf16.mxu0 0
      %1480 = vmatpush2.bf16.msra.mxu0 0
      %1481 = vmatprep.subr.bf16.mxu0 0
      %1482 = vmatpush2.bf16.msra.mxu0 0
      %1483 = vmatprep.subr.bf16.mxu0 0
      %1484 = vmatpush2.bf16.msra.mxu0 0
      %1485 = vmatprep.subr.bf16.mxu0 0
      %1486 = vmatpush2.bf16.msra.mxu0 0
      %1487 = vmatprep.subr.bf16.mxu0 0
      %1488 = vmatpush2.bf16.msra.mxu0 0
      %1489 = vmatprep.subr.bf16.mxu0 0
      %1490 = vmatpush2.bf16.msra.mxu0 0
      %1491 = vmatprep.mubr.bf16.mxu0 0
      %1492 = vmatmul.mubr.bf16.gmra.mxu0 %v1409
      %v1493 = vpop.f32.mrf.mxu0
      %v1494 = vadd.f32 0.0, %v1493
      %v1495 = vpop.f32.mrf.mxu0
      %v1496 = vpop.f32.mrf.mxu0
      %v1497 = vadd.f32 0.0, %v1496
      %v1498 = vpop.f32.mrf.mxu0
      %1499 = vmatprep.mubr.bf16.mxu0 0
      %1500 = vmatmul.mubr.bf16.gmra.mxu0 %v1412
      %v1501 = vpop.f32.mrf.mxu0
      %v1502 = vadd.f32 0.0, %v1501
      %v1503 = vpop.f32.mrf.mxu0
      %v1504 = vpop.f32.mrf.mxu0
      %v1505 = vadd.f32 0.0, %v1504
      %v1506 = vpop.f32.mrf.mxu0
      %1507 = vmatprep.mubr.bf16.mxu0 0
      %1508 = vmatmul.mubr.bf16.gmra.mxu0 %v1415
      %v1509 = vpop.f32.mrf.mxu0
      %v1510 = vadd.f32 0.0, %v1509
      %v1511 = vpop.f32.mrf.mxu0
      %v1512 = vpop.f32.mrf.mxu0
      %v1513 = vadd.f32 0.0, %v1512
      %v1514 = vpop.f32.mrf.mxu0
      %1515 = vmatprep.mubr.bf16.mxu0 0
      %1516 = vmatmul.mubr.bf16.gmra.mxu0 %v1418
      %v1517 = vpop.f32.mrf.mxu0
      %v1518 = vadd.f32 0.0, %v1517
      %v1519 = vpop.f32.mrf.mxu0
      %v1520 = vpop.f32.mrf.mxu0
      %v1521 = vadd.f32 0.0, %v1520
      %v1522 = vpop.f32.mrf.mxu0
      %1523 = vmatprep.mubr.bf16.mxu0 0
      %1524 = vmatmul.mubr.bf16.gmra.mxu0 %v1421
      %v1525 = vpop.f32.mrf.mxu0
      %v1526 = vadd.f32 0.0, %v1525
      %v1527 = vpop.f32.mrf.mxu0
      %v1528 = vpop.f32.mrf.mxu0
      %v1529 = vadd.f32 0.0, %v1528
      %v1530 = vpop.f32.mrf.mxu0
      %1531 = vmatprep.mubr.bf16.mxu0 0
      %1532 = vmatmul.mubr.bf16.gmra.mxu0 %v1424
      %v1533 = vpop.f32.mrf.mxu0
      %v1534 = vadd.f32 0.0, %v1533
      %v1535 = vpop.f32.mrf.mxu0
      %v1536 = vpop.f32.mrf.mxu0
      %v1537 = vadd.f32 0.0, %v1536
      %v1538 = vpop.f32.mrf.mxu0
      %1539 = vmatprep.mubr.bf16.mxu0 0
      %1540 = vmatmul.mubr.bf16.gmra.mxu0 %v1427
      %v1541 = vpop.f32.mrf.mxu0
      %v1542 = vadd.f32 0.0, %v1541
      %v1543 = vpop.f32.mrf.mxu0
      %v1544 = vpop.f32.mrf.mxu0
      %v1545 = vadd.f32 0.0, %v1544
      %v1546 = vpop.f32.mrf.mxu0
      %1547 = vmatprep.mubr.bf16.mxu0 0
      %1548 = vmatmul.mubr.bf16.gmra.mxu0 %v1430
      %v1549 = vpop.f32.mrf.mxu0
      %v1550 = vadd.f32 0.0, %v1549
      %v1551 = vpop.f32.mrf.mxu0
      %v1552 = vpop.f32.mrf.mxu0
      %v1553 = vadd.f32 0.0, %v1552
      %v1554 = vpop.f32.mrf.mxu0
      %1555 = vmatprep.mubr.bf16.mxu0 0
      %1556 = vmatmul.mubr.bf16.gmra.mxu0 %v1433
      %v1557 = vpop.f32.mrf.mxu0
      %v1558 = vadd.f32 0.0, %v1557
      %v1559 = vpop.f32.mrf.mxu0
      %v1560 = vpop.f32.mrf.mxu0
      %v1561 = vadd.f32 0.0, %v1560
      %v1562 = vpop.f32.mrf.mxu0
      %1563 = vmatprep.mubr.bf16.mxu0 0
      %1564 = vmatmul.mubr.bf16.gmra.mxu0 %v1436
      %v1565 = vpop.f32.mrf.mxu0
      %v1566 = vadd.f32 0.0, %v1565
      %v1567 = vpop.f32.mrf.mxu0
      %v1568 = vpop.f32.mrf.mxu0
      %v1569 = vadd.f32 0.0, %v1568
      %v1570 = vpop.f32.mrf.mxu0
      %1571 = vmatprep.mubr.bf16.mxu0 0
      %1572 = vmatmul.mubr.bf16.gmra.mxu0 %v1439
      %v1573 = vpop.f32.mrf.mxu0
      %v1574 = vadd.f32 0.0, %v1573
      %v1575 = vpop.f32.mrf.mxu0
      %v1576 = vpop.f32.mrf.mxu0
      %v1577 = vadd.f32 0.0, %v1576
      %v1578 = vpop.f32.mrf.mxu0
      %1579 = vmatprep.mubr.bf16.mxu0 0
      %1580 = vmatmul.mubr.bf16.gmra.mxu0 %v1442
      %v1581 = vpop.f32.mrf.mxu0
      %v1582 = vadd.f32 0.0, %v1581
      %v1583 = vpop.f32.mrf.mxu0
      %v1584 = vpop.f32.mrf.mxu0
      %v1585 = vadd.f32 0.0, %v1584
      %v1586 = vpop.f32.mrf.mxu0
      %1587 = vmatprep.mubr.bf16.mxu0 0
      %1588 = vmatmul.mubr.bf16.gmra.mxu0 %v1445
      %v1589 = vpop.f32.mrf.mxu0
      %v1590 = vadd.f32 0.0, %v1589
      %v1591 = vpop.f32.mrf.mxu0
      %v1592 = vpop.f32.mrf.mxu0
      %v1593 = vadd.f32 0.0, %v1592
      %v1594 = vpop.f32.mrf.mxu0
      %1595 = vmatprep.mubr.bf16.mxu0 0
      %1596 = vmatmul.mubr.bf16.gmra.mxu0 %v1448
      %v1597 = vpop.f32.mrf.mxu0
      %v1598 = vadd.f32 0.0, %v1597
      %v1599 = vpop.f32.mrf.mxu0
      %v1600 = vpop.f32.mrf.mxu0
      %v1601 = vadd.f32 0.0, %v1600
      %v1602 = vpop.f32.mrf.mxu0
      %1603 = vmatprep.mubr.bf16.mxu0 0
      %1604 = vmatmul.mubr.bf16.gmra.mxu0 %v1451
      %v1605 = vpop.f32.mrf.mxu0
      %v1606 = vadd.f32 0.0, %v1605
      %v1607 = vpop.f32.mrf.mxu0
      %v1608 = vpop.f32.mrf.mxu0
      %v1609 = vadd.f32 0.0, %v1608
      %v1610 = vpop.f32.mrf.mxu0
      %1611 = vmatprep.mubr.bf16.mxu0 0
      %1612 = vmatmul.mubr.bf16.gmra.mxu0 %v1454
      %v1613 = vpop.f32.mrf.mxu0
      %v1614 = vadd.f32 0.0, %v1613
      %v1615 = vpop.f32.mrf.mxu0
      %v1616 = vpop.f32.mrf.mxu0
      %v1617 = vadd.f32 0.0, %v1616
      %v1618 = vpop.f32.mrf.mxu0
      %1619 = vdwg.mxu0
      %v1620 = vadd.f32 %v1102, %v1494
      %v1621 = vadd.f32 %v1105, %v1497
      %v1622 = vadd.f32 %v1110, %v1502
      %v1623 = vadd.f32 %v1113, %v1505
      %v1624 = vadd.f32 %v1118, %v1510
      %v1625 = vadd.f32 %v1121, %v1513
      %v1626 = vadd.f32 %v1126, %v1518
      %v1627 = vadd.f32 %v1129, %v1521
      %v1628 = vadd.f32 %v1134, %v1526
      %v1629 = vadd.f32 %v1137, %v1529
      %v1630 = vadd.f32 %v1142, %v1534
      %v1631 = vadd.f32 %v1145, %v1537
      %v1632 = vadd.f32 %v1150, %v1542
      %v1633 = vadd.f32 %v1153, %v1545
      %v1634 = vadd.f32 %v1158, %v1550
      %v1635 = vadd.f32 %v1161, %v1553
      %v1636 = vadd.f32 %v1166, %v1558
      %v1637 = vadd.f32 %v1169, %v1561
      %v1638 = vadd.f32 %v1174, %v1566
      %v1639 = vadd.f32 %v1177, %v1569
      %v1640 = vadd.f32 %v1182, %v1574
      %v1641 = vadd.f32 %v1185, %v1577
      %v1642 = vadd.f32 %v1190, %v1582
      %v1643 = vadd.f32 %v1193, %v1585
      %v1644 = vadd.f32 %v1198, %v1590
      %v1645 = vadd.f32 %v1201, %v1593
      %v1646 = vadd.f32 %v1206, %v1598
      %v1647 = vadd.f32 %v1209, %v1601
      %v1648 = vadd.f32 %v1214, %v1606
      %v1649 = vadd.f32 %v1217, %v1609
      %v1650 = vadd.f32 %v1222, %v1614
      %v1651 = vadd.f32 %v1225, %v1617
      %v1652 = vld [vmem:[%s1 + $0x4] sm:$0xc]
      %v1655 = vunpack.c.l.b16 %v275
      %v1656 = vunpack.c.l.b16 %v276
      %v1657 = vpack.c.b16 %v1656, %v1655
      %v1659 = vunpack.c.l.b16 %v1652
      %v1660 = vpack.c.b16 %v1659, %v1659
      %v1661 = vrot.slane %v1660, 2
      %v1663 = vsel %vm722, %v1657, 0
      %v1666 = vsel %vm771, %v1661, 0
      %1668 = vmatprep.subr.bf16.mxu0 0
      %1669 = vmatpush1.bf16.msra.mxu0 0
      %1670 = vmatprep.subr.bf16.mxu0 0
      %1671 = vmatpush1.bf16.msra.mxu0 0
      %1672 = vmatprep.subr.bf16.mxu0 0
      %1673 = vmatpush1.bf16.msra.mxu0 0
      %1674 = vmatprep.subr.bf16.mxu0 0
      %1675 = vmatpush1.bf16.msra.mxu0 0
      %1676 = vmatprep.subr.bf16.mxu0 0
      %1677 = vmatpush1.bf16.msra.mxu0 0
      %1678 = vmatprep.subr.bf16.mxu0 0
      %1679 = vmatpush1.bf16.msra.mxu0 0
      %1680 = vmatprep.subr.bf16.mxu0 0
      %1681 = vmatpush1.bf16.msra.mxu0 0
      %1682 = vmatprep.subr.bf16.mxu0 0
      %1683 = vmatpush1.bf16.msra.mxu0 %v1666
      %1684 = vmatprep.subr.bf16.mxu0 0
      %1685 = vmatpush2.bf16.msra.mxu0 0
      %1686 = vmatprep.subr.bf16.mxu0 0
      %1687 = vmatpush2.bf16.msra.mxu0 0
      %1688 = vmatprep.subr.bf16.mxu0 0
      %1689 = vmatpush2.bf16.msra.mxu0 0
      %1690 = vmatprep.subr.bf16.mxu0 0
      %1691 = vmatpush2.bf16.msra.mxu0 0
      %1692 = vmatprep.subr.bf16.mxu0 0
      %1693 = vmatpush2.bf16.msra.mxu0 0
      %1694 = vmatprep.subr.bf16.mxu0 0
      %1695 = vmatpush2.bf16.msra.mxu0 0
      %1696 = vmatprep.subr.bf16.mxu0 0
      %1697 = vmatpush2.bf16.msra.mxu0 0
      %1698 = vmatprep.subr.bf16.mxu0 0
      %1699 = vmatpush2.bf16.msra.mxu0 0
      %1700 = vmatprep.mubr.bf16.mxu0 0
      %1701 = vmatmul.mubr.bf16.gmra.mxu0 %v1020
      %v1702 = vpop.f32.mrf.mxu0
      %v1703 = vadd.f32 0.0, %v1702
      %v1704 = vpop.f32.mrf.mxu0
      %v1705 = vpop.f32.mrf.mxu0
      %v1706 = vadd.f32 0.0, %v1705
      %v1707 = vpop.f32.mrf.mxu0
      %1708 = vmatprep.mubr.bf16.mxu0 0
      %1709 = vmatmul.mubr.bf16.gmra.mxu0 %v1023
      %v1710 = vpop.f32.mrf.mxu0
      %v1711 = vadd.f32 0.0, %v1710
      %v1712 = vpop.f32.mrf.mxu0
      %v1713 = vpop.f32.mrf.mxu0
      %v1714 = vadd.f32 0.0, %v1713
      %v1715 = vpop.f32.mrf.mxu0
      %1716 = vmatprep.mubr.bf16.mxu0 0
      %1717 = vmatmul.mubr.bf16.gmra.mxu0 %v1026
      %v1718 = vpop.f32.mrf.mxu0
      %v1719 = vadd.f32 0.0, %v1718
      %v1720 = vpop.f32.mrf.mxu0
      %v1721 = vpop.f32.mrf.mxu0
      %v1722 = vadd.f32 0.0, %v1721
      %v1723 = vpop.f32.mrf.mxu0
      %1724 = vmatprep.mubr.bf16.mxu0 0
      %1725 = vmatmul.mubr.bf16.gmra.mxu0 %v1029
      %v1726 = vpop.f32.mrf.mxu0
      %v1727 = vadd.f32 0.0, %v1726
      %v1728 = vpop.f32.mrf.mxu0
      %v1729 = vpop.f32.mrf.mxu0
      %v1730 = vadd.f32 0.0, %v1729
      %v1731 = vpop.f32.mrf.mxu0
      %1732 = vmatprep.mubr.bf16.mxu0 0
      %1733 = vmatmul.mubr.bf16.gmra.mxu0 %v1032
      %v1734 = vpop.f32.mrf.mxu0
      %v1735 = vadd.f32 0.0, %v1734
      %v1736 = vpop.f32.mrf.mxu0
      %v1737 = vpop.f32.mrf.mxu0
      %v1738 = vadd.f32 0.0, %v1737
      %v1739 = vpop.f32.mrf.mxu0
      %1740 = vmatprep.mubr.bf16.mxu0 0
      %1741 = vmatmul.mubr.bf16.gmra.mxu0 %v1035
      %v1742 = vpop.f32.mrf.mxu0
      %v1743 = vadd.f32 0.0, %v1742
      %v1744 = vpop.f32.mrf.mxu0
      %v1745 = vpop.f32.mrf.mxu0
      %v1746 = vadd.f32 0.0, %v1745
      %v1747 = vpop.f32.mrf.mxu0
      %1748 = vmatprep.mubr.bf16.mxu0 0
      %1749 = vmatmul.mubr.bf16.gmra.mxu0 %v1038
      %v1750 = vpop.f32.mrf.mxu0
      %v1751 = vadd.f32 0.0, %v1750
      %v1752 = vpop.f32.mrf.mxu0
      %v1753 = vpop.f32.mrf.mxu0
      %v1754 = vadd.f32 0.0, %v1753
      %v1755 = vpop.f32.mrf.mxu0
      %1756 = vmatprep.mubr.bf16.mxu0 0
      %1757 = vmatmul.mubr.bf16.gmra.mxu0 %v1041
      %v1758 = vpop.f32.mrf.mxu0
      %v1759 = vadd.f32 0.0, %v1758
      %v1760 = vpop.f32.mrf.mxu0
      %v1761 = vpop.f32.mrf.mxu0
      %v1762 = vadd.f32 0.0, %v1761
      %v1763 = vpop.f32.mrf.mxu0
      %1764 = vmatprep.mubr.bf16.mxu0 0
      %1765 = vmatmul.mubr.bf16.gmra.mxu0 %v1044
      %v1766 = vpop.f32.mrf.mxu0
      %v1767 = vadd.f32 0.0, %v1766
      %v1768 = vpop.f32.mrf.mxu0
      %v1769 = vpop.f32.mrf.mxu0
      %v1770 = vadd.f32 0.0, %v1769
      %v1771 = vpop.f32.mrf.mxu0
      %1772 = vmatprep.mubr.bf16.mxu0 0
      %1773 = vmatmul.mubr.bf16.gmra.mxu0 %v1047
      %v1774 = vpop.f32.mrf.mxu0
      %v1775 = vadd.f32 0.0, %v1774
      %v1776 = vpop.f32.mrf.mxu0
      %v1777 = vpop.f32.mrf.mxu0
      %v1778 = vadd.f32 0.0, %v1777
      %v1779 = vpop.f32.mrf.mxu0
      %1780 = vmatprep.mubr.bf16.mxu0 0
      %1781 = vmatmul.mubr.bf16.gmra.mxu0 %v1050
      %v1782 = vpop.f32.mrf.mxu0
      %v1783 = vadd.f32 0.0, %v1782
      %v1784 = vpop.f32.mrf.mxu0
      %v1785 = vpop.f32.mrf.mxu0
      %v1786 = vadd.f32 0.0, %v1785
      %v1787 = vpop.f32.mrf.mxu0
      %1788 = vmatprep.mubr.bf16.mxu0 0
      %1789 = vmatmul.mubr.bf16.gmra.mxu0 %v1053
      %v1790 = vpop.f32.mrf.mxu0
      %v1791 = vadd.f32 0.0, %v1790
      %v1792 = vpop.f32.mrf.mxu0
      %v1793 = vpop.f32.mrf.mxu0
      %v1794 = vadd.f32 0.0, %v1793
      %v1795 = vpop.f32.mrf.mxu0
      %1796 = vmatprep.mubr.bf16.mxu0 0
      %1797 = vmatmul.mubr.bf16.gmra.mxu0 %v1056
      %v1798 = vpop.f32.mrf.mxu0
      %v1799 = vadd.f32 0.0, %v1798
      %v1800 = vpop.f32.mrf.mxu0
      %v1801 = vpop.f32.mrf.mxu0
      %v1802 = vadd.f32 0.0, %v1801
      %v1803 = vpop.f32.mrf.mxu0
      %1804 = vmatprep.mubr.bf16.mxu0 0
      %1805 = vmatmul.mubr.bf16.gmra.mxu0 %v1059
      %v1806 = vpop.f32.mrf.mxu0
      %v1807 = vadd.f32 0.0, %v1806
      %v1808 = vpop.f32.mrf.mxu0
      %v1809 = vpop.f32.mrf.mxu0
      %v1810 = vadd.f32 0.0, %v1809
      %v1811 = vpop.f32.mrf.mxu0
      %1812 = vmatprep.mubr.bf16.mxu0 0
      %1813 = vmatmul.mubr.bf16.gmra.mxu0 %v1062
      %v1814 = vpop.f32.mrf.mxu0
      %v1815 = vadd.f32 0.0, %v1814
      %v1816 = vpop.f32.mrf.mxu0
      %v1817 = vpop.f32.mrf.mxu0
      %v1818 = vadd.f32 0.0, %v1817
      %v1819 = vpop.f32.mrf.mxu0
      %1820 = vmatprep.mubr.bf16.mxu0 0
      %1821 = vmatmul.mubr.bf16.gmra.mxu0 %v1663
      %v1822 = vpop.f32.mrf.mxu0
      %v1823 = vadd.f32 0.0, %v1822
      %v1824 = vpop.f32.mrf.mxu0
      %v1825 = vpop.f32.mrf.mxu0
      %v1826 = vadd.f32 0.0, %v1825
      %v1827 = vpop.f32.mrf.mxu0
      %1828 = vdwg.mxu0
      %v1829 = vadd.f32 %v1620, %v1703
      %v1830 = vadd.f32 %v1621, %v1706
      %v1831 = vadd.f32 %v1622, %v1711
      %v1832 = vadd.f32 %v1623, %v1714
      %v1833 = vadd.f32 %v1624, %v1719
      %v1834 = vadd.f32 %v1625, %v1722
      %v1835 = vadd.f32 %v1626, %v1727
      %v1836 = vadd.f32 %v1627, %v1730
      %v1837 = vadd.f32 %v1628, %v1735
      %v1838 = vadd.f32 %v1629, %v1738
      %v1839 = vadd.f32 %v1630, %v1743
      %v1840 = vadd.f32 %v1631, %v1746
      %v1841 = vadd.f32 %v1632, %v1751
      %v1842 = vadd.f32 %v1633, %v1754
      %v1843 = vadd.f32 %v1634, %v1759
      %v1844 = vadd.f32 %v1635, %v1762
      %v1845 = vadd.f32 %v1636, %v1767
      %v1846 = vadd.f32 %v1637, %v1770
      %v1847 = vadd.f32 %v1638, %v1775
      %v1848 = vadd.f32 %v1639, %v1778
      %v1849 = vadd.f32 %v1640, %v1783
      %v1850 = vadd.f32 %v1641, %v1786
      %v1851 = vadd.f32 %v1642, %v1791
      %v1852 = vadd.f32 %v1643, %v1794
      %v1853 = vadd.f32 %v1644, %v1799
      %v1854 = vadd.f32 %v1645, %v1802
      %v1855 = vadd.f32 %v1646, %v1807
      %v1856 = vadd.f32 %v1647, %v1810
      %v1857 = vadd.f32 %v1648, %v1815
      %v1858 = vadd.f32 %v1649, %v1818
      %v1859 = vadd.f32 %v1650, %v1823
      %v1860 = vadd.f32 %v1651, %v1826
      %v1862 = vshrl.u32 %v275, 16
      %v1864 = vrot.slane %v1862, 4
      %v1865 = vshll.u32 %v275, 16
      %v1867 = vrot.slane %v1865, 5
      %v1868 = vor.u32 %v1864, %v1867
      %v1869 = vrot.slane %v1868, 4
      %v1871 = vshll.u32 %v276, 16
      %v1873 = vrot.slane %v1871, 5
      %v1874 = vsel %vm284, %v1869, %v1873
      %v1875 = vshrl.u32 %v276, 16
      %v1877 = vrot.slane %v1875, 4
      %v1878 = vor.u32 %v1877, %v1873
      %v1879 = vrot.slane %v1878, 4
      %v1881 = vshll.u32 %v277, 16
      %v1883 = vrot.slane %v1881, 5
      %v1884 = vsel %vm284, %v1879, %v1883
      %v1917 = vld [vmem:[%s1 + $0x8] sm:$0x3]
      %v1918 = vunpack.c.l.b16 %v1874
      %v1919 = vunpack.c.l.b16 %v1884
      %v1920 = vpack.c.b16 %v1919, %v1918
      %v1922 = vsel %vm722, %v1920, 0
      %v1925 = vsel %vm771, %v1917, 0
      %1927 = vmatprep.subr.bf16.mxu0 0
      %1928 = vmatpush1.bf16.msra.mxu0 0
      %1929 = vmatprep.subr.bf16.mxu0 0
      %1930 = vmatpush1.bf16.msra.mxu0 0
      %1931 = vmatprep.subr.bf16.mxu0 0
      %1932 = vmatpush1.bf16.msra.mxu0 0
      %1933 = vmatprep.subr.bf16.mxu0 0
      %1934 = vmatpush1.bf16.msra.mxu0 0
      %1935 = vmatprep.subr.bf16.mxu0 0
      %1936 = vmatpush1.bf16.msra.mxu0 0
      %1937 = vmatprep.subr.bf16.mxu0 0
      %1938 = vmatpush1.bf16.msra.mxu0 0
      %1939 = vmatprep.subr.bf16.mxu0 0
      %1940 = vmatpush1.bf16.msra.mxu0 0
      %1941 = vmatprep.subr.bf16.mxu0 0
      %1942 = vmatpush1.bf16.msra.mxu0 %v1925
      %1943 = vmatprep.subr.bf16.mxu0 0
      %1944 = vmatpush2.bf16.msra.mxu0 0
      %1945 = vmatprep.subr.bf16.mxu0 0
      %1946 = vmatpush2.bf16.msra.mxu0 0
      %1947 = vmatprep.subr.bf16.mxu0 0
      %1948 = vmatpush2.bf16.msra.mxu0 0
      %1949 = vmatprep.subr.bf16.mxu0 0
      %1950 = vmatpush2.bf16.msra.mxu0 0
      %1951 = vmatprep.subr.bf16.mxu0 0
      %1952 = vmatpush2.bf16.msra.mxu0 0
      %1953 = vmatprep.subr.bf16.mxu0 0
      %1954 = vmatpush2.bf16.msra.mxu0 0
      %1955 = vmatprep.subr.bf16.mxu0 0
      %1956 = vmatpush2.bf16.msra.mxu0 0
      %1957 = vmatprep.subr.bf16.mxu0 0
      %1958 = vmatpush2.bf16.msra.mxu0 0
      %1959 = vmatprep.mubr.bf16.mxu0 0
      %1960 = vmatmul.mubr.bf16.gmra.mxu0 %v727
      %v1961 = vpop.f32.mrf.mxu0
      %v1962 = vadd.f32 0.0, %v1961
      %v1963 = vpop.f32.mrf.mxu0
      %v1964 = vpop.f32.mrf.mxu0
      %v1965 = vadd.f32 0.0, %v1964
      %v1966 = vpop.f32.mrf.mxu0
      %1967 = vmatprep.mubr.bf16.mxu0 0
      %1968 = vmatmul.mubr.bf16.gmra.mxu0 %v730
      %v1969 = vpop.f32.mrf.mxu0
      %v1970 = vadd.f32 0.0, %v1969
      %v1971 = vpop.f32.mrf.mxu0
      %v1972 = vpop.f32.mrf.mxu0
      %v1973 = vadd.f32 0.0, %v1972
      %v1974 = vpop.f32.mrf.mxu0
      %1975 = vmatprep.mubr.bf16.mxu0 0
      %1976 = vmatmul.mubr.bf16.gmra.mxu0 %v733
      %v1977 = vpop.f32.mrf.mxu0
      %v1978 = vadd.f32 0.0, %v1977
      %v1979 = vpop.f32.mrf.mxu0
      %v1980 = vpop.f32.mrf.mxu0
      %v1981 = vadd.f32 0.0, %v1980
      %v1982 = vpop.f32.mrf.mxu0
      %1983 = vmatprep.mubr.bf16.mxu0 0
      %1984 = vmatmul.mubr.bf16.gmra.mxu0 %v736
      %v1985 = vpop.f32.mrf.mxu0
      %v1986 = vadd.f32 0.0, %v1985
      %v1987 = vpop.f32.mrf.mxu0
      %v1988 = vpop.f32.mrf.mxu0
      %v1989 = vadd.f32 0.0, %v1988
      %v1990 = vpop.f32.mrf.mxu0
      %1991 = vmatprep.mubr.bf16.mxu0 0
      %1992 = vmatmul.mubr.bf16.gmra.mxu0 %v739
      %v1993 = vpop.f32.mrf.mxu0
      %v1994 = vadd.f32 0.0, %v1993
      %v1995 = vpop.f32.mrf.mxu0
      %v1996 = vpop.f32.mrf.mxu0
      %v1997 = vadd.f32 0.0, %v1996
      %v1998 = vpop.f32.mrf.mxu0
      %1999 = vmatprep.mubr.bf16.mxu0 0
      %2000 = vmatmul.mubr.bf16.gmra.mxu0 %v742
      %v2001 = vpop.f32.mrf.mxu0
      %v2002 = vadd.f32 0.0, %v2001
      %v2003 = vpop.f32.mrf.mxu0
      %v2004 = vpop.f32.mrf.mxu0
      %v2005 = vadd.f32 0.0, %v2004
      %v2006 = vpop.f32.mrf.mxu0
      %2007 = vmatprep.mubr.bf16.mxu0 0
      %2008 = vmatmul.mubr.bf16.gmra.mxu0 %v745
      %v2009 = vpop.f32.mrf.mxu0
      %v2010 = vadd.f32 0.0, %v2009
      %v2011 = vpop.f32.mrf.mxu0
      %v2012 = vpop.f32.mrf.mxu0
      %v2013 = vadd.f32 0.0, %v2012
      %v2014 = vpop.f32.mrf.mxu0
      %2015 = vmatprep.mubr.bf16.mxu0 0
      %2016 = vmatmul.mubr.bf16.gmra.mxu0 %v748
      %v2017 = vpop.f32.mrf.mxu0
      %v2018 = vadd.f32 0.0, %v2017
      %v2019 = vpop.f32.mrf.mxu0
      %v2020 = vpop.f32.mrf.mxu0
      %v2021 = vadd.f32 0.0, %v2020
      %v2022 = vpop.f32.mrf.mxu0
      %2023 = vmatprep.mubr.bf16.mxu0 0
      %2024 = vmatmul.mubr.bf16.gmra.mxu0 %v751
      %v2025 = vpop.f32.mrf.mxu0
      %v2026 = vadd.f32 0.0, %v2025
      %v2027 = vpop.f32.mrf.mxu0
      %v2028 = vpop.f32.mrf.mxu0
      %v2029 = vadd.f32 0.0, %v2028
      %v2030 = vpop.f32.mrf.mxu0
      %2031 = vmatprep.mubr.bf16.mxu0 0
      %2032 = vmatmul.mubr.bf16.gmra.mxu0 %v754
      %v2033 = vpop.f32.mrf.mxu0
      %v2034 = vadd.f32 0.0, %v2033
      %v2035 = vpop.f32.mrf.mxu0
      %v2036 = vpop.f32.mrf.mxu0
      %v2037 = vadd.f32 0.0, %v2036
      %v2038 = vpop.f32.mrf.mxu0
      %2039 = vmatprep.mubr.bf16.mxu0 0
      %2040 = vmatmul.mubr.bf16.gmra.mxu0 %v757
      %v2041 = vpop.f32.mrf.mxu0
      %v2042 = vadd.f32 0.0, %v2041
      %v2043 = vpop.f32.mrf.mxu0
      %v2044 = vpop.f32.mrf.mxu0
      %v2045 = vadd.f32 0.0, %v2044
      %v2046 = vpop.f32.mrf.mxu0
      %2047 = vmatprep.mubr.bf16.mxu0 0
      %2048 = vmatmul.mubr.bf16.gmra.mxu0 %v760
      %v2049 = vpop.f32.mrf.mxu0
      %v2050 = vadd.f32 0.0, %v2049
      %v2051 = vpop.f32.mrf.mxu0
      %v2052 = vpop.f32.mrf.mxu0
      %v2053 = vadd.f32 0.0, %v2052
      %v2054 = vpop.f32.mrf.mxu0
      %2055 = vmatprep.mubr.bf16.mxu0 0
      %2056 = vmatmul.mubr.bf16.gmra.mxu0 %v763
      %v2057 = vpop.f32.mrf.mxu0
      %v2058 = vadd.f32 0.0, %v2057
      %v2059 = vpop.f32.mrf.mxu0
      %v2060 = vpop.f32.mrf.mxu0
      %v2061 = vadd.f32 0.0, %v2060
      %v2062 = vpop.f32.mrf.mxu0
      %2063 = vmatprep.mubr.bf16.mxu0 0
      %2064 = vmatmul.mubr.bf16.gmra.mxu0 %v766
      %v2065 = vpop.f32.mrf.mxu0
      %v2066 = vadd.f32 0.0, %v2065
      %v2067 = vpop.f32.mrf.mxu0
      %v2068 = vpop.f32.mrf.mxu0
      %v2069 = vadd.f32 0.0, %v2068
      %v2070 = vpop.f32.mrf.mxu0
      %2071 = vmatprep.mubr.bf16.mxu0 0
      %2072 = vmatmul.mubr.bf16.gmra.mxu0 %v769
      %v2073 = vpop.f32.mrf.mxu0
      %v2074 = vadd.f32 0.0, %v2073
      %v2075 = vpop.f32.mrf.mxu0
      %v2076 = vpop.f32.mrf.mxu0
      %v2077 = vadd.f32 0.0, %v2076
      %v2078 = vpop.f32.mrf.mxu0
      %2079 = vmatprep.mubr.bf16.mxu0 0
      %2080 = vmatmul.mubr.bf16.gmra.mxu0 %v1922
      %v2081 = vpop.f32.mrf.mxu0
      %v2082 = vadd.f32 0.0, %v2081
      %v2083 = vpop.f32.mrf.mxu0
      %v2084 = vpop.f32.mrf.mxu0
      %v2085 = vadd.f32 0.0, %v2084
      %v2086 = vpop.f32.mrf.mxu0
      %2087 = vdwg.mxu0
      %v2088 = vadd.f32 %v1829, %v1962
      %v2089 = vadd.f32 %v1830, %v1965
      %v2090 = vadd.f32 %v1831, %v1970
      %v2091 = vadd.f32 %v1832, %v1973
      %v2092 = vadd.f32 %v1833, %v1978
      %v2093 = vadd.f32 %v1834, %v1981
      %v2094 = vadd.f32 %v1835, %v1986
      %v2095 = vadd.f32 %v1836, %v1989
      %v2096 = vadd.f32 %v1837, %v1994
      %v2097 = vadd.f32 %v1838, %v1997
      %v2098 = vadd.f32 %v1839, %v2002
      %v2099 = vadd.f32 %v1840, %v2005
      %v2100 = vadd.f32 %v1841, %v2010
      %v2101 = vadd.f32 %v1842, %v2013
      %v2102 = vadd.f32 %v1843, %v2018
      %v2103 = vadd.f32 %v1844, %v2021
      %v2104 = vadd.f32 %v1845, %v2026
      %v2105 = vadd.f32 %v1846, %v2029
      %v2106 = vadd.f32 %v1847, %v2034
      %v2107 = vadd.f32 %v1848, %v2037
      %v2108 = vadd.f32 %v1849, %v2042
      %v2109 = vadd.f32 %v1850, %v2045
      %v2110 = vadd.f32 %v1851, %v2050
      %v2111 = vadd.f32 %v1852, %v2053
      %v2112 = vadd.f32 %v1853, %v2058
      %v2113 = vadd.f32 %v1854, %v2061
      %v2114 = vadd.f32 %v1855, %v2066
      %v2115 = vadd.f32 %v1856, %v2069
      %v2116 = vadd.f32 %v1857, %v2074
      %v2117 = vadd.f32 %v1858, %v2077
      %v2118 = vadd.f32 %v1859, %v2082
      %v2119 = vadd.f32 %v1860, %v2085
      %v2121 = vrot.slane %v275, 5
      %v2122 = vrot.slane %v2121, 4
      %v2123 = vrot.slane %v276, 5
      %v2124 = vsel %vm1246, %v2122, %v2123
      %v2125 = vrot.slane %v2123, 4
      %v2126 = vrot.slane %v277, 5
      %v2127 = vsel %vm1246, %v2125, %v2126
      %v2128 = vld [vmem:[%s1 + $0x8] sm:$0xc]
      %v2129 = vunpack.c.l.b16 %v2124
      %v2130 = vunpack.c.l.b16 %v2127
      %v2131 = vpack.c.b16 %v2130, %v2129
      %v2133 = vunpack.c.l.b16 %v2128
      %v2134 = vpack.c.b16 %v2133, %v2133
      %v2135 = vrot.slane %v2134, 2
      %v2137 = vsel %vm722, %v2131, 0
      %v2140 = vsel %vm771, %v2135, 0
      %2142 = vmatprep.subr.bf16.mxu0 0
      %2143 = vmatpush1.bf16.msra.mxu0 0
      %2144 = vmatprep.subr.bf16.mxu0 0
      %2145 = vmatpush1.bf16.msra.mxu0 0
      %2146 = vmatprep.subr.bf16.mxu0 0
      %2147 = vmatpush1.bf16.msra.mxu0 0
      %2148 = vmatprep.subr.bf16.mxu0 0
      %2149 = vmatpush1.bf16.msra.mxu0 0
      %2150 = vmatprep.subr.bf16.mxu0 0
      %2151 = vmatpush1.bf16.msra.mxu0 0
      %2152 = vmatprep.subr.bf16.mxu0 0
      %2153 = vmatpush1.bf16.msra.mxu0 0
      %2154 = vmatprep.subr.bf16.mxu0 0
      %2155 = vmatpush1.bf16.msra.mxu0 0
      %2156 = vmatprep.subr.bf16.mxu0 0
      %2157 = vmatpush1.bf16.msra.mxu0 %v2140
      %2158 = vmatprep.subr.bf16.mxu0 0
      %2159 = vmatpush2.bf16.msra.mxu0 0
      %2160 = vmatprep.subr.bf16.mxu0 0
      %2161 = vmatpush2.bf16.msra.mxu0 0
      %2162 = vmatprep.subr.bf16.mxu0 0
      %2163 = vmatpush2.bf16.msra.mxu0 0
      %2164 = vmatprep.subr.bf16.mxu0 0
      %2165 = vmatpush2.bf16.msra.mxu0 0
      %2166 = vmatprep.subr.bf16.mxu0 0
      %2167 = vmatpush2.bf16.msra.mxu0 0
      %2168 = vmatprep.subr.bf16.mxu0 0
      %2169 = vmatpush2.bf16.msra.mxu0 0
      %2170 = vmatprep.subr.bf16.mxu0 0
      %2171 = vmatpush2.bf16.msra.mxu0 0
      %2172 = vmatprep.subr.bf16.mxu0 0
      %2173 = vmatpush2.bf16.msra.mxu0 0
      %2174 = vmatprep.mubr.bf16.mxu0 0
      %2175 = vmatmul.mubr.bf16.gmra.mxu0 %v1412
      %v2176 = vpop.f32.mrf.mxu0
      %v2177 = vadd.f32 0.0, %v2176
      %v2178 = vpop.f32.mrf.mxu0
      %v2179 = vpop.f32.mrf.mxu0
      %v2180 = vadd.f32 0.0, %v2179
      %v2181 = vpop.f32.mrf.mxu0
      %2182 = vmatprep.mubr.bf16.mxu0 0
      %2183 = vmatmul.mubr.bf16.gmra.mxu0 %v1415
      %v2184 = vpop.f32.mrf.mxu0
      %v2185 = vadd.f32 0.0, %v2184
      %v2186 = vpop.f32.mrf.mxu0
      %v2187 = vpop.f32.mrf.mxu0
      %v2188 = vadd.f32 0.0, %v2187
      %v2189 = vpop.f32.mrf.mxu0
      %2190 = vmatprep.mubr.bf16.mxu0 0
      %2191 = vmatmul.mubr.bf16.gmra.mxu0 %v1418
      %v2192 = vpop.f32.mrf.mxu0
      %v2193 = vadd.f32 0.0, %v2192
      %v2194 = vpop.f32.mrf.mxu0
      %v2195 = vpop.f32.mrf.mxu0
      %v2196 = vadd.f32 0.0, %v2195
      %v2197 = vpop.f32.mrf.mxu0
      %2198 = vmatprep.mubr.bf16.mxu0 0
      %2199 = vmatmul.mubr.bf16.gmra.mxu0 %v1421
      %v2200 = vpop.f32.mrf.mxu0
      %v2201 = vadd.f32 0.0, %v2200
      %v2202 = vpop.f32.mrf.mxu0
      %v2203 = vpop.f32.mrf.mxu0
      %v2204 = vadd.f32 0.0, %v2203
      %v2205 = vpop.f32.mrf.mxu0
      %2206 = vmatprep.mubr.bf16.mxu0 0
      %2207 = vmatmul.mubr.bf16.gmra.mxu0 %v1424
      %v2208 = vpop.f32.mrf.mxu0
      %v2209 = vadd.f32 0.0, %v2208
      %v2210 = vpop.f32.mrf.mxu0
      %v2211 = vpop.f32.mrf.mxu0
      %v2212 = vadd.f32 0.0, %v2211
      %v2213 = vpop.f32.mrf.mxu0
      %2214 = vmatprep.mubr.bf16.mxu0 0
      %2215 = vmatmul.mubr.bf16.gmra.mxu0 %v1427
      %v2216 = vpop.f32.mrf.mxu0
      %v2217 = vadd.f32 0.0, %v2216
      %v2218 = vpop.f32.mrf.mxu0
      %v2219 = vpop.f32.mrf.mxu0
      %v2220 = vadd.f32 0.0, %v2219
      %v2221 = vpop.f32.mrf.mxu0
      %2222 = vmatprep.mubr.bf16.mxu0 0
      %2223 = vmatmul.mubr.bf16.gmra.mxu0 %v1430
      %v2224 = vpop.f32.mrf.mxu0
      %v2225 = vadd.f32 0.0, %v2224
      %v2226 = vpop.f32.mrf.mxu0
      %v2227 = vpop.f32.mrf.mxu0
      %v2228 = vadd.f32 0.0, %v2227
      %v2229 = vpop.f32.mrf.mxu0
      %2230 = vmatprep.mubr.bf16.mxu0 0
      %2231 = vmatmul.mubr.bf16.gmra.mxu0 %v1433
      %v2232 = vpop.f32.mrf.mxu0
      %v2233 = vadd.f32 0.0, %v2232
      %v2234 = vpop.f32.mrf.mxu0
      %v2235 = vpop.f32.mrf.mxu0
      %v2236 = vadd.f32 0.0, %v2235
      %v2237 = vpop.f32.mrf.mxu0
      %2238 = vmatprep.mubr.bf16.mxu0 0
      %2239 = vmatmul.mubr.bf16.gmra.mxu0 %v1436
      %v2240 = vpop.f32.mrf.mxu0
      %v2241 = vadd.f32 0.0, %v2240
      %v2242 = vpop.f32.mrf.mxu0
      %v2243 = vpop.f32.mrf.mxu0
      %v2244 = vadd.f32 0.0, %v2243
      %v2245 = vpop.f32.mrf.mxu0
      %2246 = vmatprep.mubr.bf16.mxu0 0
      %2247 = vmatmul.mubr.bf16.gmra.mxu0 %v1439
      %v2248 = vpop.f32.mrf.mxu0
      %v2249 = vadd.f32 0.0, %v2248
      %v2250 = vpop.f32.mrf.mxu0
      %v2251 = vpop.f32.mrf.mxu0
      %v2252 = vadd.f32 0.0, %v2251
      %v2253 = vpop.f32.mrf.mxu0
      %2254 = vmatprep.mubr.bf16.mxu0 0
      %2255 = vmatmul.mubr.bf16.gmra.mxu0 %v1442
      %v2256 = vpop.f32.mrf.mxu0
      %v2257 = vadd.f32 0.0, %v2256
      %v2258 = vpop.f32.mrf.mxu0
      %v2259 = vpop.f32.mrf.mxu0
      %v2260 = vadd.f32 0.0, %v2259
      %v2261 = vpop.f32.mrf.mxu0
      %2262 = vmatprep.mubr.bf16.mxu0 0
      %2263 = vmatmul.mubr.bf16.gmra.mxu0 %v1445
      %v2264 = vpop.f32.mrf.mxu0
      %v2265 = vadd.f32 0.0, %v2264
      %v2266 = vpop.f32.mrf.mxu0
      %v2267 = vpop.f32.mrf.mxu0
      %v2268 = vadd.f32 0.0, %v2267
      %v2269 = vpop.f32.mrf.mxu0
      %2270 = vmatprep.mubr.bf16.mxu0 0
      %2271 = vmatmul.mubr.bf16.gmra.mxu0 %v1448
      %v2272 = vpop.f32.mrf.mxu0
      %v2273 = vadd.f32 0.0, %v2272
      %v2274 = vpop.f32.mrf.mxu0
      %v2275 = vpop.f32.mrf.mxu0
      %v2276 = vadd.f32 0.0, %v2275
      %v2277 = vpop.f32.mrf.mxu0
      %2278 = vmatprep.mubr.bf16.mxu0 0
      %2279 = vmatmul.mubr.bf16.gmra.mxu0 %v1451
      %v2280 = vpop.f32.mrf.mxu0
      %v2281 = vadd.f32 0.0, %v2280
      %v2282 = vpop.f32.mrf.mxu0
      %v2283 = vpop.f32.mrf.mxu0
      %v2284 = vadd.f32 0.0, %v2283
      %v2285 = vpop.f32.mrf.mxu0
      %2286 = vmatprep.mubr.bf16.mxu0 0
      %2287 = vmatmul.mubr.bf16.gmra.mxu0 %v1454
      %v2288 = vpop.f32.mrf.mxu0
      %v2289 = vadd.f32 0.0, %v2288
      %v2290 = vpop.f32.mrf.mxu0
      %v2291 = vpop.f32.mrf.mxu0
      %v2292 = vadd.f32 0.0, %v2291
      %v2293 = vpop.f32.mrf.mxu0
      %2294 = vmatprep.mubr.bf16.mxu0 0
      %2295 = vmatmul.mubr.bf16.gmra.mxu0 %v2137
      %v2296 = vpop.f32.mrf.mxu0
      %v2297 = vadd.f32 0.0, %v2296
      %v2298 = vpop.f32.mrf.mxu0
      %v2299 = vpop.f32.mrf.mxu0
      %v2300 = vadd.f32 0.0, %v2299
      %v2301 = vpop.f32.mrf.mxu0
      %2302 = vdwg.mxu0
      %v2303 = vadd.f32 %v2088, %v2177
      %v2304 = vadd.f32 %v2089, %v2180
      %v2305 = vadd.f32 %v2090, %v2185
      %v2306 = vadd.f32 %v2091, %v2188
      %v2307 = vadd.f32 %v2092, %v2193
      %v2308 = vadd.f32 %v2093, %v2196
      %v2309 = vadd.f32 %v2094, %v2201
      %v2310 = vadd.f32 %v2095, %v2204
      %v2311 = vadd.f32 %v2096, %v2209
      %v2312 = vadd.f32 %v2097, %v2212
      %v2313 = vadd.f32 %v2098, %v2217
      %v2314 = vadd.f32 %v2099, %v2220
      %v2315 = vadd.f32 %v2100, %v2225
      %v2316 = vadd.f32 %v2101, %v2228
      %v2317 = vadd.f32 %v2102, %v2233
      %v2318 = vadd.f32 %v2103, %v2236
      %v2319 = vadd.f32 %v2104, %v2241
      %v2320 = vadd.f32 %v2105, %v2244
      %v2321 = vadd.f32 %v2106, %v2249
      %v2322 = vadd.f32 %v2107, %v2252
      %v2323 = vadd.f32 %v2108, %v2257
      %v2324 = vadd.f32 %v2109, %v2260
      %v2325 = vadd.f32 %v2110, %v2265
      %v2326 = vadd.f32 %v2111, %v2268
      %v2327 = vadd.f32 %v2112, %v2273
      %v2328 = vadd.f32 %v2113, %v2276
      %v2329 = vadd.f32 %v2114, %v2281
      %v2330 = vadd.f32 %v2115, %v2284
      %v2331 = vadd.f32 %v2116, %v2289
      %v2332 = vadd.f32 %v2117, %v2292
      %v2333 = vadd.f32 %v2118, %v2297
      %v2334 = vadd.f32 %v2119, %v2300
      %v2335 = vld [vmem:[%s1 + $0xc] sm:$0x3]
      %v2338 = vunpack.c.l.b16 %v278
      %v2339 = vunpack.c.l.b16 %v279
      %v2340 = vpack.c.b16 %v2339, %v2338
      %v2342 = vsel %vm722, %v2340, 0
      %v2345 = vsel %vm771, %v2335, 0
      %2347 = vmatprep.subr.bf16.mxu0 0
      %2348 = vmatpush1.bf16.msra.mxu0 0
      %2349 = vmatprep.subr.bf16.mxu0 0
      %2350 = vmatpush1.bf16.msra.mxu0 0
      %2351 = vmatprep.subr.bf16.mxu0 0
      %2352 = vmatpush1.bf16.msra.mxu0 0
      %2353 = vmatprep.subr.bf16.mxu0 0
      %2354 = vmatpush1.bf16.msra.mxu0 0
      %2355 = vmatprep.subr.bf16.mxu0 0
      %2356 = vmatpush1.bf16.msra.mxu0 0
      %2357 = vmatprep.subr.bf16.mxu0 0
      %2358 = vmatpush1.bf16.msra.mxu0 0
      %2359 = vmatprep.subr.bf16.mxu0 0
      %2360 = vmatpush1.bf16.msra.mxu0 0
      %2361 = vmatprep.subr.bf16.mxu0 0
      %2362 = vmatpush1.bf16.msra.mxu0 %v2345
      %2363 = vmatprep.subr.bf16.mxu0 0
      %2364 = vmatpush2.bf16.msra.mxu0 0
      %2365 = vmatprep.subr.bf16.mxu0 0
      %2366 = vmatpush2.bf16.msra.mxu0 0
      %2367 = vmatprep.subr.bf16.mxu0 0
      %2368 = vmatpush2.bf16.msra.mxu0 0
      %2369 = vmatprep.subr.bf16.mxu0 0
      %2370 = vmatpush2.bf16.msra.mxu0 0
      %2371 = vmatprep.subr.bf16.mxu0 0
      %2372 = vmatpush2.bf16.msra.mxu0 0
      %2373 = vmatprep.subr.bf16.mxu0 0
      %2374 = vmatpush2.bf16.msra.mxu0 0
      %2375 = vmatprep.subr.bf16.mxu0 0
      %2376 = vmatpush2.bf16.msra.mxu0 0
      %2377 = vmatprep.subr.bf16.mxu0 0
      %2378 = vmatpush2.bf16.msra.mxu0 0
      %2379 = vmatprep.mubr.bf16.mxu0 0
      %2380 = vmatmul.mubr.bf16.gmra.mxu0 %v1023
      %v2381 = vpop.f32.mrf.mxu0
      %v2382 = vadd.f32 0.0, %v2381
      %v2383 = vpop.f32.mrf.mxu0
      %v2384 = vpop.f32.mrf.mxu0
      %v2385 = vadd.f32 0.0, %v2384
      %v2386 = vpop.f32.mrf.mxu0
      %2387 = vmatprep.mubr.bf16.mxu0 0
      %2388 = vmatmul.mubr.bf16.gmra.mxu0 %v1026
      %v2389 = vpop.f32.mrf.mxu0
      %v2390 = vadd.f32 0.0, %v2389
      %v2391 = vpop.f32.mrf.mxu0
      %v2392 = vpop.f32.mrf.mxu0
      %v2393 = vadd.f32 0.0, %v2392
      %v2394 = vpop.f32.mrf.mxu0
      %2395 = vmatprep.mubr.bf16.mxu0 0
      %2396 = vmatmul.mubr.bf16.gmra.mxu0 %v1029
      %v2397 = vpop.f32.mrf.mxu0
      %v2398 = vadd.f32 0.0, %v2397
      %v2399 = vpop.f32.mrf.mxu0
      %v2400 = vpop.f32.mrf.mxu0
      %v2401 = vadd.f32 0.0, %v2400
      %v2402 = vpop.f32.mrf.mxu0
      %2403 = vmatprep.mubr.bf16.mxu0 0
      %2404 = vmatmul.mubr.bf16.gmra.mxu0 %v1032
      %v2405 = vpop.f32.mrf.mxu0
      %v2406 = vadd.f32 0.0, %v2405
      %v2407 = vpop.f32.mrf.mxu0
      %v2408 = vpop.f32.mrf.mxu0
      %v2409 = vadd.f32 0.0, %v2408
      %v2410 = vpop.f32.mrf.mxu0
      %2411 = vmatprep.mubr.bf16.mxu0 0
      %2412 = vmatmul.mubr.bf16.gmra.mxu0 %v1035
      %v2413 = vpop.f32.mrf.mxu0
      %v2414 = vadd.f32 0.0, %v2413
      %v2415 = vpop.f32.mrf.mxu0
      %v2416 = vpop.f32.mrf.mxu0
      %v2417 = vadd.f32 0.0, %v2416
      %v2418 = vpop.f32.mrf.mxu0
      %2419 = vmatprep.mubr.bf16.mxu0 0
      %2420 = vmatmul.mubr.bf16.gmra.mxu0 %v1038
      %v2421 = vpop.f32.mrf.mxu0
      %v2422 = vadd.f32 0.0, %v2421
      %v2423 = vpop.f32.mrf.mxu0
      %v2424 = vpop.f32.mrf.mxu0
      %v2425 = vadd.f32 0.0, %v2424
      %v2426 = vpop.f32.mrf.mxu0
      %2427 = vmatprep.mubr.bf16.mxu0 0
      %2428 = vmatmul.mubr.bf16.gmra.mxu0 %v1041
      %v2429 = vpop.f32.mrf.mxu0
      %v2430 = vadd.f32 0.0, %v2429
      %v2431 = vpop.f32.mrf.mxu0
      %v2432 = vpop.f32.mrf.mxu0
      %v2433 = vadd.f32 0.0, %v2432
      %v2434 = vpop.f32.mrf.mxu0
      %2435 = vmatprep.mubr.bf16.mxu0 0
      %2436 = vmatmul.mubr.bf16.gmra.mxu0 %v1044
      %v2437 = vpop.f32.mrf.mxu0
      %v2438 = vadd.f32 0.0, %v2437
      %v2439 = vpop.f32.mrf.mxu0
      %v2440 = vpop.f32.mrf.mxu0
      %v2441 = vadd.f32 0.0, %v2440
      %v2442 = vpop.f32.mrf.mxu0
      %2443 = vmatprep.mubr.bf16.mxu0 0
      %2444 = vmatmul.mubr.bf16.gmra.mxu0 %v1047
      %v2445 = vpop.f32.mrf.mxu0
      %v2446 = vadd.f32 0.0, %v2445
      %v2447 = vpop.f32.mrf.mxu0
      %v2448 = vpop.f32.mrf.mxu0
      %v2449 = vadd.f32 0.0, %v2448
      %v2450 = vpop.f32.mrf.mxu0
      %2451 = vmatprep.mubr.bf16.mxu0 0
      %2452 = vmatmul.mubr.bf16.gmra.mxu0 %v1050
      %v2453 = vpop.f32.mrf.mxu0
      %v2454 = vadd.f32 0.0, %v2453
      %v2455 = vpop.f32.mrf.mxu0
      %v2456 = vpop.f32.mrf.mxu0
      %v2457 = vadd.f32 0.0, %v2456
      %v2458 = vpop.f32.mrf.mxu0
      %2459 = vmatprep.mubr.bf16.mxu0 0
      %2460 = vmatmul.mubr.bf16.gmra.mxu0 %v1053
      %v2461 = vpop.f32.mrf.mxu0
      %v2462 = vadd.f32 0.0, %v2461
      %v2463 = vpop.f32.mrf.mxu0
      %v2464 = vpop.f32.mrf.mxu0
      %v2465 = vadd.f32 0.0, %v2464
      %v2466 = vpop.f32.mrf.mxu0
      %2467 = vmatprep.mubr.bf16.mxu0 0
      %2468 = vmatmul.mubr.bf16.gmra.mxu0 %v1056
      %v2469 = vpop.f32.mrf.mxu0
      %v2470 = vadd.f32 0.0, %v2469
      %v2471 = vpop.f32.mrf.mxu0
      %v2472 = vpop.f32.mrf.mxu0
      %v2473 = vadd.f32 0.0, %v2472
      %v2474 = vpop.f32.mrf.mxu0
      %2475 = vmatprep.mubr.bf16.mxu0 0
      %2476 = vmatmul.mubr.bf16.gmra.mxu0 %v1059
      %v2477 = vpop.f32.mrf.mxu0
      %v2478 = vadd.f32 0.0, %v2477
      %v2479 = vpop.f32.mrf.mxu0
      %v2480 = vpop.f32.mrf.mxu0
      %v2481 = vadd.f32 0.0, %v2480
      %v2482 = vpop.f32.mrf.mxu0
      %2483 = vmatprep.mubr.bf16.mxu0 0
      %2484 = vmatmul.mubr.bf16.gmra.mxu0 %v1062
      %v2485 = vpop.f32.mrf.mxu0
      %v2486 = vadd.f32 0.0, %v2485
      %v2487 = vpop.f32.mrf.mxu0
      %v2488 = vpop.f32.mrf.mxu0
      %v2489 = vadd.f32 0.0, %v2488
      %v2490 = vpop.f32.mrf.mxu0
      %2491 = vmatprep.mubr.bf16.mxu0 0
      %2492 = vmatmul.mubr.bf16.gmra.mxu0 %v1663
      %v2493 = vpop.f32.mrf.mxu0
      %v2494 = vadd.f32 0.0, %v2493
      %v2495 = vpop.f32.mrf.mxu0
      %v2496 = vpop.f32.mrf.mxu0
      %v2497 = vadd.f32 0.0, %v2496
      %v2498 = vpop.f32.mrf.mxu0
      %2499 = vmatprep.mubr.bf16.mxu0 0
      %2500 = vmatmul.mubr.bf16.gmra.mxu0 %v2342
      %v2501 = vpop.f32.mrf.mxu0
      %v2502 = vadd.f32 0.0, %v2501
      %v2503 = vpop.f32.mrf.mxu0
      %v2504 = vpop.f32.mrf.mxu0
      %v2505 = vadd.f32 0.0, %v2504
      %v2506 = vpop.f32.mrf.mxu0
      %2507 = vdwg.mxu0
      %v2508 = vadd.f32 %v2303, %v2382
      %v2509 = vadd.f32 %v2304, %v2385
      %v2510 = vadd.f32 %v2305, %v2390
      %v2511 = vadd.f32 %v2306, %v2393
      %v2512 = vadd.f32 %v2307, %v2398
      %v2513 = vadd.f32 %v2308, %v2401
      %v2514 = vadd.f32 %v2309, %v2406
      %v2515 = vadd.f32 %v2310, %v2409
      %v2516 = vadd.f32 %v2311, %v2414
      %v2517 = vadd.f32 %v2312, %v2417
      %v2518 = vadd.f32 %v2313, %v2422
      %v2519 = vadd.f32 %v2314, %v2425
      %v2520 = vadd.f32 %v2315, %v2430
      %v2521 = vadd.f32 %v2316, %v2433
      %v2522 = vadd.f32 %v2317, %v2438
      %v2523 = vadd.f32 %v2318, %v2441
      %v2524 = vadd.f32 %v2319, %v2446
      %v2525 = vadd.f32 %v2320, %v2449
      %v2526 = vadd.f32 %v2321, %v2454
      %v2527 = vadd.f32 %v2322, %v2457
      %v2528 = vadd.f32 %v2323, %v2462
      %v2529 = vadd.f32 %v2324, %v2465
      %v2530 = vadd.f32 %v2325, %v2470
      %v2531 = vadd.f32 %v2326, %v2473
      %v2532 = vadd.f32 %v2327, %v2478
      %v2533 = vadd.f32 %v2328, %v2481
      %v2534 = vadd.f32 %v2329, %v2486
      %v2535 = vadd.f32 %v2330, %v2489
      %v2536 = vadd.f32 %v2331, %v2494
      %v2537 = vadd.f32 %v2332, %v2497
      %v2538 = vadd.f32 %v2333, %v2502
      %v2539 = vadd.f32 %v2334, %v2505
      %v2541 = vshrl.u32 %v278, 16
      %v2543 = vrot.slane %v2541, 4
      %v2544 = vshll.u32 %v278, 16
      %v2546 = vrot.slane %v2544, 5
      %v2547 = vor.u32 %v2543, %v2546
      %v2548 = vrot.slane %v2547, 4
      %v2550 = vshll.u32 %v279, 16
      %v2552 = vrot.slane %v2550, 5
      %v2553 = vsel %vm284, %v2548, %v2552
      %v2554 = vshrl.u32 %v279, 16
      %v2556 = vrot.slane %v2554, 4
      %v2557 = vor.u32 %v2556, %v2552
      %v2558 = vrot.slane %v2557, 4
      %v2560 = vshll.u32 %v280, 16
      %v2562 = vrot.slane %v2560, 5
      %v2563 = vsel %vm284, %v2558, %v2562
      %v2564 = vld [vmem:[%s1 + $0xc] sm:$0xc]
      %v2565 = vunpack.c.l.b16 %v2553
      %v2566 = vunpack.c.l.b16 %v2563
      %v2567 = vpack.c.b16 %v2566, %v2565
      %v2569 = vunpack.c.l.b16 %v2564
      %v2570 = vpack.c.b16 %v2569, %v2569
      %v2571 = vrot.slane %v2570, 2
      %v2573 = vsel %vm722, %v2567, 0
      %v2576 = vsel %vm771, %v2571, 0
      %2578 = vmatprep.subr.bf16.mxu0 0
      %2579 = vmatpush1.bf16.msra.mxu0 0
      %2580 = vmatprep.subr.bf16.mxu0 0
      %2581 = vmatpush1.bf16.msra.mxu0 0
      %2582 = vmatprep.subr.bf16.mxu0 0
      %2583 = vmatpush1.bf16.msra.mxu0 0
      %2584 = vmatprep.subr.bf16.mxu0 0
      %2585 = vmatpush1.bf16.msra.mxu0 0
      %2586 = vmatprep.subr.bf16.mxu0 0
      %2587 = vmatpush1.bf16.msra.mxu0 0
      %2588 = vmatprep.subr.bf16.mxu0 0
      %2589 = vmatpush1.bf16.msra.mxu0 0
      %2590 = vmatprep.subr.bf16.mxu0 0
      %2591 = vmatpush1.bf16.msra.mxu0 0
      %2592 = vmatprep.subr.bf16.mxu0 0
      %2593 = vmatpush1.bf16.msra.mxu0 %v2576
      %2594 = vmatprep.subr.bf16.mxu0 0
      %2595 = vmatpush2.bf16.msra.mxu0 0
      %2596 = vmatprep.subr.bf16.mxu0 0
      %2597 = vmatpush2.bf16.msra.mxu0 0
      %2598 = vmatprep.subr.bf16.mxu0 0
      %2599 = vmatpush2.bf16.msra.mxu0 0
      %2600 = vmatprep.subr.bf16.mxu0 0
      %2601 = vmatpush2.bf16.msra.mxu0 0
      %2602 = vmatprep.subr.bf16.mxu0 0
      %2603 = vmatpush2.bf16.msra.mxu0 0
      %2604 = vmatprep.subr.bf16.mxu0 0
      %2605 = vmatpush2.bf16.msra.mxu0 0
      %2606 = vmatprep.subr.bf16.mxu0 0
      %2607 = vmatpush2.bf16.msra.mxu0 0
      %2608 = vmatprep.subr.bf16.mxu0 0
      %2609 = vmatpush2.bf16.msra.mxu0 0
      %2610 = vmatprep.mubr.bf16.mxu0 0
      %2611 = vmatmul.mubr.bf16.gmra.mxu0 %v730
      %v2612 = vpop.f32.mrf.mxu0
      %v2613 = vadd.f32 0.0, %v2612
      %v2614 = vpop.f32.mrf.mxu0
      %v2615 = vpop.f32.mrf.mxu0
      %v2616 = vadd.f32 0.0, %v2615
      %v2617 = vpop.f32.mrf.mxu0
      %2618 = vmatprep.mubr.bf16.mxu0 0
      %2619 = vmatmul.mubr.bf16.gmra.mxu0 %v733
      %v2620 = vpop.f32.mrf.mxu0
      %v2621 = vadd.f32 0.0, %v2620
      %v2622 = vpop.f32.mrf.mxu0
      %v2623 = vpop.f32.mrf.mxu0
      %v2624 = vadd.f32 0.0, %v2623
      %v2625 = vpop.f32.mrf.mxu0
      %2626 = vmatprep.mubr.bf16.mxu0 0
      %2627 = vmatmul.mubr.bf16.gmra.mxu0 %v736
      %v2628 = vpop.f32.mrf.mxu0
      %v2629 = vadd.f32 0.0, %v2628
      %v2630 = vpop.f32.mrf.mxu0
      %v2631 = vpop.f32.mrf.mxu0
      %v2632 = vadd.f32 0.0, %v2631
      %v2633 = vpop.f32.mrf.mxu0
      %2634 = vmatprep.mubr.bf16.mxu0 0
      %2635 = vmatmul.mubr.bf16.gmra.mxu0 %v739
      %v2636 = vpop.f32.mrf.mxu0
      %v2637 = vadd.f32 0.0, %v2636
      %v2638 = vpop.f32.mrf.mxu0
      %v2639 = vpop.f32.mrf.mxu0
      %v2640 = vadd.f32 0.0, %v2639
      %v2641 = vpop.f32.mrf.mxu0
      %2642 = vmatprep.mubr.bf16.mxu0 0
      %2643 = vmatmul.mubr.bf16.gmra.mxu0 %v742
      %v2644 = vpop.f32.mrf.mxu0
      %v2645 = vadd.f32 0.0, %v2644
      %v2646 = vpop.f32.mrf.mxu0
      %v2647 = vpop.f32.mrf.mxu0
      %v2648 = vadd.f32 0.0, %v2647
      %v2649 = vpop.f32.mrf.mxu0
      %2650 = vmatprep.mubr.bf16.mxu0 0
      %2651 = vmatmul.mubr.bf16.gmra.mxu0 %v745
      %v2652 = vpop.f32.mrf.mxu0
      %v2653 = vadd.f32 0.0, %v2652
      %v2654 = vpop.f32.mrf.mxu0
      %v2655 = vpop.f32.mrf.mxu0
      %v2656 = vadd.f32 0.0, %v2655
      %v2657 = vpop.f32.mrf.mxu0
      %2658 = vmatprep.mubr.bf16.mxu0 0
      %2659 = vmatmul.mubr.bf16.gmra.mxu0 %v748
      %v2660 = vpop.f32.mrf.mxu0
      %v2661 = vadd.f32 0.0, %v2660
      %v2662 = vpop.f32.mrf.mxu0
      %v2663 = vpop.f32.mrf.mxu0
      %v2664 = vadd.f32 0.0, %v2663
      %v2665 = vpop.f32.mrf.mxu0
      %2666 = vmatprep.mubr.bf16.mxu0 0
      %2667 = vmatmul.mubr.bf16.gmra.mxu0 %v751
      %v2668 = vpop.f32.mrf.mxu0
      %v2669 = vadd.f32 0.0, %v2668
      %v2670 = vpop.f32.mrf.mxu0
      %v2671 = vpop.f32.mrf.mxu0
      %v2672 = vadd.f32 0.0, %v2671
      %v2673 = vpop.f32.mrf.mxu0
      %2674 = vmatprep.mubr.bf16.mxu0 0
      %2675 = vmatmul.mubr.bf16.gmra.mxu0 %v754
      %v2676 = vpop.f32.mrf.mxu0
      %v2677 = vadd.f32 0.0, %v2676
      %v2678 = vpop.f32.mrf.mxu0
      %v2679 = vpop.f32.mrf.mxu0
      %v2680 = vadd.f32 0.0, %v2679
      %v2681 = vpop.f32.mrf.mxu0
      %2682 = vmatprep.mubr.bf16.mxu0 0
      %2683 = vmatmul.mubr.bf16.gmra.mxu0 %v757
      %v2684 = vpop.f32.mrf.mxu0
      %v2685 = vadd.f32 0.0, %v2684
      %v2686 = vpop.f32.mrf.mxu0
      %v2687 = vpop.f32.mrf.mxu0
      %v2688 = vadd.f32 0.0, %v2687
      %v2689 = vpop.f32.mrf.mxu0
      %2690 = vmatprep.mubr.bf16.mxu0 0
      %2691 = vmatmul.mubr.bf16.gmra.mxu0 %v760
      %v2692 = vpop.f32.mrf.mxu0
      %v2693 = vadd.f32 0.0, %v2692
      %v2694 = vpop.f32.mrf.mxu0
      %v2695 = vpop.f32.mrf.mxu0
      %v2696 = vadd.f32 0.0, %v2695
      %v2697 = vpop.f32.mrf.mxu0
      %2698 = vmatprep.mubr.bf16.mxu0 0
      %2699 = vmatmul.mubr.bf16.gmra.mxu0 %v763
      %v2700 = vpop.f32.mrf.mxu0
      %v2701 = vadd.f32 0.0, %v2700
      %v2702 = vpop.f32.mrf.mxu0
      %v2703 = vpop.f32.mrf.mxu0
      %v2704 = vadd.f32 0.0, %v2703
      %v2705 = vpop.f32.mrf.mxu0
      %2706 = vmatprep.mubr.bf16.mxu0 0
      %2707 = vmatmul.mubr.bf16.gmra.mxu0 %v766
      %v2708 = vpop.f32.mrf.mxu0
      %v2709 = vadd.f32 0.0, %v2708
      %v2710 = vpop.f32.mrf.mxu0
      %v2711 = vpop.f32.mrf.mxu0
      %v2712 = vadd.f32 0.0, %v2711
      %v2713 = vpop.f32.mrf.mxu0
      %2714 = vmatprep.mubr.bf16.mxu0 0
      %2715 = vmatmul.mubr.bf16.gmra.mxu0 %v769
      %v2716 = vpop.f32.mrf.mxu0
      %v2717 = vadd.f32 0.0, %v2716
      %v2718 = vpop.f32.mrf.mxu0
      %v2719 = vpop.f32.mrf.mxu0
      %v2720 = vadd.f32 0.0, %v2719
      %v2721 = vpop.f32.mrf.mxu0
      %2722 = vmatprep.mubr.bf16.mxu0 0
      %2723 = vmatmul.mubr.bf16.gmra.mxu0 %v1922
      %v2724 = vpop.f32.mrf.mxu0
      %v2725 = vadd.f32 0.0, %v2724
      %v2726 = vpop.f32.mrf.mxu0
      %v2727 = vpop.f32.mrf.mxu0
      %v2728 = vadd.f32 0.0, %v2727
      %v2729 = vpop.f32.mrf.mxu0
      %2730 = vmatprep.mubr.bf16.mxu0 0
      %2731 = vmatmul.mubr.bf16.gmra.mxu0 %v2573
      %v2732 = vpop.f32.mrf.mxu0
      %v2733 = vadd.f32 0.0, %v2732
      %v2734 = vpop.f32.mrf.mxu0
      %v2735 = vpop.f32.mrf.mxu0
      %v2736 = vadd.f32 0.0, %v2735
      %v2737 = vpop.f32.mrf.mxu0
      %2738 = vdwg.mxu0
      %v2739 = vadd.f32 %v2508, %v2613
      %v2740 = vadd.f32 %v2509, %v2616
      %v2741 = vadd.f32 %v2510, %v2621
      %v2742 = vadd.f32 %v2511, %v2624
      %v2743 = vadd.f32 %v2512, %v2629
      %v2744 = vadd.f32 %v2513, %v2632
      %v2745 = vadd.f32 %v2514, %v2637
      %v2746 = vadd.f32 %v2515, %v2640
      %v2747 = vadd.f32 %v2516, %v2645
      %v2748 = vadd.f32 %v2517, %v2648
      %v2749 = vadd.f32 %v2518, %v2653
      %v2750 = vadd.f32 %v2519, %v2656
      %v2751 = vadd.f32 %v2520, %v2661
      %v2752 = vadd.f32 %v2521, %v2664
      %v2753 = vadd.f32 %v2522, %v2669
      %v2754 = vadd.f32 %v2523, %v2672
      %v2755 = vadd.f32 %v2524, %v2677
      %v2756 = vadd.f32 %v2525, %v2680
      %v2757 = vadd.f32 %v2526, %v2685
      %v2758 = vadd.f32 %v2527, %v2688
      %v2759 = vadd.f32 %v2528, %v2693
      %v2760 = vadd.f32 %v2529, %v2696
      %v2761 = vadd.f32 %v2530, %v2701
      %v2762 = vadd.f32 %v2531, %v2704
      %v2763 = vadd.f32 %v2532, %v2709
      %v2764 = vadd.f32 %v2533, %v2712
      %v2765 = vadd.f32 %v2534, %v2717
      %v2766 = vadd.f32 %v2535, %v2720
      %v2767 = vadd.f32 %v2536, %v2725
      %v2768 = vadd.f32 %v2537, %v2728
      %v2769 = vadd.f32 %v2538, %v2733
      %v2770 = vadd.f32 %v2539, %v2736
      %v2772 = vrot.slane %v278, 5
      %v2773 = vrot.slane %v2772, 4
      %v2774 = vrot.slane %v279, 5
      %v2775 = vsel %vm1246, %v2773, %v2774
      %v2776 = vrot.slane %v2774, 4
      %v2777 = vrot.slane %v280, 5
      %v2778 = vsel %vm1246, %v2776, %v2777
      %v2779 = vld [vmem:[%s1 + $0x10] sm:$0x3]
      %v2780 = vunpack.c.l.b16 %v2775
      %v2781 = vunpack.c.l.b16 %v2778
      %v2782 = vpack.c.b16 %v2781, %v2780
      %v2784 = vsel %vm722, %v2782, 0
      %v2787 = vsel %vm771, %v2779, 0
      %2789 = vmatprep.subr.bf16.mxu0 0
      %2790 = vmatpush1.bf16.msra.mxu0 0
      %2791 = vmatprep.subr.bf16.mxu0 0
      %2792 = vmatpush1.bf16.msra.mxu0 0
      %2793 = vmatprep.subr.bf16.mxu0 0
      %2794 = vmatpush1.bf16.msra.mxu0 0
      %2795 = vmatprep.subr.bf16.mxu0 0
      %2796 = vmatpush1.bf16.msra.mxu0 0
      %2797 = vmatprep.subr.bf16.mxu0 0
      %2798 = vmatpush1.bf16.msra.mxu0 0
      %2799 = vmatprep.subr.bf16.mxu0 0
      %2800 = vmatpush1.bf16.msra.mxu0 0
      %2801 = vmatprep.subr.bf16.mxu0 0
      %2802 = vmatpush1.bf16.msra.mxu0 0
      %2803 = vmatprep.subr.bf16.mxu0 0
      %2804 = vmatpush1.bf16.msra.mxu0 %v2787
      %2805 = vmatprep.subr.bf16.mxu0 0
      %2806 = vmatpush2.bf16.msra.mxu0 0
      %2807 = vmatprep.subr.bf16.mxu0 0
      %2808 = vmatpush2.bf16.msra.mxu0 0
      %2809 = vmatprep.subr.bf16.mxu0 0
      %2810 = vmatpush2.bf16.msra.mxu0 0
      %2811 = vmatprep.subr.bf16.mxu0 0
      %2812 = vmatpush2.bf16.msra.mxu0 0
      %2813 = vmatprep.subr.bf16.mxu0 0
      %2814 = vmatpush2.bf16.msra.mxu0 0
      %2815 = vmatprep.subr.bf16.mxu0 0
      %2816 = vmatpush2.bf16.msra.mxu0 0
      %2817 = vmatprep.subr.bf16.mxu0 0
      %2818 = vmatpush2.bf16.msra.mxu0 0
      %2819 = vmatprep.subr.bf16.mxu0 0
      %2820 = vmatpush2.bf16.msra.mxu0 0
      %2821 = vmatprep.mubr.bf16.mxu0 0
      %2822 = vmatmul.mubr.bf16.gmra.mxu0 %v1415
      %v2823 = vpop.f32.mrf.mxu0
      %v2824 = vadd.f32 0.0, %v2823
      %v2825 = vpop.f32.mrf.mxu0
      %v2826 = vpop.f32.mrf.mxu0
      %v2827 = vadd.f32 0.0, %v2826
      %v2828 = vpop.f32.mrf.mxu0
      %2829 = vmatprep.mubr.bf16.mxu0 0
      %2830 = vmatmul.mubr.bf16.gmra.mxu0 %v1418
      %v2831 = vpop.f32.mrf.mxu0
      %v2832 = vadd.f32 0.0, %v2831
      %v2833 = vpop.f32.mrf.mxu0
      %v2834 = vpop.f32.mrf.mxu0
      %v2835 = vadd.f32 0.0, %v2834
      %v2836 = vpop.f32.mrf.mxu0
      %2837 = vmatprep.mubr.bf16.mxu0 0
      %2838 = vmatmul.mubr.bf16.gmra.mxu0 %v1421
      %v2839 = vpop.f32.mrf.mxu0
      %v2840 = vadd.f32 0.0, %v2839
      %v2841 = vpop.f32.mrf.mxu0
      %v2842 = vpop.f32.mrf.mxu0
      %v2843 = vadd.f32 0.0, %v2842
      %v2844 = vpop.f32.mrf.mxu0
      %2845 = vmatprep.mubr.bf16.mxu0 0
      %2846 = vmatmul.mubr.bf16.gmra.mxu0 %v1424
      %v2847 = vpop.f32.mrf.mxu0
      %v2848 = vadd.f32 0.0, %v2847
      %v2849 = vpop.f32.mrf.mxu0
      %v2850 = vpop.f32.mrf.mxu0
      %v2851 = vadd.f32 0.0, %v2850
      %v2852 = vpop.f32.mrf.mxu0
      %2853 = vmatprep.mubr.bf16.mxu0 0
      %2854 = vmatmul.mubr.bf16.gmra.mxu0 %v1427
      %v2855 = vpop.f32.mrf.mxu0
      %v2856 = vadd.f32 0.0, %v2855
      %v2857 = vpop.f32.mrf.mxu0
      %v2858 = vpop.f32.mrf.mxu0
      %v2859 = vadd.f32 0.0, %v2858
      %v2860 = vpop.f32.mrf.mxu0
      %2861 = vmatprep.mubr.bf16.mxu0 0
      %2862 = vmatmul.mubr.bf16.gmra.mxu0 %v1430
      %v2863 = vpop.f32.mrf.mxu0
      %v2864 = vadd.f32 0.0, %v2863
      %v2865 = vpop.f32.mrf.mxu0
      %v2866 = vpop.f32.mrf.mxu0
      %v2867 = vadd.f32 0.0, %v2866
      %v2868 = vpop.f32.mrf.mxu0
      %2869 = vmatprep.mubr.bf16.mxu0 0
      %2870 = vmatmul.mubr.bf16.gmra.mxu0 %v1433
      %v2871 = vpop.f32.mrf.mxu0
      %v2872 = vadd.f32 0.0, %v2871
      %v2873 = vpop.f32.mrf.mxu0
      %v2874 = vpop.f32.mrf.mxu0
      %v2875 = vadd.f32 0.0, %v2874
      %v2876 = vpop.f32.mrf.mxu0
      %2877 = vmatprep.mubr.bf16.mxu0 0
      %2878 = vmatmul.mubr.bf16.gmra.mxu0 %v1436
      %v2879 = vpop.f32.mrf.mxu0
      %v2880 = vadd.f32 0.0, %v2879
      %v2881 = vpop.f32.mrf.mxu0
      %v2882 = vpop.f32.mrf.mxu0
      %v2883 = vadd.f32 0.0, %v2882
      %v2884 = vpop.f32.mrf.mxu0
      %2885 = vmatprep.mubr.bf16.mxu0 0
      %2886 = vmatmul.mubr.bf16.gmra.mxu0 %v1439
      %v2887 = vpop.f32.mrf.mxu0
      %v2888 = vadd.f32 0.0, %v2887
      %v2889 = vpop.f32.mrf.mxu0
      %v2890 = vpop.f32.mrf.mxu0
      %v2891 = vadd.f32 0.0, %v2890
      %v2892 = vpop.f32.mrf.mxu0
      %2893 = vmatprep.mubr.bf16.mxu0 0
      %2894 = vmatmul.mubr.bf16.gmra.mxu0 %v1442
      %v2895 = vpop.f32.mrf.mxu0
      %v2896 = vadd.f32 0.0, %v2895
      %v2897 = vpop.f32.mrf.mxu0
      %v2898 = vpop.f32.mrf.mxu0
      %v2899 = vadd.f32 0.0, %v2898
      %v2900 = vpop.f32.mrf.mxu0
      %2901 = vmatprep.mubr.bf16.mxu0 0
      %2902 = vmatmul.mubr.bf16.gmra.mxu0 %v1445
      %v2903 = vpop.f32.mrf.mxu0
      %v2904 = vadd.f32 0.0, %v2903
      %v2905 = vpop.f32.mrf.mxu0
      %v2906 = vpop.f32.mrf.mxu0
      %v2907 = vadd.f32 0.0, %v2906
      %v2908 = vpop.f32.mrf.mxu0
      %2909 = vmatprep.mubr.bf16.mxu0 0
      %2910 = vmatmul.mubr.bf16.gmra.mxu0 %v1448
      %v2911 = vpop.f32.mrf.mxu0
      %v2912 = vadd.f32 0.0, %v2911
      %v2913 = vpop.f32.mrf.mxu0
      %v2914 = vpop.f32.mrf.mxu0
      %v2915 = vadd.f32 0.0, %v2914
      %v2916 = vpop.f32.mrf.mxu0
      %2917 = vmatprep.mubr.bf16.mxu0 0
      %2918 = vmatmul.mubr.bf16.gmra.mxu0 %v1451
      %v2919 = vpop.f32.mrf.mxu0
      %v2920 = vadd.f32 0.0, %v2919
      %v2921 = vpop.f32.mrf.mxu0
      %v2922 = vpop.f32.mrf.mxu0
      %v2923 = vadd.f32 0.0, %v2922
      %v2924 = vpop.f32.mrf.mxu0
      %2925 = vmatprep.mubr.bf16.mxu0 0
      %2926 = vmatmul.mubr.bf16.gmra.mxu0 %v1454
      %v2927 = vpop.f32.mrf.mxu0
      %v2928 = vadd.f32 0.0, %v2927
      %v2929 = vpop.f32.mrf.mxu0
      %v2930 = vpop.f32.mrf.mxu0
      %v2931 = vadd.f32 0.0, %v2930
      %v2932 = vpop.f32.mrf.mxu0
      %2933 = vmatprep.mubr.bf16.mxu0 0
      %2934 = vmatmul.mubr.bf16.gmra.mxu0 %v2137
      %v2935 = vpop.f32.mrf.mxu0
      %v2936 = vadd.f32 0.0, %v2935
      %v2937 = vpop.f32.mrf.mxu0
      %v2938 = vpop.f32.mrf.mxu0
      %v2939 = vadd.f32 0.0, %v2938
      %v2940 = vpop.f32.mrf.mxu0
      %2941 = vmatprep.mubr.bf16.mxu0 0
      %2942 = vmatmul.mubr.bf16.gmra.mxu0 %v2784
      %v2943 = vpop.f32.mrf.mxu0
      %v2944 = vadd.f32 0.0, %v2943
      %v2945 = vpop.f32.mrf.mxu0
      %v2946 = vpop.f32.mrf.mxu0
      %v2947 = vadd.f32 0.0, %v2946
      %v2948 = vpop.f32.mrf.mxu0
      %2949 = vdwg.mxu0
      %v2950 = vadd.f32 %v2739, %v2824
      %v2951 = vadd.f32 %v2740, %v2827
      %v2952 = vadd.f32 %v2741, %v2832
      %v2953 = vadd.f32 %v2742, %v2835
      %v2954 = vadd.f32 %v2743, %v2840
      %v2955 = vadd.f32 %v2744, %v2843
      %v2956 = vadd.f32 %v2745, %v2848
      %v2957 = vadd.f32 %v2746, %v2851
      %v2958 = vadd.f32 %v2747, %v2856
      %v2959 = vadd.f32 %v2748, %v2859
      %v2960 = vadd.f32 %v2749, %v2864
      %v2961 = vadd.f32 %v2750, %v2867
      %v2962 = vadd.f32 %v2751, %v2872
      %v2963 = vadd.f32 %v2752, %v2875
      %v2964 = vadd.f32 %v2753, %v2880
      %v2965 = vadd.f32 %v2754, %v2883
      %v2966 = vadd.f32 %v2755, %v2888
      %v2967 = vadd.f32 %v2756, %v2891
      %v2968 = vadd.f32 %v2757, %v2896
      %v2969 = vadd.f32 %v2758, %v2899
      %v2970 = vadd.f32 %v2759, %v2904
      %v2971 = vadd.f32 %v2760, %v2907
      %v2972 = vadd.f32 %v2761, %v2912
      %v2973 = vadd.f32 %v2762, %v2915
      %v2974 = vadd.f32 %v2763, %v2920
      %v2975 = vadd.f32 %v2764, %v2923
      %v2976 = vadd.f32 %v2765, %v2928
      %v2977 = vadd.f32 %v2766, %v2931
      %v2978 = vadd.f32 %v2767, %v2936
      %v2979 = vadd.f32 %v2768, %v2939
      %v2980 = vadd.f32 %v2769, %v2944
      %v2981 = vadd.f32 %v2770, %v2947
      %v2982 = vld [vmem:[%s2] sm:$0x1]
      %v2984 = vlaneseq
      %v2985 = vshrl.u32 %v2984, 7
      %v2986 = vsub.s32 0, %v2985
      %v2987 = vrot.slane %v2982, %v2986
      %v2989 = vadd.f32 %v2950, %v2987
      %v2990 = vadd.f32 %v2951, %v2987
      %v2991 = vadd.f32 %v2952, %v2987
      %v2992 = vadd.f32 %v2953, %v2987
      %v2993 = vadd.f32 %v2954, %v2987
      %v2994 = vadd.f32 %v2955, %v2987
      %v2995 = vadd.f32 %v2956, %v2987
      %v2996 = vadd.f32 %v2957, %v2987
      %v2997 = vadd.f32 %v2958, %v2987
      %v2998 = vadd.f32 %v2959, %v2987
      %v2999 = vadd.f32 %v2960, %v2987
      %v3000 = vadd.f32 %v2961, %v2987
      %v3001 = vadd.f32 %v2962, %v2987
      %v3002 = vadd.f32 %v2963, %v2987
      %v3003 = vadd.f32 %v2964, %v2987
      %v3004 = vadd.f32 %v2965, %v2987
      %v3005 = vadd.f32 %v2966, %v2987
      %v3006 = vadd.f32 %v2967, %v2987
      %v3007 = vadd.f32 %v2968, %v2987
      %v3008 = vadd.f32 %v2969, %v2987
      %v3009 = vadd.f32 %v2970, %v2987
      %v3010 = vadd.f32 %v2971, %v2987
      %v3011 = vadd.f32 %v2972, %v2987
      %v3012 = vadd.f32 %v2973, %v2987
      %v3013 = vadd.f32 %v2974, %v2987
      %v3014 = vadd.f32 %v2975, %v2987
      %v3015 = vadd.f32 %v2976, %v2987
      %v3016 = vadd.f32 %v2977, %v2987
      %v3017 = vadd.f32 %v2978, %v2987
      %v3018 = vadd.f32 %v2979, %v2987
      %v3019 = vadd.f32 %v2980, %v2987
      %v3020 = vadd.f32 %v2981, %v2987
      %v3021 = vmax.f32 %v2989, 0.0
      %v3022 = vmax.f32 %v2990, 0.0
      %v3023 = vmax.f32 %v2991, 0.0
      %v3024 = vmax.f32 %v2992, 0.0
      %v3025 = vmax.f32 %v2993, 0.0
      %v3026 = vmax.f32 %v2994, 0.0
      %v3027 = vmax.f32 %v2995, 0.0
      %v3028 = vmax.f32 %v2996, 0.0
      %v3029 = vmax.f32 %v2997, 0.0
      %v3030 = vmax.f32 %v2998, 0.0
      %v3031 = vmax.f32 %v2999, 0.0
      %v3032 = vmax.f32 %v3000, 0.0
      %v3033 = vmax.f32 %v3001, 0.0
      %v3034 = vmax.f32 %v3002, 0.0
      %v3035 = vmax.f32 %v3003, 0.0
      %v3036 = vmax.f32 %v3004, 0.0
      %v3037 = vmax.f32 %v3005, 0.0
      %v3038 = vmax.f32 %v3006, 0.0
      %v3039 = vmax.f32 %v3007, 0.0
      %v3040 = vmax.f32 %v3008, 0.0
      %v3041 = vmax.f32 %v3009, 0.0
      %v3042 = vmax.f32 %v3010, 0.0
      %v3043 = vmax.f32 %v3011, 0.0
      %v3044 = vmax.f32 %v3012, 0.0
      %v3045 = vmax.f32 %v3013, 0.0
      %v3046 = vmax.f32 %v3014, 0.0
      %v3047 = vmax.f32 %v3015, 0.0
      %v3048 = vmax.f32 %v3016, 0.0
      %v3049 = vmax.f32 %v3017, 0.0
      %v3050 = vmax.f32 %v3018, 0.0
      %v3051 = vmax.f32 %v3019, 0.0
      %v3052 = vmax.f32 %v3020, 0.0
      %vm3053 = vcmask 27648
      %3054 = vst.msk [vmem:[#allocation2] sm:$0xf] %vm3053, 0
      %3055 = vst.msk [vmem:[#allocation2 + $0x4] sm:$0xf] %vm3053, 0
      %vm3056 = vcmask 24576
      %3057 = vst.msk [vmem:[#allocation2 + $0x8] sm:$0x1] %vm3056, 0
      %3058 = vst.msk [vmem:[#allocation2 + $0xc] sm:$0xf] %vm3053, 0
      %3059 = vst.msk [vmem:[#allocation2 + $0x10] sm:$0xf] %vm3053, 0
      %3060 = vst.msk [vmem:[#allocation2 + $0x14] sm:$0x1] %vm3056, 0
      %3061 = vst.msk [vmem:[#allocation2 + $0x18] sm:$0xf] %vm3053, 0
      %3062 = vst.msk [vmem:[#allocation2 + $0x1c] sm:$0xf] %vm3053, 0
      %3063 = vst.msk [vmem:[#allocation2 + $0x20] sm:$0x1] %vm3056, 0
      %3064 = vst.msk [vmem:[#allocation2 + $0x24] sm:$0xf] %vm3053, 0
      %3065 = vst.msk [vmem:[#allocation2 + $0x28] sm:$0xf] %vm3053, 0
      %3066 = vst.msk [vmem:[#allocation2 + $0x2c] sm:$0x1] %vm3056, 0
      %3067 = vst.msk [vmem:[#allocation2 + $0x30] sm:$0xf] %vm3053, 0
      %3068 = vst.msk [vmem:[#allocation2 + $0x34] sm:$0xf] %vm3053, 0
      %3069 = vst.msk [vmem:[#allocation2 + $0x38] sm:$0x1] %vm3056, 0
      %3070 = vst.msk [vmem:[#allocation2 + $0x3c] sm:$0xf] %vm3053, 0
      %3071 = vst.msk [vmem:[#allocation2 + $0x40] sm:$0xf] %vm3053, 0
      %3072 = vst.msk [vmem:[#allocation2 + $0x44] sm:$0x1] %vm3056, 0
      %3073 = vst.msk [vmem:[#allocation2 + $0x48] sm:$0xf] %vm3053, 0
      %3074 = vst.msk [vmem:[#allocation2 + $0x4c] sm:$0xf] %vm3053, 0
      %3075 = vst.msk [vmem:[#allocation2 + $0x50] sm:$0x1] %vm3056, 0
      %3076 = vst.msk [vmem:[#allocation2 + $0x54] sm:$0xf] %vm3053, 0
      %3077 = vst.msk [vmem:[#allocation2 + $0x58] sm:$0xf] %vm3053, 0
      %3078 = vst.msk [vmem:[#allocation2 + $0x5c] sm:$0x1] %vm3056, 0
      %3079 = vst.msk [vmem:[#allocation2 + $0x60] sm:$0xf] %vm3053, 0
      %3080 = vst.msk [vmem:[#allocation2 + $0x64] sm:$0xf] %vm3053, 0
      %3081 = vst.msk [vmem:[#allocation2 + $0x68] sm:$0x1] %vm3056, 0
      %3082 = vst.msk [vmem:[#allocation2 + $0x6c] sm:$0xf] %vm3053, 0
      %3083 = vst.msk [vmem:[#allocation2 + $0x70] sm:$0xf] %vm3053, 0
      %3084 = vst.msk [vmem:[#allocation2 + $0x74] sm:$0x1] %vm3056, 0
      %3085 = vst.msk [vmem:[#allocation2 + $0x78] sm:$0xf] %vm3053, 0
      %3086 = vst.msk [vmem:[#allocation2 + $0x7c] sm:$0xf] %vm3053, 0
      %3087 = vst.msk [vmem:[#allocation2 + $0x80] sm:$0x1] %vm3056, 0
      %3088 = vst.msk [vmem:[#allocation2 + $0x84] sm:$0xf] %vm3053, 0
      %3089 = vst.msk [vmem:[#allocation2 + $0x88] sm:$0xf] %vm3053, 0
      %3090 = vst.msk [vmem:[#allocation2 + $0x8c] sm:$0x1] %vm3056, 0
      %3091 = vst.msk [vmem:[#allocation2 + $0x90] sm:$0xf] %vm3053, 0
      %3092 = vst.msk [vmem:[#allocation2 + $0x94] sm:$0xf] %vm3053, 0
      %3093 = vst.msk [vmem:[#allocation2 + $0x98] sm:$0x1] %vm3056, 0
      %3094 = vst.msk [vmem:[#allocation2 + $0x9c] sm:$0xf] %vm3053, 0
      %3095 = vst.msk [vmem:[#allocation2 + $0xa0] sm:$0xf] %vm3053, 0
      %3096 = vst.msk [vmem:[#allocation2 + $0xa4] sm:$0x1] %vm3056, 0
      %3097 = vst.msk [vmem:[#allocation2 + $0xa8] sm:$0xf] %vm3053, 0
      %3098 = vst.msk [vmem:[#allocation2 + $0xac] sm:$0xf] %vm3053, 0
      %3099 = vst.msk [vmem:[#allocation2 + $0xb0] sm:$0x1] %vm3056, 0
      %3100 = vst.msk [vmem:[#allocation2 + $0xb4] sm:$0xf] %vm3053, 0
      %3101 = vst.msk [vmem:[#allocation2 + $0xb8] sm:$0xf] %vm3053, 0
      %3102 = vst.msk [vmem:[#allocation2 + $0xbc] sm:$0x1] %vm3056, 0
      %3103 = vst.msk [vmem:[#allocation2 + $0xc0] sm:$0xf] %vm3053, 0
      %3104 = vst.msk [vmem:[#allocation2 + $0xc4] sm:$0xf] %vm3053, 0
      %3105 = vst.msk [vmem:[#allocation2 + $0xc8] sm:$0x1] %vm3056, 0
      %3106 = vst.msk [vmem:[#allocation2 + $0xcc] sm:$0xf] %vm3053, 0
      %3107 = vst.msk [vmem:[#allocation2 + $0xd0] sm:$0xf] %vm3053, 0
      %3108 = vst.msk [vmem:[#allocation2 + $0xd4] sm:$0x1] %vm3056, 0
      %v3109 = vpack.c.bf16 %v3022, %v3021
      %v3110 = vpack.c.bf16 %v3024, %v3023
      %v3111 = vpack.c.bf16 %v3026, %v3025
      %v3112 = vpack.c.bf16 %v3028, %v3027
      %v3113 = vpack.c.bf16 %v3030, %v3029
      %v3114 = vpack.c.bf16 %v3032, %v3031
      %v3115 = vpack.c.bf16 %v3034, %v3033
      %v3116 = vpack.c.bf16 %v3036, %v3035
      %v3117 = vpack.c.bf16 %v3038, %v3037
      %v3118 = vpack.c.bf16 %v3040, %v3039
      %v3119 = vpack.c.bf16 %v3042, %v3041
      %v3120 = vpack.c.bf16 %v3044, %v3043
      %v3121 = vpack.c.bf16 %v3046, %v3045
      %v3122 = vpack.c.bf16 %v3048, %v3047
      %v3123 = vpack.c.bf16 %v3050, %v3049
      %v3124 = vpack.c.bf16 %v3052, %v3051
      %v3141 = vunpack.c.l.b16 %v3109
      %v3142 = vunpack.c.h.b16 %v3109
      %v3143 = vunpack.c.l.b16 %v3110
      %v3144 = vunpack.c.h.b16 %v3110
      %v3145 = vunpack.c.l.b16 %v3111
      %v3146 = vunpack.c.h.b16 %v3111
      %v3147 = vunpack.c.l.b16 %v3112
      %v3148 = vunpack.c.h.b16 %v3112
      %v3149 = vunpack.c.l.b16 %v3113
      %v3150 = vunpack.c.h.b16 %v3113
      %v3151 = vunpack.c.l.b16 %v3114
      %v3152 = vunpack.c.h.b16 %v3114
      %v3153 = vunpack.c.l.b16 %v3115
      %v3154 = vunpack.c.h.b16 %v3115
      %v3155 = vunpack.c.l.b16 %v3116
      %v3156 = vunpack.c.h.b16 %v3116
      %v3157 = vunpack.c.l.b16 %v3117
      %v3158 = vunpack.c.h.b16 %v3117
      %v3159 = vunpack.c.l.b16 %v3118
      %v3160 = vunpack.c.h.b16 %v3118
      %v3161 = vunpack.c.l.b16 %v3119
      %v3162 = vunpack.c.h.b16 %v3119
      %v3163 = vunpack.c.l.b16 %v3120
      %v3164 = vunpack.c.h.b16 %v3120
      %v3165 = vunpack.c.l.b16 %v3121
      %v3166 = vunpack.c.h.b16 %v3121
      %v3167 = vunpack.c.l.b16 %v3122
      %v3168 = vunpack.c.h.b16 %v3122
      %v3169 = vunpack.c.l.b16 %v3123
      %v3170 = vunpack.c.h.b16 %v3123
      %v3171 = vunpack.c.l.b16 %v3124
      %v3172 = vunpack.c.h.b16 %v3124
      %v3173 = vpack.c.b16 %v3141, %v3141
      %v3174 = vpack.c.b16 %v3142, %v3142
      %v3175 = vpack.c.b16 %v3143, %v3143
      %v3176 = vpack.c.b16 %v3144, %v3144
      %v3177 = vpack.c.b16 %v3145, %v3145
      %v3178 = vpack.c.b16 %v3146, %v3146
      %v3179 = vpack.c.b16 %v3147, %v3147
      %v3180 = vpack.c.b16 %v3148, %v3148
      %v3181 = vpack.c.b16 %v3149, %v3149
      %v3182 = vpack.c.b16 %v3150, %v3150
      %v3183 = vpack.c.b16 %v3151, %v3151
      %v3184 = vpack.c.b16 %v3152, %v3152
      %v3185 = vpack.c.b16 %v3153, %v3153
      %v3186 = vpack.c.b16 %v3154, %v3154
      %v3187 = vpack.c.b16 %v3155, %v3155
      %v3188 = vpack.c.b16 %v3156, %v3156
      %v3189 = vpack.c.b16 %v3157, %v3157
      %v3190 = vpack.c.b16 %v3158, %v3158
      %v3191 = vpack.c.b16 %v3159, %v3159
      %v3192 = vpack.c.b16 %v3160, %v3160
      %v3193 = vpack.c.b16 %v3161, %v3161
      %v3194 = vpack.c.b16 %v3162, %v3162
      %v3195 = vpack.c.b16 %v3163, %v3163
      %v3196 = vpack.c.b16 %v3164, %v3164
      %v3197 = vpack.c.b16 %v3165, %v3165
      %v3198 = vpack.c.b16 %v3166, %v3166
      %v3199 = vpack.c.b16 %v3167, %v3167
      %v3200 = vpack.c.b16 %v3168, %v3168
      %v3201 = vpack.c.b16 %v3169, %v3169
      %v3202 = vpack.c.b16 %v3170, %v3170
      %v3203 = vpack.c.b16 %v3171, %v3171
      %v3204 = vpack.c.b16 %v3172, %v3172
      %vm3205 = vsmask.f32 256
      %vm3206 = vsmask.f32 4368
      %vm3207 = vmor %vm3205, %vm3206
      %v3209 = vshrl.u32 %v3173, 16
      %v3211 = vrot.slane %v3209, 7
      %v3212 = vshll.u32 %v3173, 16
      %v3214 = vor.u32 %v3211, %v3212
      %v3215 = vrot.slane %v3211, 4
      %v3217 = vshrl.u32 %v3174, 16
      %v3219 = vrot.slane %v3217, 7
      %v3220 = vshll.u32 %v3174, 16
      %v3222 = vor.u32 %v3219, %v3220
      %v3223 = vsel %vm3207, %v3215, %v3222
      %v3224 = vrot.slane %v3219, 4
      %v3226 = vshrl.u32 %v3175, 16
      %v3228 = vrot.slane %v3226, 7
      %v3229 = vshll.u32 %v3175, 16
      %v3231 = vor.u32 %v3228, %v3229
      %v3232 = vrot.slane %v3228, 4
      %v3234 = vshrl.u32 %v3176, 16
      %v3236 = vrot.slane %v3234, 7
      %v3237 = vshll.u32 %v3176, 16
      %v3239 = vor.u32 %v3236, %v3237
      %v3240 = vsel %vm3207, %v3232, %v3239
      %v3241 = vrot.slane %v3236, 4
      %v3243 = vshrl.u32 %v3177, 16
      %v3245 = vrot.slane %v3243, 7
      %v3246 = vshll.u32 %v3177, 16
      %v3248 = vor.u32 %v3245, %v3246
      %v3249 = vrot.slane %v3245, 4
      %v3251 = vshrl.u32 %v3178, 16
      %v3253 = vrot.slane %v3251, 7
      %v3254 = vshll.u32 %v3178, 16
      %v3256 = vor.u32 %v3253, %v3254
      %v3257 = vsel %vm3207, %v3249, %v3256
      %v3258 = vrot.slane %v3253, 4
      %v3260 = vshrl.u32 %v3179, 16
      %v3262 = vrot.slane %v3260, 7
      %v3263 = vshll.u32 %v3179, 16
      %v3265 = vor.u32 %v3262, %v3263
      %v3266 = vrot.slane %v3262, 4
      %v3268 = vshrl.u32 %v3180, 16
      %v3270 = vrot.slane %v3268, 7
      %v3271 = vshll.u32 %v3180, 16
      %v3273 = vor.u32 %v3270, %v3271
      %v3274 = vsel %vm3207, %v3266, %v3273
      %v3275 = vrot.slane %v3270, 4
      %v3277 = vshrl.u32 %v3181, 16
      %v3279 = vrot.slane %v3277, 7
      %v3280 = vshll.u32 %v3181, 16
      %v3282 = vor.u32 %v3279, %v3280
      %v3283 = vrot.slane %v3279, 4
      %v3285 = vshrl.u32 %v3182, 16
      %v3287 = vrot.slane %v3285, 7
      %v3288 = vshll.u32 %v3182, 16
      %v3290 = vor.u32 %v3287, %v3288
      %v3291 = vsel %vm3207, %v3283, %v3290
      %v3292 = vrot.slane %v3287, 4
      %v3294 = vshrl.u32 %v3183, 16
      %v3296 = vrot.slane %v3294, 7
      %v3297 = vshll.u32 %v3183, 16
      %v3299 = vor.u32 %v3296, %v3297
      %v3300 = vrot.slane %v3296, 4
      %v3302 = vshrl.u32 %v3184, 16
      %v3304 = vrot.slane %v3302, 7
      %v3305 = vshll.u32 %v3184, 16
      %v3307 = vor.u32 %v3304, %v3305
      %v3308 = vsel %vm3207, %v3300, %v3307
      %v3309 = vrot.slane %v3304, 4
      %v3311 = vshrl.u32 %v3185, 16
      %v3313 = vrot.slane %v3311, 7
      %v3314 = vshll.u32 %v3185, 16
      %v3316 = vor.u32 %v3313, %v3314
      %v3317 = vrot.slane %v3313, 4
      %v3319 = vshrl.u32 %v3186, 16
      %v3321 = vrot.slane %v3319, 7
      %v3322 = vshll.u32 %v3186, 16
      %v3324 = vor.u32 %v3321, %v3322
      %v3325 = vsel %vm3207, %v3317, %v3324
      %v3326 = vrot.slane %v3321, 4
      %v3328 = vshrl.u32 %v3187, 16
      %v3330 = vrot.slane %v3328, 7
      %v3331 = vshll.u32 %v3187, 16
      %v3333 = vor.u32 %v3330, %v3331
      %v3334 = vrot.slane %v3330, 4
      %v3336 = vshrl.u32 %v3188, 16
      %v3338 = vrot.slane %v3336, 7
      %v3339 = vshll.u32 %v3188, 16
      %v3341 = vor.u32 %v3338, %v3339
      %v3342 = vsel %vm3207, %v3334, %v3341
      %v3343 = vrot.slane %v3338, 4
      %v3345 = vshrl.u32 %v3189, 16
      %v3347 = vrot.slane %v3345, 7
      %v3348 = vshll.u32 %v3189, 16
      %v3350 = vor.u32 %v3347, %v3348
      %v3351 = vrot.slane %v3347, 4
      %v3353 = vshrl.u32 %v3190, 16
      %v3355 = vrot.slane %v3353, 7
      %v3356 = vshll.u32 %v3190, 16
      %v3358 = vor.u32 %v3355, %v3356
      %v3359 = vsel %vm3207, %v3351, %v3358
      %v3360 = vrot.slane %v3355, 4
      %v3362 = vshrl.u32 %v3191, 16
      %v3364 = vrot.slane %v3362, 7
      %v3365 = vshll.u32 %v3191, 16
      %v3367 = vor.u32 %v3364, %v3365
      %v3368 = vrot.slane %v3364, 4
      %v3370 = vshrl.u32 %v3192, 16
      %v3372 = vrot.slane %v3370, 7
      %v3373 = vshll.u32 %v3192, 16
      %v3375 = vor.u32 %v3372, %v3373
      %v3376 = vsel %vm3207, %v3368, %v3375
      %v3377 = vrot.slane %v3372, 4
      %v3379 = vshrl.u32 %v3193, 16
      %v3381 = vrot.slane %v3379, 7
      %v3382 = vshll.u32 %v3193, 16
      %v3384 = vor.u32 %v3381, %v3382
      %v3385 = vrot.slane %v3381, 4
      %v3387 = vshrl.u32 %v3194, 16
      %v3389 = vrot.slane %v3387, 7
      %v3390 = vshll.u32 %v3194, 16
      %v3392 = vor.u32 %v3389, %v3390
      %v3393 = vsel %vm3207, %v3385, %v3392
      %v3394 = vrot.slane %v3389, 4
      %v3396 = vshrl.u32 %v3195, 16
      %v3398 = vrot.slane %v3396, 7
      %v3399 = vshll.u32 %v3195, 16
      %v3401 = vor.u32 %v3398, %v3399
      %v3402 = vrot.slane %v3398, 4
      %v3404 = vshrl.u32 %v3196, 16
      %v3406 = vrot.slane %v3404, 7
      %v3407 = vshll.u32 %v3196, 16
      %v3409 = vor.u32 %v3406, %v3407
      %v3410 = vsel %vm3207, %v3402, %v3409
      %v3411 = vrot.slane %v3406, 4
      %v3413 = vshrl.u32 %v3197, 16
      %v3415 = vrot.slane %v3413, 7
      %v3416 = vshll.u32 %v3197, 16
      %v3418 = vor.u32 %v3415, %v3416
      %v3419 = vrot.slane %v3415, 4
      %v3421 = vshrl.u32 %v3198, 16
      %v3423 = vrot.slane %v3421, 7
      %v3424 = vshll.u32 %v3198, 16
      %v3426 = vor.u32 %v3423, %v3424
      %v3427 = vsel %vm3207, %v3419, %v3426
      %v3428 = vrot.slane %v3423, 4
      %v3430 = vshrl.u32 %v3199, 16
      %v3432 = vrot.slane %v3430, 7
      %v3433 = vshll.u32 %v3199, 16
      %v3435 = vor.u32 %v3432, %v3433
      %v3436 = vrot.slane %v3432, 4
      %v3438 = vshrl.u32 %v3200, 16
      %v3440 = vrot.slane %v3438, 7
      %v3441 = vshll.u32 %v3200, 16
      %v3443 = vor.u32 %v3440, %v3441
      %v3444 = vsel %vm3207, %v3436, %v3443
      %v3445 = vrot.slane %v3440, 4
      %v3447 = vshrl.u32 %v3201, 16
      %v3449 = vrot.slane %v3447, 7
      %v3450 = vshll.u32 %v3201, 16
      %v3452 = vor.u32 %v3449, %v3450
      %v3453 = vrot.slane %v3449, 4
      %v3455 = vshrl.u32 %v3202, 16
      %v3457 = vrot.slane %v3455, 7
      %v3458 = vshll.u32 %v3202, 16
      %v3460 = vor.u32 %v3457, %v3458
      %v3461 = vsel %vm3207, %v3453, %v3460
      %v3462 = vrot.slane %v3457, 4
      %v3464 = vshrl.u32 %v3203, 16
      %v3466 = vrot.slane %v3464, 7
      %v3467 = vshll.u32 %v3203, 16
      %v3469 = vor.u32 %v3466, %v3467
      %v3470 = vrot.slane %v3466, 4
      %v3472 = vshrl.u32 %v3204, 16
      %v3474 = vrot.slane %v3472, 7
      %v3475 = vshll.u32 %v3204, 16
      %v3477 = vor.u32 %v3474, %v3475
      %v3478 = vsel %vm3207, %v3470, %v3477
      %v3479 = vrot.slane %v3474, 4
      %s3528 = scalar_lea.vmem [#allocation2], 12
      %vm3529 = vcmask 27648
      %vm3530 = vsmask.f32 7938
      %vm3531 = vmand %vm3529, %vm3530
      %v3532 = vld [vmem:[%s3528] sm:$0xf]
      %v3533 = vsel %vm3531, %v3214, %v3532
      %3534 = vst [vmem:[%s3528] sm:$0xf] %v3533
      %3535 = vst.msk [vmem:[%s3528 + $0x4] sm:$0xf] %vm3053, %v3223
      %vm3536 = vcmask 24576
      %vm3537 = vmand %vm3536, %vm3205
      %v3538 = vld [vmem:[%s3528 + $0x8] sm:$0x1]
      %v3539 = vsel %vm3537, %v3224, %v3538
      %3540 = vst [vmem:[%s3528 + $0x8] sm:$0x1] %v3539
      %v3541 = vld [vmem:[%s3528 + $0xc] sm:$0xf]
      %v3542 = vsel %vm3531, %v3231, %v3541
      %3543 = vst [vmem:[%s3528 + $0xc] sm:$0xf] %v3542
      %3544 = vst.msk [vmem:[%s3528 + $0x10] sm:$0xf] %vm3053, %v3240
      %v3545 = vld [vmem:[%s3528 + $0x14] sm:$0x1]
      %v3546 = vsel %vm3537, %v3241, %v3545
      %3547 = vst [vmem:[%s3528 + $0x14] sm:$0x1] %v3546
      %v3548 = vld [vmem:[%s3528 + $0x18] sm:$0xf]
      %v3549 = vsel %vm3531, %v3248, %v3548
      %3550 = vst [vmem:[%s3528 + $0x18] sm:$0xf] %v3549
      %3551 = vst.msk [vmem:[%s3528 + $0x1c] sm:$0xf] %vm3053, %v3257
      %v3552 = vld [vmem:[%s3528 + $0x20] sm:$0x1]
      %v3553 = vsel %vm3537, %v3258, %v3552
      %3554 = vst [vmem:[%s3528 + $0x20] sm:$0x1] %v3553
      %v3555 = vld [vmem:[%s3528 + $0x24] sm:$0xf]
      %v3556 = vsel %vm3531, %v3265, %v3555
      %3557 = vst [vmem:[%s3528 + $0x24] sm:$0xf] %v3556
      %3558 = vst.msk [vmem:[%s3528 + $0x28] sm:$0xf] %vm3053, %v3274
      %v3559 = vld [vmem:[%s3528 + $0x2c] sm:$0x1]
      %v3560 = vsel %vm3537, %v3275, %v3559
      %3561 = vst [vmem:[%s3528 + $0x2c] sm:$0x1] %v3560
      %v3562 = vld [vmem:[%s3528 + $0x30] sm:$0xf]
      %v3563 = vsel %vm3531, %v3282, %v3562
      %3564 = vst [vmem:[%s3528 + $0x30] sm:$0xf] %v3563
      %3565 = vst.msk [vmem:[%s3528 + $0x34] sm:$0xf] %vm3053, %v3291
      %v3566 = vld [vmem:[%s3528 + $0x38] sm:$0x1]
      %v3567 = vsel %vm3537, %v3292, %v3566
      %3568 = vst [vmem:[%s3528 + $0x38] sm:$0x1] %v3567
      %v3569 = vld [vmem:[%s3528 + $0x3c] sm:$0xf]
      %v3570 = vsel %vm3531, %v3299, %v3569
      %3571 = vst [vmem:[%s3528 + $0x3c] sm:$0xf] %v3570
      %3572 = vst.msk [vmem:[%s3528 + $0x40] sm:$0xf] %vm3053, %v3308
      %v3573 = vld [vmem:[%s3528 + $0x44] sm:$0x1]
      %v3574 = vsel %vm3537, %v3309, %v3573
      %3575 = vst [vmem:[%s3528 + $0x44] sm:$0x1] %v3574
      %v3576 = vld [vmem:[%s3528 + $0x48] sm:$0xf]
      %v3577 = vsel %vm3531, %v3316, %v3576
      %3578 = vst [vmem:[%s3528 + $0x48] sm:$0xf] %v3577
      %3579 = vst.msk [vmem:[%s3528 + $0x4c] sm:$0xf] %vm3053, %v3325
      %v3580 = vld [vmem:[%s3528 + $0x50] sm:$0x1]
      %v3581 = vsel %vm3537, %v3326, %v3580
      %3582 = vst [vmem:[%s3528 + $0x50] sm:$0x1] %v3581
      %v3583 = vld [vmem:[%s3528 + $0x54] sm:$0xf]
      %v3584 = vsel %vm3531, %v3333, %v3583
      %3585 = vst [vmem:[%s3528 + $0x54] sm:$0xf] %v3584
      %3586 = vst.msk [vmem:[%s3528 + $0x58] sm:$0xf] %vm3053, %v3342
      %v3587 = vld [vmem:[%s3528 + $0x5c] sm:$0x1]
      %v3588 = vsel %vm3537, %v3343, %v3587
      %3589 = vst [vmem:[%s3528 + $0x5c] sm:$0x1] %v3588
      %v3590 = vld [vmem:[%s3528 + $0x60] sm:$0xf]
      %v3591 = vsel %vm3531, %v3350, %v3590
      %3592 = vst [vmem:[%s3528 + $0x60] sm:$0xf] %v3591
      %3593 = vst.msk [vmem:[%s3528 + $0x64] sm:$0xf] %vm3053, %v3359
      %v3594 = vld [vmem:[%s3528 + $0x68] sm:$0x1]
      %v3595 = vsel %vm3537, %v3360, %v3594
      %3596 = vst [vmem:[%s3528 + $0x68] sm:$0x1] %v3595
      %v3597 = vld [vmem:[%s3528 + $0x6c] sm:$0xf]
      %v3598 = vsel %vm3531, %v3367, %v3597
      %3599 = vst [vmem:[%s3528 + $0x6c] sm:$0xf] %v3598
      %3600 = vst.msk [vmem:[%s3528 + $0x70] sm:$0xf] %vm3053, %v3376
      %v3601 = vld [vmem:[%s3528 + $0x74] sm:$0x1]
      %v3602 = vsel %vm3537, %v3377, %v3601
      %3603 = vst [vmem:[%s3528 + $0x74] sm:$0x1] %v3602
      %v3604 = vld [vmem:[%s3528 + $0x78] sm:$0xf]
      %v3605 = vsel %vm3531, %v3384, %v3604
      %3606 = vst [vmem:[%s3528 + $0x78] sm:$0xf] %v3605
      %3607 = vst.msk [vmem:[%s3528 + $0x7c] sm:$0xf] %vm3053, %v3393
      %v3608 = vld [vmem:[%s3528 + $0x80] sm:$0x1]
      %v3609 = vsel %vm3537, %v3394, %v3608
      %3610 = vst [vmem:[%s3528 + $0x80] sm:$0x1] %v3609
      %v3611 = vld [vmem:[%s3528 + $0x84] sm:$0xf]
      %v3612 = vsel %vm3531, %v3401, %v3611
      %3613 = vst [vmem:[%s3528 + $0x84] sm:$0xf] %v3612
      %3614 = vst.msk [vmem:[%s3528 + $0x88] sm:$0xf] %vm3053, %v3410
      %v3615 = vld [vmem:[%s3528 + $0x8c] sm:$0x1]
      %v3616 = vsel %vm3537, %v3411, %v3615
      %3617 = vst [vmem:[%s3528 + $0x8c] sm:$0x1] %v3616
      %v3618 = vld [vmem:[%s3528 + $0x90] sm:$0xf]
      %v3619 = vsel %vm3531, %v3418, %v3618
      %3620 = vst [vmem:[%s3528 + $0x90] sm:$0xf] %v3619
      %3621 = vst.msk [vmem:[%s3528 + $0x94] sm:$0xf] %vm3053, %v3427
      %v3622 = vld [vmem:[%s3528 + $0x98] sm:$0x1]
      %v3623 = vsel %vm3537, %v3428, %v3622
      %3624 = vst [vmem:[%s3528 + $0x98] sm:$0x1] %v3623
      %v3625 = vld [vmem:[%s3528 + $0x9c] sm:$0xf]
      %v3626 = vsel %vm3531, %v3435, %v3625
      %3627 = vst [vmem:[%s3528 + $0x9c] sm:$0xf] %v3626
      %3628 = vst.msk [vmem:[%s3528 + $0xa0] sm:$0xf] %vm3053, %v3444
      %v3629 = vld [vmem:[%s3528 + $0xa4] sm:$0x1]
      %v3630 = vsel %vm3537, %v3445, %v3629
      %3631 = vst [vmem:[%s3528 + $0xa4] sm:$0x1] %v3630
      %v3632 = vld [vmem:[%s3528 + $0xa8] sm:$0xf]
      %v3633 = vsel %vm3531, %v3452, %v3632
      %3634 = vst [vmem:[%s3528 + $0xa8] sm:$0xf] %v3633
      %3635 = vst.msk [vmem:[%s3528 + $0xac] sm:$0xf] %vm3053, %v3461
      %v3636 = vld [vmem:[%s3528 + $0xb0] sm:$0x1]
      %v3637 = vsel %vm3537, %v3462, %v3636
      %3638 = vst [vmem:[%s3528 + $0xb0] sm:$0x1] %v3637
      %v3639 = vld [vmem:[%s3528 + $0xb4] sm:$0xf]
      %v3640 = vsel %vm3531, %v3469, %v3639
      %3641 = vst [vmem:[%s3528 + $0xb4] sm:$0xf] %v3640
      %3642 = vst.msk [vmem:[%s3528 + $0xb8] sm:$0xf] %vm3053, %v3478
      %v3643 = vld [vmem:[%s3528 + $0xbc] sm:$0x1]
      %v3644 = vsel %vm3537, %v3479, %v3643
      %3645 = vst [vmem:[%s3528 + $0xbc] sm:$0x1] %v3644
      %v3646 = vld [vmem:[#allocation2] sm:$0xf]
      %v3647 = vld [vmem:[#allocation2 + $0x4] sm:$0xf]
      %v3648 = vld [vmem:[#allocation2 + $0x8] sm:$0x1]
      %v3649 = vld [vmem:[#allocation2 + $0xc] sm:$0xf]
      %v3650 = vld [vmem:[#allocation2 + $0x10] sm:$0xf]
      %v3651 = vld [vmem:[#allocation2 + $0x14] sm:$0x1]
      %v3652 = vld [vmem:[#allocation2 + $0x18] sm:$0xf]
      %v3653 = vld [vmem:[#allocation2 + $0x1c] sm:$0xf]
      %v3654 = vld [vmem:[#allocation2 + $0x20] sm:$0x1]
      %v3655 = vld [vmem:[#allocation2 + $0x24] sm:$0xf]
      %v3656 = vld [vmem:[#allocation2 + $0x28] sm:$0xf]
      %v3657 = vld [vmem:[#allocation2 + $0x2c] sm:$0x1]
      %v3658 = vld [vmem:[#allocation2 + $0x30] sm:$0xf]
      %v3659 = vld [vmem:[#allocation2 + $0x34] sm:$0xf]
      %v3660 = vld [vmem:[#allocation2 + $0x38] sm:$0x1]
      %v3661 = vld [vmem:[#allocation2 + $0x3c] sm:$0xf]
      %v3662 = vld [vmem:[#allocation2 + $0x40] sm:$0xf]
      %v3663 = vld [vmem:[#allocation2 + $0x44] sm:$0x1]
      %v3664 = vld [vmem:[#allocation2 + $0x48] sm:$0xf]
      %v3665 = vld [vmem:[#allocation2 + $0x4c] sm:$0xf]
      %v3666 = vld [vmem:[#allocation2 + $0x50] sm:$0x1]
      %v3667 = vld [vmem:[#allocation2 + $0x54] sm:$0xf]
      %v3668 = vld [vmem:[#allocation2 + $0x58] sm:$0xf]
      %v3669 = vld [vmem:[#allocation2 + $0x5c] sm:$0x1]
      %v3670 = vld [vmem:[#allocation2 + $0x60] sm:$0xf]
      %v3671 = vld [vmem:[#allocation2 + $0x64] sm:$0xf]
      %v3672 = vld [vmem:[#allocation2 + $0x68] sm:$0x1]
      %v3673 = vld [vmem:[#allocation2 + $0x6c] sm:$0xf]
      %v3674 = vld [vmem:[#allocation2 + $0x70] sm:$0xf]
      %v3675 = vld [vmem:[#allocation2 + $0x74] sm:$0x1]
      %v3676 = vld [vmem:[#allocation2 + $0x78] sm:$0xf]
      %v3677 = vld [vmem:[#allocation2 + $0x7c] sm:$0xf]
      %v3678 = vld [vmem:[#allocation2 + $0x80] sm:$0x1]
      %v3679 = vld [vmem:[#allocation2 + $0x84] sm:$0xf]
      %v3680 = vld [vmem:[#allocation2 + $0x88] sm:$0xf]
      %v3681 = vld [vmem:[#allocation2 + $0x8c] sm:$0x1]
      %v3682 = vld [vmem:[#allocation2 + $0x90] sm:$0xf]
      %v3683 = vld [vmem:[#allocation2 + $0x94] sm:$0xf]
      %v3684 = vld [vmem:[#allocation2 + $0x98] sm:$0x1]
      %v3685 = vld [vmem:[#allocation2 + $0x9c] sm:$0xf]
      %v3686 = vld [vmem:[#allocation2 + $0xa0] sm:$0xf]
      %v3687 = vld [vmem:[#allocation2 + $0xa4] sm:$0x1]
      %v3688 = vld [vmem:[#allocation2 + $0xa8] sm:$0xf]
      %v3689 = vld [vmem:[#allocation2 + $0xac] sm:$0xf]
      %v3690 = vld [vmem:[#allocation2 + $0xb0] sm:$0x1]
      %v3691 = vld [vmem:[#allocation2 + $0xb4] sm:$0xf]
      %v3692 = vld [vmem:[#allocation2 + $0xb8] sm:$0xf]
      %v3693 = vld [vmem:[#allocation2 + $0xbc] sm:$0x1]
      %v3694 = vld [vmem:[#allocation2 + $0xc0] sm:$0xf]
      %v3695 = vld [vmem:[#allocation2 + $0xc4] sm:$0xf]
      %v3696 = vld [vmem:[#allocation2 + $0xc8] sm:$0x1]
      %v3697 = vld [vmem:[#allocation2 + $0xcc] sm:$0xf]
      %v3698 = vld [vmem:[#allocation2 + $0xd0] sm:$0xf]
      %v3699 = vld [vmem:[#allocation2 + $0xd4] sm:$0x1]
      %v3700 = vld [vmem:[%s3] sm:$0x3]
      %v3702 = vshrl.u32 %v3646, 16
      %v3704 = vrot.slane %v3702, 4
      %v3705 = vshll.u32 %v3646, 16
      %v3707 = vrot.slane %v3705, 5
      %v3708 = vor.u32 %v3704, %v3707
      %v3709 = vrot.slane %v3708, 4
      %v3711 = vshll.u32 %v3647, 16
      %v3713 = vrot.slane %v3711, 5
      %v3714 = vsel %vm284, %v3709, %v3713
      %v3715 = vshrl.u32 %v3647, 16
      %v3717 = vrot.slane %v3715, 4
      %v3718 = vor.u32 %v3717, %v3713
      %v3719 = vrot.slane %v3718, 4
      %v3721 = vshll.u32 %v3648, 16
      %v3723 = vrot.slane %v3721, 5
      %v3724 = vsel %vm284, %v3719, %v3723
      %v3726 = vshrl.u32 %v3649, 16
      %v3728 = vrot.slane %v3726, 4
      %v3729 = vshll.u32 %v3649, 16
      %v3731 = vrot.slane %v3729, 5
      %v3732 = vor.u32 %v3728, %v3731
      %v3733 = vrot.slane %v3732, 4
      %v3735 = vshll.u32 %v3650, 16
      %v3737 = vrot.slane %v3735, 5
      %v3738 = vsel %vm284, %v3733, %v3737
      %v3739 = vshrl.u32 %v3650, 16
      %v3741 = vrot.slane %v3739, 4
      %v3742 = vor.u32 %v3741, %v3737
      %v3743 = vrot.slane %v3742, 4
      %v3745 = vshll.u32 %v3651, 16
      %v3747 = vrot.slane %v3745, 5
      %v3748 = vsel %vm284, %v3743, %v3747
      %v3750 = vshrl.u32 %v3652, 16
      %v3752 = vrot.slane %v3750, 4
      %v3753 = vshll.u32 %v3652, 16
      %v3755 = vrot.slane %v3753, 5
      %v3756 = vor.u32 %v3752, %v3755
      %v3757 = vrot.slane %v3756, 4
      %v3759 = vshll.u32 %v3653, 16
      %v3761 = vrot.slane %v3759, 5
      %v3762 = vsel %vm284, %v3757, %v3761
      %v3763 = vshrl.u32 %v3653, 16
      %v3765 = vrot.slane %v3763, 4
      %v3766 = vor.u32 %v3765, %v3761
      %v3767 = vrot.slane %v3766, 4
      %v3769 = vshll.u32 %v3654, 16
      %v3771 = vrot.slane %v3769, 5
      %v3772 = vsel %vm284, %v3767, %v3771
      %v3774 = vshrl.u32 %v3655, 16
      %v3776 = vrot.slane %v3774, 4
      %v3777 = vshll.u32 %v3655, 16
      %v3779 = vrot.slane %v3777, 5
      %v3780 = vor.u32 %v3776, %v3779
      %v3781 = vrot.slane %v3780, 4
      %v3783 = vshll.u32 %v3656, 16
      %v3785 = vrot.slane %v3783, 5
      %v3786 = vsel %vm284, %v3781, %v3785
      %v3787 = vshrl.u32 %v3656, 16
      %v3789 = vrot.slane %v3787, 4
      %v3790 = vor.u32 %v3789, %v3785
      %v3791 = vrot.slane %v3790, 4
      %v3793 = vshll.u32 %v3657, 16
      %v3795 = vrot.slane %v3793, 5
      %v3796 = vsel %vm284, %v3791, %v3795
      %v3798 = vshrl.u32 %v3658, 16
      %v3800 = vrot.slane %v3798, 4
      %v3801 = vshll.u32 %v3658, 16
      %v3803 = vrot.slane %v3801, 5
      %v3804 = vor.u32 %v3800, %v3803
      %v3805 = vrot.slane %v3804, 4
      %v3807 = vshll.u32 %v3659, 16
      %v3809 = vrot.slane %v3807, 5
      %v3810 = vsel %vm284, %v3805, %v3809
      %v3811 = vshrl.u32 %v3659, 16
      %v3813 = vrot.slane %v3811, 4
      %v3814 = vor.u32 %v3813, %v3809
      %v3815 = vrot.slane %v3814, 4
      %v3817 = vshll.u32 %v3660, 16
      %v3819 = vrot.slane %v3817, 5
      %v3820 = vsel %vm284, %v3815, %v3819
      %v3822 = vshrl.u32 %v3661, 16
      %v3824 = vrot.slane %v3822, 4
      %v3825 = vshll.u32 %v3661, 16
      %v3827 = vrot.slane %v3825, 5
      %v3828 = vor.u32 %v3824, %v3827
      %v3829 = vrot.slane %v3828, 4
      %v3831 = vshll.u32 %v3662, 16
      %v3833 = vrot.slane %v3831, 5
      %v3834 = vsel %vm284, %v3829, %v3833
      %v3835 = vshrl.u32 %v3662, 16
      %v3837 = vrot.slane %v3835, 4
      %v3838 = vor.u32 %v3837, %v3833
      %v3839 = vrot.slane %v3838, 4
      %v3841 = vshll.u32 %v3663, 16
      %v3843 = vrot.slane %v3841, 5
      %v3844 = vsel %vm284, %v3839, %v3843
      %v3846 = vshrl.u32 %v3664, 16
      %v3848 = vrot.slane %v3846, 4
      %v3849 = vshll.u32 %v3664, 16
      %v3851 = vrot.slane %v3849, 5
      %v3852 = vor.u32 %v3848, %v3851
      %v3853 = vrot.slane %v3852, 4
      %v3855 = vshll.u32 %v3665, 16
      %v3857 = vrot.slane %v3855, 5
      %v3858 = vsel %vm284, %v3853, %v3857
      %v3859 = vshrl.u32 %v3665, 16
      %v3861 = vrot.slane %v3859, 4
      %v3862 = vor.u32 %v3861, %v3857
      %v3863 = vrot.slane %v3862, 4
      %v3865 = vshll.u32 %v3666, 16
      %v3867 = vrot.slane %v3865, 5
      %v3868 = vsel %vm284, %v3863, %v3867
      %v3870 = vshrl.u32 %v3667, 16
      %v3872 = vrot.slane %v3870, 4
      %v3873 = vshll.u32 %v3667, 16
      %v3875 = vrot.slane %v3873, 5
      %v3876 = vor.u32 %v3872, %v3875
      %v3877 = vrot.slane %v3876, 4
      %v3879 = vshll.u32 %v3668, 16
      %v3881 = vrot.slane %v3879, 5
      %v3882 = vsel %vm284, %v3877, %v3881
      %v3883 = vshrl.u32 %v3668, 16
      %v3885 = vrot.slane %v3883, 4
      %v3886 = vor.u32 %v3885, %v3881
      %v3887 = vrot.slane %v3886, 4
      %v3889 = vshll.u32 %v3669, 16
      %v3891 = vrot.slane %v3889, 5
      %v3892 = vsel %vm284, %v3887, %v3891
      %v3894 = vshrl.u32 %v3670, 16
      %v3896 = vrot.slane %v3894, 4
      %v3897 = vshll.u32 %v3670, 16
      %v3899 = vrot.slane %v3897, 5
      %v3900 = vor.u32 %v3896, %v3899
      %v3901 = vrot.slane %v3900, 4
      %v3903 = vshll.u32 %v3671, 16
      %v3905 = vrot.slane %v3903, 5
      %v3906 = vsel %vm284, %v3901, %v3905
      %v3907 = vshrl.u32 %v3671, 16
      %v3909 = vrot.slane %v3907, 4
      %v3910 = vor.u32 %v3909, %v3905
      %v3911 = vrot.slane %v3910, 4
      %v3913 = vshll.u32 %v3672, 16
      %v3915 = vrot.slane %v3913, 5
      %v3916 = vsel %vm284, %v3911, %v3915
      %v3918 = vshrl.u32 %v3673, 16
      %v3920 = vrot.slane %v3918, 4
      %v3921 = vshll.u32 %v3673, 16
      %v3923 = vrot.slane %v3921, 5
      %v3924 = vor.u32 %v3920, %v3923
      %v3925 = vrot.slane %v3924, 4
      %v3927 = vshll.u32 %v3674, 16
      %v3929 = vrot.slane %v3927, 5
      %v3930 = vsel %vm284, %v3925, %v3929
      %v3931 = vshrl.u32 %v3674, 16
      %v3933 = vrot.slane %v3931, 4
      %v3934 = vor.u32 %v3933, %v3929
      %v3935 = vrot.slane %v3934, 4
      %v3937 = vshll.u32 %v3675, 16
      %v3939 = vrot.slane %v3937, 5
      %v3940 = vsel %vm284, %v3935, %v3939
      %v3942 = vshrl.u32 %v3676, 16
      %v3944 = vrot.slane %v3942, 4
      %v3945 = vshll.u32 %v3676, 16
      %v3947 = vrot.slane %v3945, 5
      %v3948 = vor.u32 %v3944, %v3947
      %v3949 = vrot.slane %v3948, 4
      %v3951 = vshll.u32 %v3677, 16
      %v3953 = vrot.slane %v3951, 5
      %v3954 = vsel %vm284, %v3949, %v3953
      %v3955 = vshrl.u32 %v3677, 16
      %v3957 = vrot.slane %v3955, 4
      %v3958 = vor.u32 %v3957, %v3953
      %v3959 = vrot.slane %v3958, 4
      %v3961 = vshll.u32 %v3678, 16
      %v3963 = vrot.slane %v3961, 5
      %v3964 = vsel %vm284, %v3959, %v3963
      %v3966 = vshrl.u32 %v3679, 16
      %v3968 = vrot.slane %v3966, 4
      %v3969 = vshll.u32 %v3679, 16
      %v3971 = vrot.slane %v3969, 5
      %v3972 = vor.u32 %v3968, %v3971
      %v3973 = vrot.slane %v3972, 4
      %v3975 = vshll.u32 %v3680, 16
      %v3977 = vrot.slane %v3975, 5
      %v3978 = vsel %vm284, %v3973, %v3977
      %v3979 = vshrl.u32 %v3680, 16
      %v3981 = vrot.slane %v3979, 4
      %v3982 = vor.u32 %v3981, %v3977
      %v3983 = vrot.slane %v3982, 4
      %v3985 = vshll.u32 %v3681, 16
      %v3987 = vrot.slane %v3985, 5
      %v3988 = vsel %vm284, %v3983, %v3987
      %v3990 = vshrl.u32 %v3682, 16
      %v3992 = vrot.slane %v3990, 4
      %v3993 = vshll.u32 %v3682, 16
      %v3995 = vrot.slane %v3993, 5
      %v3996 = vor.u32 %v3992, %v3995
      %v3997 = vrot.slane %v3996, 4
      %v3999 = vshll.u32 %v3683, 16
      %v4001 = vrot.slane %v3999, 5
      %v4002 = vsel %vm284, %v3997, %v4001
      %v4003 = vshrl.u32 %v3683, 16
      %v4005 = vrot.slane %v4003, 4
      %v4006 = vor.u32 %v4005, %v4001
      %v4007 = vrot.slane %v4006, 4
      %v4009 = vshll.u32 %v3684, 16
      %v4011 = vrot.slane %v4009, 5
      %v4012 = vsel %vm284, %v4007, %v4011
      %v4014 = vshrl.u32 %v3685, 16
      %v4016 = vrot.slane %v4014, 4
      %v4017 = vshll.u32 %v3685, 16
      %v4019 = vrot.slane %v4017, 5
      %v4020 = vor.u32 %v4016, %v4019
      %v4021 = vrot.slane %v4020, 4
      %v4023 = vshll.u32 %v3686, 16
      %v4025 = vrot.slane %v4023, 5
      %v4026 = vsel %vm284, %v4021, %v4025
      %v4027 = vshrl.u32 %v3686, 16
      %v4029 = vrot.slane %v4027, 4
      %v4030 = vor.u32 %v4029, %v4025
      %v4031 = vrot.slane %v4030, 4
      %v4033 = vshll.u32 %v3687, 16
      %v4035 = vrot.slane %v4033, 5
      %v4036 = vsel %vm284, %v4031, %v4035
      %v4038 = vshrl.u32 %v3688, 16
      %v4040 = vrot.slane %v4038, 4
      %v4041 = vshll.u32 %v3688, 16
      %v4043 = vrot.slane %v4041, 5
      %v4044 = vor.u32 %v4040, %v4043
      %v4045 = vrot.slane %v4044, 4
      %v4047 = vshll.u32 %v3689, 16
      %v4049 = vrot.slane %v4047, 5
      %v4050 = vsel %vm284, %v4045, %v4049
      %v4051 = vshrl.u32 %v3689, 16
      %v4053 = vrot.slane %v4051, 4
      %v4054 = vor.u32 %v4053, %v4049
      %v4055 = vrot.slane %v4054, 4
      %v4057 = vshll.u32 %v3690, 16
      %v4059 = vrot.slane %v4057, 5
      %v4060 = vsel %vm284, %v4055, %v4059
      %v4062 = vshrl.u32 %v3691, 16
      %v4064 = vrot.slane %v4062, 4
      %v4065 = vshll.u32 %v3691, 16
      %v4067 = vrot.slane %v4065, 5
      %v4068 = vor.u32 %v4064, %v4067
      %v4069 = vrot.slane %v4068, 4
      %v4071 = vshll.u32 %v3692, 16
      %v4073 = vrot.slane %v4071, 5
      %v4074 = vsel %vm284, %v4069, %v4073
      %v4075 = vshrl.u32 %v3692, 16
      %v4077 = vrot.slane %v4075, 4
      %v4078 = vor.u32 %v4077, %v4073
      %v4079 = vrot.slane %v4078, 4
      %v4081 = vshll.u32 %v3693, 16
      %v4083 = vrot.slane %v4081, 5
      %v4084 = vsel %vm284, %v4079, %v4083
      %v4085 = vld [vmem:[%s3] sm:$0xc]
      %v4086 = vunpack.c.l.b16 %v3714
      %v4087 = vunpack.c.l.b16 %v3724
      %v4088 = vunpack.c.l.b16 %v3738
      %v4089 = vunpack.c.l.b16 %v3748
      %v4090 = vunpack.c.l.b16 %v3762
      %v4091 = vunpack.c.l.b16 %v3772
      %v4092 = vunpack.c.l.b16 %v3786
      %v4093 = vunpack.c.l.b16 %v3796
      %v4094 = vunpack.c.l.b16 %v3810
      %v4095 = vunpack.c.l.b16 %v3820
      %v4096 = vunpack.c.l.b16 %v3834
      %v4097 = vunpack.c.l.b16 %v3844
      %v4098 = vunpack.c.l.b16 %v3858
      %v4099 = vunpack.c.l.b16 %v3868
      %v4100 = vunpack.c.l.b16 %v3882
      %v4101 = vunpack.c.l.b16 %v3892
      %v4102 = vunpack.c.l.b16 %v3906
      %v4103 = vunpack.c.l.b16 %v3916
      %v4104 = vunpack.c.l.b16 %v3930
      %v4105 = vunpack.c.l.b16 %v3940
      %v4106 = vunpack.c.l.b16 %v3954
      %v4107 = vunpack.c.l.b16 %v3964
      %v4108 = vunpack.c.l.b16 %v3978
      %v4109 = vunpack.c.l.b16 %v3988
      %v4110 = vunpack.c.l.b16 %v4002
      %v4111 = vunpack.c.l.b16 %v4012
      %v4112 = vunpack.c.l.b16 %v4026
      %v4113 = vunpack.c.l.b16 %v4036
      %v4114 = vunpack.c.l.b16 %v4050
      %v4115 = vunpack.c.l.b16 %v4060
      %v4116 = vunpack.c.l.b16 %v4074
      %v4117 = vunpack.c.l.b16 %v4084
      %v4118 = vpack.c.b16 %v4087, %v4086
      %v4119 = vpack.c.b16 %v4089, %v4088
      %v4120 = vpack.c.b16 %v4091, %v4090
      %v4121 = vpack.c.b16 %v4093, %v4092
      %v4122 = vpack.c.b16 %v4095, %v4094
      %v4123 = vpack.c.b16 %v4097, %v4096
      %v4124 = vpack.c.b16 %v4099, %v4098
      %v4125 = vpack.c.b16 %v4101, %v4100
      %v4126 = vpack.c.b16 %v4103, %v4102
      %v4127 = vpack.c.b16 %v4105, %v4104
      %v4128 = vpack.c.b16 %v4107, %v4106
      %v4129 = vpack.c.b16 %v4109, %v4108
      %v4130 = vpack.c.b16 %v4111, %v4110
      %v4131 = vpack.c.b16 %v4113, %v4112
      %v4132 = vpack.c.b16 %v4115, %v4114
      %v4133 = vpack.c.b16 %v4117, %v4116
      %v4135 = vunpack.c.l.b16 %v4085
      %v4136 = vpack.c.b16 %v4135, %v4135
      %v4137 = vrot.slane %v4136, 2
      %v4139 = vsel %vm722, %v4118, 0
      %v4142 = vsel %vm722, %v4119, 0
      %v4145 = vsel %vm722, %v4120, 0
      %v4148 = vsel %vm722, %v4121, 0
      %v4151 = vsel %vm722, %v4122, 0
      %v4154 = vsel %vm722, %v4123, 0
      %v4157 = vsel %vm722, %v4124, 0
      %v4160 = vsel %vm722, %v4125, 0
      %v4163 = vsel %vm722, %v4126, 0
      %v4166 = vsel %vm722, %v4127, 0
      %v4169 = vsel %vm722, %v4128, 0
      %v4172 = vsel %vm722, %v4129, 0
      %v4175 = vsel %vm722, %v4130, 0
      %v4178 = vsel %vm722, %v4131, 0
      %v4181 = vsel %vm722, %v4132, 0
      %v4184 = vsel %vm722, %v4133, 0
      %v4187 = vsel %vm771, %v4137, 0
      %4189 = vmatprep.subr.bf16.mxu0 0
      %4190 = vmatpush1.bf16.msra.mxu0 0
      %4191 = vmatprep.subr.bf16.mxu0 0
      %4192 = vmatpush1.bf16.msra.mxu0 0
      %4193 = vmatprep.subr.bf16.mxu0 0
      %4194 = vmatpush1.bf16.msra.mxu0 0
      %4195 = vmatprep.subr.bf16.mxu0 0
      %4196 = vmatpush1.bf16.msra.mxu0 0
      %4197 = vmatprep.subr.bf16.mxu0 0
      %4198 = vmatpush1.bf16.msra.mxu0 0
      %4199 = vmatprep.subr.bf16.mxu0 0
      %4200 = vmatpush1.bf16.msra.mxu0 0
      %4201 = vmatprep.subr.bf16.mxu0 0
      %4202 = vmatpush1.bf16.msra.mxu0 0
      %4203 = vmatprep.subr.bf16.mxu0 0
      %4204 = vmatpush1.bf16.msra.mxu0 %v4187
      %4205 = vmatprep.subr.bf16.mxu0 0
      %4206 = vmatpush2.bf16.msra.mxu0 0
      %4207 = vmatprep.subr.bf16.mxu0 0
      %4208 = vmatpush2.bf16.msra.mxu0 0
      %4209 = vmatprep.subr.bf16.mxu0 0
      %4210 = vmatpush2.bf16.msra.mxu0 0
      %4211 = vmatprep.subr.bf16.mxu0 0
      %4212 = vmatpush2.bf16.msra.mxu0 0
      %4213 = vmatprep.subr.bf16.mxu0 0
      %4214 = vmatpush2.bf16.msra.mxu0 0
      %4215 = vmatprep.subr.bf16.mxu0 0
      %4216 = vmatpush2.bf16.msra.mxu0 0
      %4217 = vmatprep.subr.bf16.mxu0 0
      %4218 = vmatpush2.bf16.msra.mxu0 0
      %4219 = vmatprep.subr.bf16.mxu0 0
      %4220 = vmatpush2.bf16.msra.mxu0 0
      %4221 = vmatprep.mubr.bf16.mxu0 0
      %4222 = vmatmul.mubr.bf16.gmra.mxu0 %v4139
      %v4223 = vpop.f32.mrf.mxu0
      %v4224 = vadd.f32 0.0, %v4223
      %v4225 = vpop.f32.mrf.mxu0
      %v4226 = vpop.f32.mrf.mxu0
      %v4227 = vadd.f32 0.0, %v4226
      %v4228 = vpop.f32.mrf.mxu0
      %4229 = vmatprep.mubr.bf16.mxu0 0
      %4230 = vmatmul.mubr.bf16.gmra.mxu0 %v4142
      %v4231 = vpop.f32.mrf.mxu0
      %v4232 = vadd.f32 0.0, %v4231
      %v4233 = vpop.f32.mrf.mxu0
      %v4234 = vpop.f32.mrf.mxu0
      %v4235 = vadd.f32 0.0, %v4234
      %v4236 = vpop.f32.mrf.mxu0
      %4237 = vmatprep.mubr.bf16.mxu0 0
      %4238 = vmatmul.mubr.bf16.gmra.mxu0 %v4145
      %v4239 = vpop.f32.mrf.mxu0
      %v4240 = vadd.f32 0.0, %v4239
      %v4241 = vpop.f32.mrf.mxu0
      %v4242 = vpop.f32.mrf.mxu0
      %v4243 = vadd.f32 0.0, %v4242
      %v4244 = vpop.f32.mrf.mxu0
      %4245 = vmatprep.mubr.bf16.mxu0 0
      %4246 = vmatmul.mubr.bf16.gmra.mxu0 %v4148
      %v4247 = vpop.f32.mrf.mxu0
      %v4248 = vadd.f32 0.0, %v4247
      %v4249 = vpop.f32.mrf.mxu0
      %v4250 = vpop.f32.mrf.mxu0
      %v4251 = vadd.f32 0.0, %v4250
      %v4252 = vpop.f32.mrf.mxu0
      %4253 = vmatprep.mubr.bf16.mxu0 0
      %4254 = vmatmul.mubr.bf16.gmra.mxu0 %v4151
      %v4255 = vpop.f32.mrf.mxu0
      %v4256 = vadd.f32 0.0, %v4255
      %v4257 = vpop.f32.mrf.mxu0
      %v4258 = vpop.f32.mrf.mxu0
      %v4259 = vadd.f32 0.0, %v4258
      %v4260 = vpop.f32.mrf.mxu0
      %4261 = vmatprep.mubr.bf16.mxu0 0
      %4262 = vmatmul.mubr.bf16.gmra.mxu0 %v4154
      %v4263 = vpop.f32.mrf.mxu0
      %v4264 = vadd.f32 0.0, %v4263
      %v4265 = vpop.f32.mrf.mxu0
      %v4266 = vpop.f32.mrf.mxu0
      %v4267 = vadd.f32 0.0, %v4266
      %v4268 = vpop.f32.mrf.mxu0
      %4269 = vmatprep.mubr.bf16.mxu0 0
      %4270 = vmatmul.mubr.bf16.gmra.mxu0 %v4157
      %v4271 = vpop.f32.mrf.mxu0
      %v4272 = vadd.f32 0.0, %v4271
      %v4273 = vpop.f32.mrf.mxu0
      %v4274 = vpop.f32.mrf.mxu0
      %v4275 = vadd.f32 0.0, %v4274
      %v4276 = vpop.f32.mrf.mxu0
      %4277 = vmatprep.mubr.bf16.mxu0 0
      %4278 = vmatmul.mubr.bf16.gmra.mxu0 %v4160
      %v4279 = vpop.f32.mrf.mxu0
      %v4280 = vadd.f32 0.0, %v4279
      %v4281 = vpop.f32.mrf.mxu0
      %v4282 = vpop.f32.mrf.mxu0
      %v4283 = vadd.f32 0.0, %v4282
      %v4284 = vpop.f32.mrf.mxu0
      %4285 = vmatprep.mubr.bf16.mxu0 0
      %4286 = vmatmul.mubr.bf16.gmra.mxu0 %v4163
      %v4287 = vpop.f32.mrf.mxu0
      %v4288 = vadd.f32 0.0, %v4287
      %v4289 = vpop.f32.mrf.mxu0
      %v4290 = vpop.f32.mrf.mxu0
      %v4291 = vadd.f32 0.0, %v4290
      %v4292 = vpop.f32.mrf.mxu0
      %4293 = vmatprep.mubr.bf16.mxu0 0
      %4294 = vmatmul.mubr.bf16.gmra.mxu0 %v4166
      %v4295 = vpop.f32.mrf.mxu0
      %v4296 = vadd.f32 0.0, %v4295
      %v4297 = vpop.f32.mrf.mxu0
      %v4298 = vpop.f32.mrf.mxu0
      %v4299 = vadd.f32 0.0, %v4298
      %v4300 = vpop.f32.mrf.mxu0
      %4301 = vmatprep.mubr.bf16.mxu0 0
      %4302 = vmatmul.mubr.bf16.gmra.mxu0 %v4169
      %v4303 = vpop.f32.mrf.mxu0
      %v4304 = vadd.f32 0.0, %v4303
      %v4305 = vpop.f32.mrf.mxu0
      %v4306 = vpop.f32.mrf.mxu0
      %v4307 = vadd.f32 0.0, %v4306
      %v4308 = vpop.f32.mrf.mxu0
      %4309 = vmatprep.mubr.bf16.mxu0 0
      %4310 = vmatmul.mubr.bf16.gmra.mxu0 %v4172
      %v4311 = vpop.f32.mrf.mxu0
      %v4312 = vadd.f32 0.0, %v4311
      %v4313 = vpop.f32.mrf.mxu0
      %v4314 = vpop.f32.mrf.mxu0
      %v4315 = vadd.f32 0.0, %v4314
      %v4316 = vpop.f32.mrf.mxu0
      %4317 = vmatprep.mubr.bf16.mxu0 0
      %4318 = vmatmul.mubr.bf16.gmra.mxu0 %v4175
      %v4319 = vpop.f32.mrf.mxu0
      %v4320 = vadd.f32 0.0, %v4319
      %v4321 = vpop.f32.mrf.mxu0
      %v4322 = vpop.f32.mrf.mxu0
      %v4323 = vadd.f32 0.0, %v4322
      %v4324 = vpop.f32.mrf.mxu0
      %4325 = vmatprep.mubr.bf16.mxu0 0
      %4326 = vmatmul.mubr.bf16.gmra.mxu0 %v4178
      %v4327 = vpop.f32.mrf.mxu0
      %v4328 = vadd.f32 0.0, %v4327
      %v4329 = vpop.f32.mrf.mxu0
      %v4330 = vpop.f32.mrf.mxu0
      %v4331 = vadd.f32 0.0, %v4330
      %v4332 = vpop.f32.mrf.mxu0
      %4333 = vmatprep.mubr.bf16.mxu0 0
      %4334 = vmatmul.mubr.bf16.gmra.mxu0 %v4181
      %v4335 = vpop.f32.mrf.mxu0
      %v4336 = vadd.f32 0.0, %v4335
      %v4337 = vpop.f32.mrf.mxu0
      %v4338 = vpop.f32.mrf.mxu0
      %v4339 = vadd.f32 0.0, %v4338
      %v4340 = vpop.f32.mrf.mxu0
      %4341 = vmatprep.mubr.bf16.mxu0 0
      %4342 = vmatmul.mubr.bf16.gmra.mxu0 %v4184
      %v4343 = vpop.f32.mrf.mxu0
      %v4344 = vadd.f32 0.0, %v4343
      %v4345 = vpop.f32.mrf.mxu0
      %v4346 = vpop.f32.mrf.mxu0
      %v4347 = vadd.f32 0.0, %v4346
      %v4348 = vpop.f32.mrf.mxu0
      %4349 = vdwg.mxu0
      %v4382 = vunpack.c.l.b16 %v3646
      %v4383 = vunpack.c.l.b16 %v3647
      %v4384 = vunpack.c.l.b16 %v3649
      %v4385 = vunpack.c.l.b16 %v3650
      %v4386 = vunpack.c.l.b16 %v3652
      %v4387 = vunpack.c.l.b16 %v3653
      %v4388 = vunpack.c.l.b16 %v3655
      %v4389 = vunpack.c.l.b16 %v3656
      %v4390 = vunpack.c.l.b16 %v3658
      %v4391 = vunpack.c.l.b16 %v3659
      %v4392 = vunpack.c.l.b16 %v3661
      %v4393 = vunpack.c.l.b16 %v3662
      %v4394 = vunpack.c.l.b16 %v3664
      %v4395 = vunpack.c.l.b16 %v3665
      %v4396 = vunpack.c.l.b16 %v3667
      %v4397 = vunpack.c.l.b16 %v3668
      %v4398 = vunpack.c.l.b16 %v3670
      %v4399 = vunpack.c.l.b16 %v3671
      %v4400 = vunpack.c.l.b16 %v3673
      %v4401 = vunpack.c.l.b16 %v3674
      %v4402 = vunpack.c.l.b16 %v3676
      %v4403 = vunpack.c.l.b16 %v3677
      %v4404 = vunpack.c.l.b16 %v3679
      %v4405 = vunpack.c.l.b16 %v3680
      %v4406 = vunpack.c.l.b16 %v3682
      %v4407 = vunpack.c.l.b16 %v3683
      %v4408 = vunpack.c.l.b16 %v3685
      %v4409 = vunpack.c.l.b16 %v3686
      %v4410 = vunpack.c.l.b16 %v3688
      %v4411 = vunpack.c.l.b16 %v3689
      %v4412 = vunpack.c.l.b16 %v3691
      %v4413 = vunpack.c.l.b16 %v3692
      %v4414 = vpack.c.b16 %v4383, %v4382
      %v4415 = vpack.c.b16 %v4385, %v4384
      %v4416 = vpack.c.b16 %v4387, %v4386
      %v4417 = vpack.c.b16 %v4389, %v4388
      %v4418 = vpack.c.b16 %v4391, %v4390
      %v4419 = vpack.c.b16 %v4393, %v4392
      %v4420 = vpack.c.b16 %v4395, %v4394
      %v4421 = vpack.c.b16 %v4397, %v4396
      %v4422 = vpack.c.b16 %v4399, %v4398
      %v4423 = vpack.c.b16 %v4401, %v4400
      %v4424 = vpack.c.b16 %v4403, %v4402
      %v4425 = vpack.c.b16 %v4405, %v4404
      %v4426 = vpack.c.b16 %v4407, %v4406
      %v4427 = vpack.c.b16 %v4409, %v4408
      %v4428 = vpack.c.b16 %v4411, %v4410
      %v4429 = vpack.c.b16 %v4413, %v4412
      %v4431 = vsel %vm722, %v4414, 0
      %v4434 = vsel %vm722, %v4415, 0
      %v4437 = vsel %vm722, %v4416, 0
      %v4440 = vsel %vm722, %v4417, 0
      %v4443 = vsel %vm722, %v4418, 0
      %v4446 = vsel %vm722, %v4419, 0
      %v4449 = vsel %vm722, %v4420, 0
      %v4452 = vsel %vm722, %v4421, 0
      %v4455 = vsel %vm722, %v4422, 0
      %v4458 = vsel %vm722, %v4423, 0
      %v4461 = vsel %vm722, %v4424, 0
      %v4464 = vsel %vm722, %v4425, 0
      %v4467 = vsel %vm722, %v4426, 0
      %v4470 = vsel %vm722, %v4427, 0
      %v4473 = vsel %vm722, %v4428, 0
      %v4476 = vsel %vm722, %v4429, 0
      %v4479 = vsel %vm771, %v3700, 0
      %4481 = vmatprep.subr.bf16.mxu0 0
      %4482 = vmatpush1.bf16.msra.mxu0 0
      %4483 = vmatprep.subr.bf16.mxu0 0
      %4484 = vmatpush1.bf16.msra.mxu0 0
      %4485 = vmatprep.subr.bf16.mxu0 0
      %4486 = vmatpush1.bf16.msra.mxu0 0
      %4487 = vmatprep.subr.bf16.mxu0 0
      %4488 = vmatpush1.bf16.msra.mxu0 0
      %4489 = vmatprep.subr.bf16.mxu0 0
      %4490 = vmatpush1.bf16.msra.mxu0 0
      %4491 = vmatprep.subr.bf16.mxu0 0
      %4492 = vmatpush1.bf16.msra.mxu0 0
      %4493 = vmatprep.subr.bf16.mxu0 0
      %4494 = vmatpush1.bf16.msra.mxu0 0
      %4495 = vmatprep.subr.bf16.mxu0 0
      %4496 = vmatpush1.bf16.msra.mxu0 %v4479
      %4497 = vmatprep.subr.bf16.mxu0 0
      %4498 = vmatpush2.bf16.msra.mxu0 0
      %4499 = vmatprep.subr.bf16.mxu0 0
      %4500 = vmatpush2.bf16.msra.mxu0 0
      %4501 = vmatprep.subr.bf16.mxu0 0
      %4502 = vmatpush2.bf16.msra.mxu0 0
      %4503 = vmatprep.subr.bf16.mxu0 0
      %4504 = vmatpush2.bf16.msra.mxu0 0
      %4505 = vmatprep.subr.bf16.mxu0 0
      %4506 = vmatpush2.bf16.msra.mxu0 0
      %4507 = vmatprep.subr.bf16.mxu0 0
      %4508 = vmatpush2.bf16.msra.mxu0 0
      %4509 = vmatprep.subr.bf16.mxu0 0
      %4510 = vmatpush2.bf16.msra.mxu0 0
      %4511 = vmatprep.subr.bf16.mxu0 0
      %4512 = vmatpush2.bf16.msra.mxu0 0
      %4513 = vmatprep.mubr.bf16.mxu0 0
      %4514 = vmatmul.mubr.bf16.gmra.mxu0 %v4431
      %v4515 = vpop.f32.mrf.mxu0
      %v4516 = vadd.f32 %v4224, %v4515
      %v4517 = vpop.f32.mrf.mxu0
      %v4518 = vpop.f32.mrf.mxu0
      %v4519 = vadd.f32 %v4227, %v4518
      %v4520 = vpop.f32.mrf.mxu0
      %4521 = vmatprep.mubr.bf16.mxu0 0
      %4522 = vmatmul.mubr.bf16.gmra.mxu0 %v4434
      %v4523 = vpop.f32.mrf.mxu0
      %v4524 = vadd.f32 %v4232, %v4523
      %v4525 = vpop.f32.mrf.mxu0
      %v4526 = vpop.f32.mrf.mxu0
      %v4527 = vadd.f32 %v4235, %v4526
      %v4528 = vpop.f32.mrf.mxu0
      %4529 = vmatprep.mubr.bf16.mxu0 0
      %4530 = vmatmul.mubr.bf16.gmra.mxu0 %v4437
      %v4531 = vpop.f32.mrf.mxu0
      %v4532 = vadd.f32 %v4240, %v4531
      %v4533 = vpop.f32.mrf.mxu0
      %v4534 = vpop.f32.mrf.mxu0
      %v4535 = vadd.f32 %v4243, %v4534
      %v4536 = vpop.f32.mrf.mxu0
      %4537 = vmatprep.mubr.bf16.mxu0 0
      %4538 = vmatmul.mubr.bf16.gmra.mxu0 %v4440
      %v4539 = vpop.f32.mrf.mxu0
      %v4540 = vadd.f32 %v4248, %v4539
      %v4541 = vpop.f32.mrf.mxu0
      %v4542 = vpop.f32.mrf.mxu0
      %v4543 = vadd.f32 %v4251, %v4542
      %v4544 = vpop.f32.mrf.mxu0
      %4545 = vmatprep.mubr.bf16.mxu0 0
      %4546 = vmatmul.mubr.bf16.gmra.mxu0 %v4443
      %v4547 = vpop.f32.mrf.mxu0
      %v4548 = vadd.f32 %v4256, %v4547
      %v4549 = vpop.f32.mrf.mxu0
      %v4550 = vpop.f32.mrf.mxu0
      %v4551 = vadd.f32 %v4259, %v4550
      %v4552 = vpop.f32.mrf.mxu0
      %4553 = vmatprep.mubr.bf16.mxu0 0
      %4554 = vmatmul.mubr.bf16.gmra.mxu0 %v4446
      %v4555 = vpop.f32.mrf.mxu0
      %v4556 = vadd.f32 %v4264, %v4555
      %v4557 = vpop.f32.mrf.mxu0
      %v4558 = vpop.f32.mrf.mxu0
      %v4559 = vadd.f32 %v4267, %v4558
      %v4560 = vpop.f32.mrf.mxu0
      %4561 = vmatprep.mubr.bf16.mxu0 0
      %4562 = vmatmul.mubr.bf16.gmra.mxu0 %v4449
      %v4563 = vpop.f32.mrf.mxu0
      %v4564 = vadd.f32 %v4272, %v4563
      %v4565 = vpop.f32.mrf.mxu0
      %v4566 = vpop.f32.mrf.mxu0
      %v4567 = vadd.f32 %v4275, %v4566
      %v4568 = vpop.f32.mrf.mxu0
      %4569 = vmatprep.mubr.bf16.mxu0 0
      %4570 = vmatmul.mubr.bf16.gmra.mxu0 %v4452
      %v4571 = vpop.f32.mrf.mxu0
      %v4572 = vadd.f32 %v4280, %v4571
      %v4573 = vpop.f32.mrf.mxu0
      %v4574 = vpop.f32.mrf.mxu0
      %v4575 = vadd.f32 %v4283, %v4574
      %v4576 = vpop.f32.mrf.mxu0
      %4577 = vmatprep.mubr.bf16.mxu0 0
      %4578 = vmatmul.mubr.bf16.gmra.mxu0 %v4455
      %v4579 = vpop.f32.mrf.mxu0
      %v4580 = vadd.f32 %v4288, %v4579
      %v4581 = vpop.f32.mrf.mxu0
      %v4582 = vpop.f32.mrf.mxu0
      %v4583 = vadd.f32 %v4291, %v4582
      %v4584 = vpop.f32.mrf.mxu0
      %4585 = vmatprep.mubr.bf16.mxu0 0
      %4586 = vmatmul.mubr.bf16.gmra.mxu0 %v4458
      %v4587 = vpop.f32.mrf.mxu0
      %v4588 = vadd.f32 %v4296, %v4587
      %v4589 = vpop.f32.mrf.mxu0
      %v4590 = vpop.f32.mrf.mxu0
      %v4591 = vadd.f32 %v4299, %v4590
      %v4592 = vpop.f32.mrf.mxu0
      %4593 = vmatprep.mubr.bf16.mxu0 0
      %4594 = vmatmul.mubr.bf16.gmra.mxu0 %v4461
      %v4595 = vpop.f32.mrf.mxu0
      %v4596 = vadd.f32 %v4304, %v4595
      %v4597 = vpop.f32.mrf.mxu0
      %v4598 = vpop.f32.mrf.mxu0
      %v4599 = vadd.f32 %v4307, %v4598
      %v4600 = vpop.f32.mrf.mxu0
      %4601 = vmatprep.mubr.bf16.mxu0 0
      %4602 = vmatmul.mubr.bf16.gmra.mxu0 %v4464
      %v4603 = vpop.f32.mrf.mxu0
      %v4604 = vadd.f32 %v4312, %v4603
      %v4605 = vpop.f32.mrf.mxu0
      %v4606 = vpop.f32.mrf.mxu0
      %v4607 = vadd.f32 %v4315, %v4606
      %v4608 = vpop.f32.mrf.mxu0
      %4609 = vmatprep.mubr.bf16.mxu0 0
      %4610 = vmatmul.mubr.bf16.gmra.mxu0 %v4467
      %v4611 = vpop.f32.mrf.mxu0
      %v4612 = vadd.f32 %v4320, %v4611
      %v4613 = vpop.f32.mrf.mxu0
      %v4614 = vpop.f32.mrf.mxu0
      %v4615 = vadd.f32 %v4323, %v4614
      %v4616 = vpop.f32.mrf.mxu0
      %4617 = vmatprep.mubr.bf16.mxu0 0
      %4618 = vmatmul.mubr.bf16.gmra.mxu0 %v4470
      %v4619 = vpop.f32.mrf.mxu0
      %v4620 = vadd.f32 %v4328, %v4619
      %v4621 = vpop.f32.mrf.mxu0
      %v4622 = vpop.f32.mrf.mxu0
      %v4623 = vadd.f32 %v4331, %v4622
      %v4624 = vpop.f32.mrf.mxu0
      %4625 = vmatprep.mubr.bf16.mxu0 0
      %4626 = vmatmul.mubr.bf16.gmra.mxu0 %v4473
      %v4627 = vpop.f32.mrf.mxu0
      %v4628 = vadd.f32 %v4336, %v4627
      %v4629 = vpop.f32.mrf.mxu0
      %v4630 = vpop.f32.mrf.mxu0
      %v4631 = vadd.f32 %v4339, %v4630
      %v4632 = vpop.f32.mrf.mxu0
      %4633 = vmatprep.mubr.bf16.mxu0 0
      %4634 = vmatmul.mubr.bf16.gmra.mxu0 %v4476
      %v4635 = vpop.f32.mrf.mxu0
      %v4636 = vadd.f32 %v4344, %v4635
      %v4637 = vpop.f32.mrf.mxu0
      %v4638 = vpop.f32.mrf.mxu0
      %v4639 = vadd.f32 %v4347, %v4638
      %v4640 = vpop.f32.mrf.mxu0
      %4641 = vdwg.mxu0
      %v4658 = vrot.slane %v3646, 5
      %v4659 = vrot.slane %v4658, 4
      %v4660 = vrot.slane %v3647, 5
      %v4661 = vsel %vm1246, %v4659, %v4660
      %v4662 = vrot.slane %v4660, 4
      %v4663 = vrot.slane %v3648, 5
      %v4664 = vsel %vm1246, %v4662, %v4663
      %v4665 = vrot.slane %v3649, 5
      %v4666 = vrot.slane %v4665, 4
      %v4667 = vrot.slane %v3650, 5
      %v4668 = vsel %vm1246, %v4666, %v4667
      %v4669 = vrot.slane %v4667, 4
      %v4670 = vrot.slane %v3651, 5
      %v4671 = vsel %vm1246, %v4669, %v4670
      %v4672 = vrot.slane %v3652, 5
      %v4673 = vrot.slane %v4672, 4
      %v4674 = vrot.slane %v3653, 5
      %v4675 = vsel %vm1246, %v4673, %v4674
      %v4676 = vrot.slane %v4674, 4
      %v4677 = vrot.slane %v3654, 5
      %v4678 = vsel %vm1246, %v4676, %v4677
      %v4679 = vrot.slane %v3655, 5
      %v4680 = vrot.slane %v4679, 4
      %v4681 = vrot.slane %v3656, 5
      %v4682 = vsel %vm1246, %v4680, %v4681
      %v4683 = vrot.slane %v4681, 4
      %v4684 = vrot.slane %v3657, 5
      %v4685 = vsel %vm1246, %v4683, %v4684
      %v4686 = vrot.slane %v3658, 5
      %v4687 = vrot.slane %v4686, 4
      %v4688 = vrot.slane %v3659, 5
      %v4689 = vsel %vm1246, %v4687, %v4688
      %v4690 = vrot.slane %v4688, 4
      %v4691 = vrot.slane %v3660, 5
      %v4692 = vsel %vm1246, %v4690, %v4691
      %v4693 = vrot.slane %v3661, 5
      %v4694 = vrot.slane %v4693, 4
      %v4695 = vrot.slane %v3662, 5
      %v4696 = vsel %vm1246, %v4694, %v4695
      %v4697 = vrot.slane %v4695, 4
      %v4698 = vrot.slane %v3663, 5
      %v4699 = vsel %vm1246, %v4697, %v4698
      %v4700 = vrot.slane %v3664, 5
      %v4701 = vrot.slane %v4700, 4
      %v4702 = vrot.slane %v3665, 5
      %v4703 = vsel %vm1246, %v4701, %v4702
      %v4704 = vrot.slane %v4702, 4
      %v4705 = vrot.slane %v3666, 5
      %v4706 = vsel %vm1246, %v4704, %v4705
      %v4707 = vrot.slane %v3667, 5
      %v4708 = vrot.slane %v4707, 4
      %v4709 = vrot.slane %v3668, 5
      %v4710 = vsel %vm1246, %v4708, %v4709
      %v4711 = vrot.slane %v4709, 4
      %v4712 = vrot.slane %v3669, 5
      %v4713 = vsel %vm1246, %v4711, %v4712
      %v4714 = vrot.slane %v3670, 5
      %v4715 = vrot.slane %v4714, 4
      %v4716 = vrot.slane %v3671, 5
      %v4717 = vsel %vm1246, %v4715, %v4716
      %v4718 = vrot.slane %v4716, 4
      %v4719 = vrot.slane %v3672, 5
      %v4720 = vsel %vm1246, %v4718, %v4719
      %v4721 = vrot.slane %v3673, 5
      %v4722 = vrot.slane %v4721, 4
      %v4723 = vrot.slane %v3674, 5
      %v4724 = vsel %vm1246, %v4722, %v4723
      %v4725 = vrot.slane %v4723, 4
      %v4726 = vrot.slane %v3675, 5
      %v4727 = vsel %vm1246, %v4725, %v4726
      %v4728 = vrot.slane %v3676, 5
      %v4729 = vrot.slane %v4728, 4
      %v4730 = vrot.slane %v3677, 5
      %v4731 = vsel %vm1246, %v4729, %v4730
      %v4732 = vrot.slane %v4730, 4
      %v4733 = vrot.slane %v3678, 5
      %v4734 = vsel %vm1246, %v4732, %v4733
      %v4735 = vrot.slane %v3679, 5
      %v4736 = vrot.slane %v4735, 4
      %v4737 = vrot.slane %v3680, 5
      %v4738 = vsel %vm1246, %v4736, %v4737
      %v4739 = vrot.slane %v4737, 4
      %v4740 = vrot.slane %v3681, 5
      %v4741 = vsel %vm1246, %v4739, %v4740
      %v4742 = vrot.slane %v3682, 5
      %v4743 = vrot.slane %v4742, 4
      %v4744 = vrot.slane %v3683, 5
      %v4745 = vsel %vm1246, %v4743, %v4744
      %v4746 = vrot.slane %v4744, 4
      %v4747 = vrot.slane %v3684, 5
      %v4748 = vsel %vm1246, %v4746, %v4747
      %v4749 = vrot.slane %v3685, 5
      %v4750 = vrot.slane %v4749, 4
      %v4751 = vrot.slane %v3686, 5
      %v4752 = vsel %vm1246, %v4750, %v4751
      %v4753 = vrot.slane %v4751, 4
      %v4754 = vrot.slane %v3687, 5
      %v4755 = vsel %vm1246, %v4753, %v4754
      %v4756 = vrot.slane %v3688, 5
      %v4757 = vrot.slane %v4756, 4
      %v4758 = vrot.slane %v3689, 5
      %v4759 = vsel %vm1246, %v4757, %v4758
      %v4760 = vrot.slane %v4758, 4
      %v4761 = vrot.slane %v3690, 5
      %v4762 = vsel %vm1246, %v4760, %v4761
      %v4763 = vrot.slane %v3691, 5
      %v4764 = vrot.slane %v4763, 4
      %v4765 = vrot.slane %v3692, 5
      %v4766 = vsel %vm1246, %v4764, %v4765
      %v4767 = vrot.slane %v4765, 4
      %v4768 = vrot.slane %v3693, 5
      %v4769 = vsel %vm1246, %v4767, %v4768
      %v4770 = vld [vmem:[%s3 + $0x4] sm:$0x3]
      %v4771 = vunpack.c.l.b16 %v4661
      %v4772 = vunpack.c.l.b16 %v4664
      %v4773 = vunpack.c.l.b16 %v4668
      %v4774 = vunpack.c.l.b16 %v4671
      %v4775 = vunpack.c.l.b16 %v4675
      %v4776 = vunpack.c.l.b16 %v4678
      %v4777 = vunpack.c.l.b16 %v4682
      %v4778 = vunpack.c.l.b16 %v4685
      %v4779 = vunpack.c.l.b16 %v4689
      %v4780 = vunpack.c.l.b16 %v4692
      %v4781 = vunpack.c.l.b16 %v4696
      %v4782 = vunpack.c.l.b16 %v4699
      %v4783 = vunpack.c.l.b16 %v4703
      %v4784 = vunpack.c.l.b16 %v4706
      %v4785 = vunpack.c.l.b16 %v4710
      %v4786 = vunpack.c.l.b16 %v4713
      %v4787 = vunpack.c.l.b16 %v4717
      %v4788 = vunpack.c.l.b16 %v4720
      %v4789 = vunpack.c.l.b16 %v4724
      %v4790 = vunpack.c.l.b16 %v4727
      %v4791 = vunpack.c.l.b16 %v4731
      %v4792 = vunpack.c.l.b16 %v4734
      %v4793 = vunpack.c.l.b16 %v4738
      %v4794 = vunpack.c.l.b16 %v4741
      %v4795 = vunpack.c.l.b16 %v4745
      %v4796 = vunpack.c.l.b16 %v4748
      %v4797 = vunpack.c.l.b16 %v4752
      %v4798 = vunpack.c.l.b16 %v4755
      %v4799 = vunpack.c.l.b16 %v4759
      %v4800 = vunpack.c.l.b16 %v4762
      %v4801 = vunpack.c.l.b16 %v4766
      %v4802 = vunpack.c.l.b16 %v4769
      %v4803 = vpack.c.b16 %v4772, %v4771
      %v4804 = vpack.c.b16 %v4774, %v4773
      %v4805 = vpack.c.b16 %v4776, %v4775
      %v4806 = vpack.c.b16 %v4778, %v4777
      %v4807 = vpack.c.b16 %v4780, %v4779
      %v4808 = vpack.c.b16 %v4782, %v4781
      %v4809 = vpack.c.b16 %v4784, %v4783
      %v4810 = vpack.c.b16 %v4786, %v4785
      %v4811 = vpack.c.b16 %v4788, %v4787
      %v4812 = vpack.c.b16 %v4790, %v4789
      %v4813 = vpack.c.b16 %v4792, %v4791
      %v4814 = vpack.c.b16 %v4794, %v4793
      %v4815 = vpack.c.b16 %v4796, %v4795
      %v4816 = vpack.c.b16 %v4798, %v4797
      %v4817 = vpack.c.b16 %v4800, %v4799
      %v4818 = vpack.c.b16 %v4802, %v4801
      %v4820 = vsel %vm722, %v4803, 0
      %v4823 = vsel %vm722, %v4804, 0
      %v4826 = vsel %vm722, %v4805, 0
      %v4829 = vsel %vm722, %v4806, 0
      %v4832 = vsel %vm722, %v4807, 0
      %v4835 = vsel %vm722, %v4808, 0
      %v4838 = vsel %vm722, %v4809, 0
      %v4841 = vsel %vm722, %v4810, 0
      %v4844 = vsel %vm722, %v4811, 0
      %v4847 = vsel %vm722, %v4812, 0
      %v4850 = vsel %vm722, %v4813, 0
      %v4853 = vsel %vm722, %v4814, 0
      %v4856 = vsel %vm722, %v4815, 0
      %v4859 = vsel %vm722, %v4816, 0
      %v4862 = vsel %vm722, %v4817, 0
      %v4865 = vsel %vm722, %v4818, 0
      %v4868 = vsel %vm771, %v4770, 0
      %4870 = vmatprep.subr.bf16.mxu0 0
      %4871 = vmatpush1.bf16.msra.mxu0 0
      %4872 = vmatprep.subr.bf16.mxu0 0
      %4873 = vmatpush1.bf16.msra.mxu0 0
      %4874 = vmatprep.subr.bf16.mxu0 0
      %4875 = vmatpush1.bf16.msra.mxu0 0
      %4876 = vmatprep.subr.bf16.mxu0 0
      %4877 = vmatpush1.bf16.msra.mxu0 0
      %4878 = vmatprep.subr.bf16.mxu0 0
      %4879 = vmatpush1.bf16.msra.mxu0 0
      %4880 = vmatprep.subr.bf16.mxu0 0
      %4881 = vmatpush1.bf16.msra.mxu0 0
      %4882 = vmatprep.subr.bf16.mxu0 0
      %4883 = vmatpush1.bf16.msra.mxu0 0
      %4884 = vmatprep.subr.bf16.mxu0 0
      %4885 = vmatpush1.bf16.msra.mxu0 %v4868
      %4886 = vmatprep.subr.bf16.mxu0 0
      %4887 = vmatpush2.bf16.msra.mxu0 0
      %4888 = vmatprep.subr.bf16.mxu0 0
      %4889 = vmatpush2.bf16.msra.mxu0 0
      %4890 = vmatprep.subr.bf16.mxu0 0
      %4891 = vmatpush2.bf16.msra.mxu0 0
      %4892 = vmatprep.subr.bf16.mxu0 0
      %4893 = vmatpush2.bf16.msra.mxu0 0
      %4894 = vmatprep.subr.bf16.mxu0 0
      %4895 = vmatpush2.bf16.msra.mxu0 0
      %4896 = vmatprep.subr.bf16.mxu0 0
      %4897 = vmatpush2.bf16.msra.mxu0 0
      %4898 = vmatprep.subr.bf16.mxu0 0
      %4899 = vmatpush2.bf16.msra.mxu0 0
      %4900 = vmatprep.subr.bf16.mxu0 0
      %4901 = vmatpush2.bf16.msra.mxu0 0
      %4902 = vmatprep.mubr.bf16.mxu0 0
      %4903 = vmatmul.mubr.bf16.gmra.mxu0 %v4820
      %v4904 = vpop.f32.mrf.mxu0
      %v4905 = vadd.f32 0.0, %v4904
      %v4906 = vpop.f32.mrf.mxu0
      %v4907 = vpop.f32.mrf.mxu0
      %v4908 = vadd.f32 0.0, %v4907
      %v4909 = vpop.f32.mrf.mxu0
      %4910 = vmatprep.mubr.bf16.mxu0 0
      %4911 = vmatmul.mubr.bf16.gmra.mxu0 %v4823
      %v4912 = vpop.f32.mrf.mxu0
      %v4913 = vadd.f32 0.0, %v4912
      %v4914 = vpop.f32.mrf.mxu0
      %v4915 = vpop.f32.mrf.mxu0
      %v4916 = vadd.f32 0.0, %v4915
      %v4917 = vpop.f32.mrf.mxu0
      %4918 = vmatprep.mubr.bf16.mxu0 0
      %4919 = vmatmul.mubr.bf16.gmra.mxu0 %v4826
      %v4920 = vpop.f32.mrf.mxu0
      %v4921 = vadd.f32 0.0, %v4920
      %v4922 = vpop.f32.mrf.mxu0
      %v4923 = vpop.f32.mrf.mxu0
      %v4924 = vadd.f32 0.0, %v4923
      %v4925 = vpop.f32.mrf.mxu0
      %4926 = vmatprep.mubr.bf16.mxu0 0
      %4927 = vmatmul.mubr.bf16.gmra.mxu0 %v4829
      %v4928 = vpop.f32.mrf.mxu0
      %v4929 = vadd.f32 0.0, %v4928
      %v4930 = vpop.f32.mrf.mxu0
      %v4931 = vpop.f32.mrf.mxu0
      %v4932 = vadd.f32 0.0, %v4931
      %v4933 = vpop.f32.mrf.mxu0
      %4934 = vmatprep.mubr.bf16.mxu0 0
      %4935 = vmatmul.mubr.bf16.gmra.mxu0 %v4832
      %v4936 = vpop.f32.mrf.mxu0
      %v4937 = vadd.f32 0.0, %v4936
      %v4938 = vpop.f32.mrf.mxu0
      %v4939 = vpop.f32.mrf.mxu0
      %v4940 = vadd.f32 0.0, %v4939
      %v4941 = vpop.f32.mrf.mxu0
      %4942 = vmatprep.mubr.bf16.mxu0 0
      %4943 = vmatmul.mubr.bf16.gmra.mxu0 %v4835
      %v4944 = vpop.f32.mrf.mxu0
      %v4945 = vadd.f32 0.0, %v4944
      %v4946 = vpop.f32.mrf.mxu0
      %v4947 = vpop.f32.mrf.mxu0
      %v4948 = vadd.f32 0.0, %v4947
      %v4949 = vpop.f32.mrf.mxu0
      %4950 = vmatprep.mubr.bf16.mxu0 0
      %4951 = vmatmul.mubr.bf16.gmra.mxu0 %v4838
      %v4952 = vpop.f32.mrf.mxu0
      %v4953 = vadd.f32 0.0, %v4952
      %v4954 = vpop.f32.mrf.mxu0
      %v4955 = vpop.f32.mrf.mxu0
      %v4956 = vadd.f32 0.0, %v4955
      %v4957 = vpop.f32.mrf.mxu0
      %4958 = vmatprep.mubr.bf16.mxu0 0
      %4959 = vmatmul.mubr.bf16.gmra.mxu0 %v4841
      %v4960 = vpop.f32.mrf.mxu0
      %v4961 = vadd.f32 0.0, %v4960
      %v4962 = vpop.f32.mrf.mxu0
      %v4963 = vpop.f32.mrf.mxu0
      %v4964 = vadd.f32 0.0, %v4963
      %v4965 = vpop.f32.mrf.mxu0
      %4966 = vmatprep.mubr.bf16.mxu0 0
      %4967 = vmatmul.mubr.bf16.gmra.mxu0 %v4844
      %v4968 = vpop.f32.mrf.mxu0
      %v4969 = vadd.f32 0.0, %v4968
      %v4970 = vpop.f32.mrf.mxu0
      %v4971 = vpop.f32.mrf.mxu0
      %v4972 = vadd.f32 0.0, %v4971
      %v4973 = vpop.f32.mrf.mxu0
      %4974 = vmatprep.mubr.bf16.mxu0 0
      %4975 = vmatmul.mubr.bf16.gmra.mxu0 %v4847
      %v4976 = vpop.f32.mrf.mxu0
      %v4977 = vadd.f32 0.0, %v4976
      %v4978 = vpop.f32.mrf.mxu0
      %v4979 = vpop.f32.mrf.mxu0
      %v4980 = vadd.f32 0.0, %v4979
      %v4981 = vpop.f32.mrf.mxu0
      %4982 = vmatprep.mubr.bf16.mxu0 0
      %4983 = vmatmul.mubr.bf16.gmra.mxu0 %v4850
      %v4984 = vpop.f32.mrf.mxu0
      %v4985 = vadd.f32 0.0, %v4984
      %v4986 = vpop.f32.mrf.mxu0
      %v4987 = vpop.f32.mrf.mxu0
      %v4988 = vadd.f32 0.0, %v4987
      %v4989 = vpop.f32.mrf.mxu0
      %4990 = vmatprep.mubr.bf16.mxu0 0
      %4991 = vmatmul.mubr.bf16.gmra.mxu0 %v4853
      %v4992 = vpop.f32.mrf.mxu0
      %v4993 = vadd.f32 0.0, %v4992
      %v4994 = vpop.f32.mrf.mxu0
      %v4995 = vpop.f32.mrf.mxu0
      %v4996 = vadd.f32 0.0, %v4995
      %v4997 = vpop.f32.mrf.mxu0
      %4998 = vmatprep.mubr.bf16.mxu0 0
      %4999 = vmatmul.mubr.bf16.gmra.mxu0 %v4856
      %v5000 = vpop.f32.mrf.mxu0
      %v5001 = vadd.f32 0.0, %v5000
      %v5002 = vpop.f32.mrf.mxu0
      %v5003 = vpop.f32.mrf.mxu0
      %v5004 = vadd.f32 0.0, %v5003
      %v5005 = vpop.f32.mrf.mxu0
      %5006 = vmatprep.mubr.bf16.mxu0 0
      %5007 = vmatmul.mubr.bf16.gmra.mxu0 %v4859
      %v5008 = vpop.f32.mrf.mxu0
      %v5009 = vadd.f32 0.0, %v5008
      %v5010 = vpop.f32.mrf.mxu0
      %v5011 = vpop.f32.mrf.mxu0
      %v5012 = vadd.f32 0.0, %v5011
      %v5013 = vpop.f32.mrf.mxu0
      %5014 = vmatprep.mubr.bf16.mxu0 0
      %5015 = vmatmul.mubr.bf16.gmra.mxu0 %v4862
      %v5016 = vpop.f32.mrf.mxu0
      %v5017 = vadd.f32 0.0, %v5016
      %v5018 = vpop.f32.mrf.mxu0
      %v5019 = vpop.f32.mrf.mxu0
      %v5020 = vadd.f32 0.0, %v5019
      %v5021 = vpop.f32.mrf.mxu0
      %5022 = vmatprep.mubr.bf16.mxu0 0
      %5023 = vmatmul.mubr.bf16.gmra.mxu0 %v4865
      %v5024 = vpop.f32.mrf.mxu0
      %v5025 = vadd.f32 0.0, %v5024
      %v5026 = vpop.f32.mrf.mxu0
      %v5027 = vpop.f32.mrf.mxu0
      %v5028 = vadd.f32 0.0, %v5027
      %v5029 = vpop.f32.mrf.mxu0
      %5030 = vdwg.mxu0
      %v5031 = vadd.f32 %v4516, %v4905
      %v5032 = vadd.f32 %v4519, %v4908
      %v5033 = vadd.f32 %v4524, %v4913
      %v5034 = vadd.f32 %v4527, %v4916
      %v5035 = vadd.f32 %v4532, %v4921
      %v5036 = vadd.f32 %v4535, %v4924
      %v5037 = vadd.f32 %v4540, %v4929
      %v5038 = vadd.f32 %v4543, %v4932
      %v5039 = vadd.f32 %v4548, %v4937
      %v5040 = vadd.f32 %v4551, %v4940
      %v5041 = vadd.f32 %v4556, %v4945
      %v5042 = vadd.f32 %v4559, %v4948
      %v5043 = vadd.f32 %v4564, %v4953
      %v5044 = vadd.f32 %v4567, %v4956
      %v5045 = vadd.f32 %v4572, %v4961
      %v5046 = vadd.f32 %v4575, %v4964
      %v5047 = vadd.f32 %v4580, %v4969
      %v5048 = vadd.f32 %v4583, %v4972
      %v5049 = vadd.f32 %v4588, %v4977
      %v5050 = vadd.f32 %v4591, %v4980
      %v5051 = vadd.f32 %v4596, %v4985
      %v5052 = vadd.f32 %v4599, %v4988
      %v5053 = vadd.f32 %v4604, %v4993
      %v5054 = vadd.f32 %v4607, %v4996
      %v5055 = vadd.f32 %v4612, %v5001
      %v5056 = vadd.f32 %v4615, %v5004
      %v5057 = vadd.f32 %v4620, %v5009
      %v5058 = vadd.f32 %v4623, %v5012
      %v5059 = vadd.f32 %v4628, %v5017
      %v5060 = vadd.f32 %v4631, %v5020
      %v5061 = vadd.f32 %v4636, %v5025
      %v5062 = vadd.f32 %v4639, %v5028
      %v5063 = vld [vmem:[%s3 + $0x4] sm:$0xc]
      %v5066 = vunpack.c.l.b16 %v3694
      %v5067 = vunpack.c.l.b16 %v3695
      %v5068 = vpack.c.b16 %v5067, %v5066
      %v5070 = vunpack.c.l.b16 %v5063
      %v5071 = vpack.c.b16 %v5070, %v5070
      %v5072 = vrot.slane %v5071, 2
      %v5074 = vsel %vm722, %v5068, 0
      %v5077 = vsel %vm771, %v5072, 0
      %5079 = vmatprep.subr.bf16.mxu0 0
      %5080 = vmatpush1.bf16.msra.mxu0 0
      %5081 = vmatprep.subr.bf16.mxu0 0
      %5082 = vmatpush1.bf16.msra.mxu0 0
      %5083 = vmatprep.subr.bf16.mxu0 0
      %5084 = vmatpush1.bf16.msra.mxu0 0
      %5085 = vmatprep.subr.bf16.mxu0 0
      %5086 = vmatpush1.bf16.msra.mxu0 0
      %5087 = vmatprep.subr.bf16.mxu0 0
      %5088 = vmatpush1.bf16.msra.mxu0 0
      %5089 = vmatprep.subr.bf16.mxu0 0
      %5090 = vmatpush1.bf16.msra.mxu0 0
      %5091 = vmatprep.subr.bf16.mxu0 0
      %5092 = vmatpush1.bf16.msra.mxu0 0
      %5093 = vmatprep.subr.bf16.mxu0 0
      %5094 = vmatpush1.bf16.msra.mxu0 %v5077
      %5095 = vmatprep.subr.bf16.mxu0 0
      %5096 = vmatpush2.bf16.msra.mxu0 0
      %5097 = vmatprep.subr.bf16.mxu0 0
      %5098 = vmatpush2.bf16.msra.mxu0 0
      %5099 = vmatprep.subr.bf16.mxu0 0
      %5100 = vmatpush2.bf16.msra.mxu0 0
      %5101 = vmatprep.subr.bf16.mxu0 0
      %5102 = vmatpush2.bf16.msra.mxu0 0
      %5103 = vmatprep.subr.bf16.mxu0 0
      %5104 = vmatpush2.bf16.msra.mxu0 0
      %5105 = vmatprep.subr.bf16.mxu0 0
      %5106 = vmatpush2.bf16.msra.mxu0 0
      %5107 = vmatprep.subr.bf16.mxu0 0
      %5108 = vmatpush2.bf16.msra.mxu0 0
      %5109 = vmatprep.subr.bf16.mxu0 0
      %5110 = vmatpush2.bf16.msra.mxu0 0
      %5111 = vmatprep.mubr.bf16.mxu0 0
      %5112 = vmatmul.mubr.bf16.gmra.mxu0 %v4434
      %v5113 = vpop.f32.mrf.mxu0
      %v5114 = vadd.f32 0.0, %v5113
      %v5115 = vpop.f32.mrf.mxu0
      %v5116 = vpop.f32.mrf.mxu0
      %v5117 = vadd.f32 0.0, %v5116
      %v5118 = vpop.f32.mrf.mxu0
      %5119 = vmatprep.mubr.bf16.mxu0 0
      %5120 = vmatmul.mubr.bf16.gmra.mxu0 %v4437
      %v5121 = vpop.f32.mrf.mxu0
      %v5122 = vadd.f32 0.0, %v5121
      %v5123 = vpop.f32.mrf.mxu0
      %v5124 = vpop.f32.mrf.mxu0
      %v5125 = vadd.f32 0.0, %v5124
      %v5126 = vpop.f32.mrf.mxu0
      %5127 = vmatprep.mubr.bf16.mxu0 0
      %5128 = vmatmul.mubr.bf16.gmra.mxu0 %v4440
      %v5129 = vpop.f32.mrf.mxu0
      %v5130 = vadd.f32 0.0, %v5129
      %v5131 = vpop.f32.mrf.mxu0
      %v5132 = vpop.f32.mrf.mxu0
      %v5133 = vadd.f32 0.0, %v5132
      %v5134 = vpop.f32.mrf.mxu0
      %5135 = vmatprep.mubr.bf16.mxu0 0
      %5136 = vmatmul.mubr.bf16.gmra.mxu0 %v4443
      %v5137 = vpop.f32.mrf.mxu0
      %v5138 = vadd.f32 0.0, %v5137
      %v5139 = vpop.f32.mrf.mxu0
      %v5140 = vpop.f32.mrf.mxu0
      %v5141 = vadd.f32 0.0, %v5140
      %v5142 = vpop.f32.mrf.mxu0
      %5143 = vmatprep.mubr.bf16.mxu0 0
      %5144 = vmatmul.mubr.bf16.gmra.mxu0 %v4446
      %v5145 = vpop.f32.mrf.mxu0
      %v5146 = vadd.f32 0.0, %v5145
      %v5147 = vpop.f32.mrf.mxu0
      %v5148 = vpop.f32.mrf.mxu0
      %v5149 = vadd.f32 0.0, %v5148
      %v5150 = vpop.f32.mrf.mxu0
      %5151 = vmatprep.mubr.bf16.mxu0 0
      %5152 = vmatmul.mubr.bf16.gmra.mxu0 %v4449
      %v5153 = vpop.f32.mrf.mxu0
      %v5154 = vadd.f32 0.0, %v5153
      %v5155 = vpop.f32.mrf.mxu0
      %v5156 = vpop.f32.mrf.mxu0
      %v5157 = vadd.f32 0.0, %v5156
      %v5158 = vpop.f32.mrf.mxu0
      %5159 = vmatprep.mubr.bf16.mxu0 0
      %5160 = vmatmul.mubr.bf16.gmra.mxu0 %v4452
      %v5161 = vpop.f32.mrf.mxu0
      %v5162 = vadd.f32 0.0, %v5161
      %v5163 = vpop.f32.mrf.mxu0
      %v5164 = vpop.f32.mrf.mxu0
      %v5165 = vadd.f32 0.0, %v5164
      %v5166 = vpop.f32.mrf.mxu0
      %5167 = vmatprep.mubr.bf16.mxu0 0
      %5168 = vmatmul.mubr.bf16.gmra.mxu0 %v4455
      %v5169 = vpop.f32.mrf.mxu0
      %v5170 = vadd.f32 0.0, %v5169
      %v5171 = vpop.f32.mrf.mxu0
      %v5172 = vpop.f32.mrf.mxu0
      %v5173 = vadd.f32 0.0, %v5172
      %v5174 = vpop.f32.mrf.mxu0
      %5175 = vmatprep.mubr.bf16.mxu0 0
      %5176 = vmatmul.mubr.bf16.gmra.mxu0 %v4458
      %v5177 = vpop.f32.mrf.mxu0
      %v5178 = vadd.f32 0.0, %v5177
      %v5179 = vpop.f32.mrf.mxu0
      %v5180 = vpop.f32.mrf.mxu0
      %v5181 = vadd.f32 0.0, %v5180
      %v5182 = vpop.f32.mrf.mxu0
      %5183 = vmatprep.mubr.bf16.mxu0 0
      %5184 = vmatmul.mubr.bf16.gmra.mxu0 %v4461
      %v5185 = vpop.f32.mrf.mxu0
      %v5186 = vadd.f32 0.0, %v5185
      %v5187 = vpop.f32.mrf.mxu0
      %v5188 = vpop.f32.mrf.mxu0
      %v5189 = vadd.f32 0.0, %v5188
      %v5190 = vpop.f32.mrf.mxu0
      %5191 = vmatprep.mubr.bf16.mxu0 0
      %5192 = vmatmul.mubr.bf16.gmra.mxu0 %v4464
      %v5193 = vpop.f32.mrf.mxu0
      %v5194 = vadd.f32 0.0, %v5193
      %v5195 = vpop.f32.mrf.mxu0
      %v5196 = vpop.f32.mrf.mxu0
      %v5197 = vadd.f32 0.0, %v5196
      %v5198 = vpop.f32.mrf.mxu0
      %5199 = vmatprep.mubr.bf16.mxu0 0
      %5200 = vmatmul.mubr.bf16.gmra.mxu0 %v4467
      %v5201 = vpop.f32.mrf.mxu0
      %v5202 = vadd.f32 0.0, %v5201
      %v5203 = vpop.f32.mrf.mxu0
      %v5204 = vpop.f32.mrf.mxu0
      %v5205 = vadd.f32 0.0, %v5204
      %v5206 = vpop.f32.mrf.mxu0
      %5207 = vmatprep.mubr.bf16.mxu0 0
      %5208 = vmatmul.mubr.bf16.gmra.mxu0 %v4470
      %v5209 = vpop.f32.mrf.mxu0
      %v5210 = vadd.f32 0.0, %v5209
      %v5211 = vpop.f32.mrf.mxu0
      %v5212 = vpop.f32.mrf.mxu0
      %v5213 = vadd.f32 0.0, %v5212
      %v5214 = vpop.f32.mrf.mxu0
      %5215 = vmatprep.mubr.bf16.mxu0 0
      %5216 = vmatmul.mubr.bf16.gmra.mxu0 %v4473
      %v5217 = vpop.f32.mrf.mxu0
      %v5218 = vadd.f32 0.0, %v5217
      %v5219 = vpop.f32.mrf.mxu0
      %v5220 = vpop.f32.mrf.mxu0
      %v5221 = vadd.f32 0.0, %v5220
      %v5222 = vpop.f32.mrf.mxu0
      %5223 = vmatprep.mubr.bf16.mxu0 0
      %5224 = vmatmul.mubr.bf16.gmra.mxu0 %v4476
      %v5225 = vpop.f32.mrf.mxu0
      %v5226 = vadd.f32 0.0, %v5225
      %v5227 = vpop.f32.mrf.mxu0
      %v5228 = vpop.f32.mrf.mxu0
      %v5229 = vadd.f32 0.0, %v5228
      %v5230 = vpop.f32.mrf.mxu0
      %5231 = vmatprep.mubr.bf16.mxu0 0
      %5232 = vmatmul.mubr.bf16.gmra.mxu0 %v5074
      %v5233 = vpop.f32.mrf.mxu0
      %v5234 = vadd.f32 0.0, %v5233
      %v5235 = vpop.f32.mrf.mxu0
      %v5236 = vpop.f32.mrf.mxu0
      %v5237 = vadd.f32 0.0, %v5236
      %v5238 = vpop.f32.mrf.mxu0
      %5239 = vdwg.mxu0
      %v5240 = vadd.f32 %v5031, %v5114
      %v5241 = vadd.f32 %v5032, %v5117
      %v5242 = vadd.f32 %v5033, %v5122
      %v5243 = vadd.f32 %v5034, %v5125
      %v5244 = vadd.f32 %v5035, %v5130
      %v5245 = vadd.f32 %v5036, %v5133
      %v5246 = vadd.f32 %v5037, %v5138
      %v5247 = vadd.f32 %v5038, %v5141
      %v5248 = vadd.f32 %v5039, %v5146
      %v5249 = vadd.f32 %v5040, %v5149
      %v5250 = vadd.f32 %v5041, %v5154
      %v5251 = vadd.f32 %v5042, %v5157
      %v5252 = vadd.f32 %v5043, %v5162
      %v5253 = vadd.f32 %v5044, %v5165
      %v5254 = vadd.f32 %v5045, %v5170
      %v5255 = vadd.f32 %v5046, %v5173
      %v5256 = vadd.f32 %v5047, %v5178
      %v5257 = vadd.f32 %v5048, %v5181
      %v5258 = vadd.f32 %v5049, %v5186
      %v5259 = vadd.f32 %v5050, %v5189
      %v5260 = vadd.f32 %v5051, %v5194
      %v5261 = vadd.f32 %v5052, %v5197
      %v5262 = vadd.f32 %v5053, %v5202
      %v5263 = vadd.f32 %v5054, %v5205
      %v5264 = vadd.f32 %v5055, %v5210
      %v5265 = vadd.f32 %v5056, %v5213
      %v5266 = vadd.f32 %v5057, %v5218
      %v5267 = vadd.f32 %v5058, %v5221
      %v5268 = vadd.f32 %v5059, %v5226
      %v5269 = vadd.f32 %v5060, %v5229
      %v5270 = vadd.f32 %v5061, %v5234
      %v5271 = vadd.f32 %v5062, %v5237
      %v5273 = vshrl.u32 %v3694, 16
      %v5275 = vrot.slane %v5273, 4
      %v5276 = vshll.u32 %v3694, 16
      %v5278 = vrot.slane %v5276, 5
      %v5279 = vor.u32 %v5275, %v5278
      %v5280 = vrot.slane %v5279, 4
      %v5282 = vshll.u32 %v3695, 16
      %v5284 = vrot.slane %v5282, 5
      %v5285 = vsel %vm284, %v5280, %v5284
      %v5286 = vshrl.u32 %v3695, 16
      %v5288 = vrot.slane %v5286, 4
      %v5289 = vor.u32 %v5288, %v5284
      %v5290 = vrot.slane %v5289, 4
      %v5292 = vshll.u32 %v3696, 16
      %v5294 = vrot.slane %v5292, 5
      %v5295 = vsel %vm284, %v5290, %v5294
      %v5296 = vld [vmem:[%s3 + $0x8] sm:$0x3]
      %v5297 = vunpack.c.l.b16 %v5285
      %v5298 = vunpack.c.l.b16 %v5295
      %v5299 = vpack.c.b16 %v5298, %v5297
      %v5301 = vsel %vm722, %v5299, 0
      %v5304 = vsel %vm771, %v5296, 0
      %5306 = vmatprep.subr.bf16.mxu0 0
      %5307 = vmatpush1.bf16.msra.mxu0 0
      %5308 = vmatprep.subr.bf16.mxu0 0
      %5309 = vmatpush1.bf16.msra.mxu0 0
      %5310 = vmatprep.subr.bf16.mxu0 0
      %5311 = vmatpush1.bf16.msra.mxu0 0
      %5312 = vmatprep.subr.bf16.mxu0 0
      %5313 = vmatpush1.bf16.msra.mxu0 0
      %5314 = vmatprep.subr.bf16.mxu0 0
      %5315 = vmatpush1.bf16.msra.mxu0 0
      %5316 = vmatprep.subr.bf16.mxu0 0
      %5317 = vmatpush1.bf16.msra.mxu0 0
      %5318 = vmatprep.subr.bf16.mxu0 0
      %5319 = vmatpush1.bf16.msra.mxu0 0
      %5320 = vmatprep.subr.bf16.mxu0 0
      %5321 = vmatpush1.bf16.msra.mxu0 %v5304
      %5322 = vmatprep.subr.bf16.mxu0 0
      %5323 = vmatpush2.bf16.msra.mxu0 0
      %5324 = vmatprep.subr.bf16.mxu0 0
      %5325 = vmatpush2.bf16.msra.mxu0 0
      %5326 = vmatprep.subr.bf16.mxu0 0
      %5327 = vmatpush2.bf16.msra.mxu0 0
      %5328 = vmatprep.subr.bf16.mxu0 0
      %5329 = vmatpush2.bf16.msra.mxu0 0
      %5330 = vmatprep.subr.bf16.mxu0 0
      %5331 = vmatpush2.bf16.msra.mxu0 0
      %5332 = vmatprep.subr.bf16.mxu0 0
      %5333 = vmatpush2.bf16.msra.mxu0 0
      %5334 = vmatprep.subr.bf16.mxu0 0
      %5335 = vmatpush2.bf16.msra.mxu0 0
      %5336 = vmatprep.subr.bf16.mxu0 0
      %5337 = vmatpush2.bf16.msra.mxu0 0
      %5338 = vmatprep.mubr.bf16.mxu0 0
      %5339 = vmatmul.mubr.bf16.gmra.mxu0 %v4142
      %v5340 = vpop.f32.mrf.mxu0
      %v5341 = vadd.f32 0.0, %v5340
      %v5342 = vpop.f32.mrf.mxu0
      %v5343 = vpop.f32.mrf.mxu0
      %v5344 = vadd.f32 0.0, %v5343
      %v5345 = vpop.f32.mrf.mxu0
      %5346 = vmatprep.mubr.bf16.mxu0 0
      %5347 = vmatmul.mubr.bf16.gmra.mxu0 %v4145
      %v5348 = vpop.f32.mrf.mxu0
      %v5349 = vadd.f32 0.0, %v5348
      %v5350 = vpop.f32.mrf.mxu0
      %v5351 = vpop.f32.mrf.mxu0
      %v5352 = vadd.f32 0.0, %v5351
      %v5353 = vpop.f32.mrf.mxu0
      %5354 = vmatprep.mubr.bf16.mxu0 0
      %5355 = vmatmul.mubr.bf16.gmra.mxu0 %v4148
      %v5356 = vpop.f32.mrf.mxu0
      %v5357 = vadd.f32 0.0, %v5356
      %v5358 = vpop.f32.mrf.mxu0
      %v5359 = vpop.f32.mrf.mxu0
      %v5360 = vadd.f32 0.0, %v5359
      %v5361 = vpop.f32.mrf.mxu0
      %5362 = vmatprep.mubr.bf16.mxu0 0
      %5363 = vmatmul.mubr.bf16.gmra.mxu0 %v4151
      %v5364 = vpop.f32.mrf.mxu0
      %v5365 = vadd.f32 0.0, %v5364
      %v5366 = vpop.f32.mrf.mxu0
      %v5367 = vpop.f32.mrf.mxu0
      %v5368 = vadd.f32 0.0, %v5367
      %v5369 = vpop.f32.mrf.mxu0
      %5370 = vmatprep.mubr.bf16.mxu0 0
      %5371 = vmatmul.mubr.bf16.gmra.mxu0 %v4154
      %v5372 = vpop.f32.mrf.mxu0
      %v5373 = vadd.f32 0.0, %v5372
      %v5374 = vpop.f32.mrf.mxu0
      %v5375 = vpop.f32.mrf.mxu0
      %v5376 = vadd.f32 0.0, %v5375
      %v5377 = vpop.f32.mrf.mxu0
      %5378 = vmatprep.mubr.bf16.mxu0 0
      %5379 = vmatmul.mubr.bf16.gmra.mxu0 %v4157
      %v5380 = vpop.f32.mrf.mxu0
      %v5381 = vadd.f32 0.0, %v5380
      %v5382 = vpop.f32.mrf.mxu0
      %v5383 = vpop.f32.mrf.mxu0
      %v5384 = vadd.f32 0.0, %v5383
      %v5385 = vpop.f32.mrf.mxu0
      %5386 = vmatprep.mubr.bf16.mxu0 0
      %5387 = vmatmul.mubr.bf16.gmra.mxu0 %v4160
      %v5388 = vpop.f32.mrf.mxu0
      %v5389 = vadd.f32 0.0, %v5388
      %v5390 = vpop.f32.mrf.mxu0
      %v5391 = vpop.f32.mrf.mxu0
      %v5392 = vadd.f32 0.0, %v5391
      %v5393 = vpop.f32.mrf.mxu0
      %5394 = vmatprep.mubr.bf16.mxu0 0
      %5395 = vmatmul.mubr.bf16.gmra.mxu0 %v4163
      %v5396 = vpop.f32.mrf.mxu0
      %v5397 = vadd.f32 0.0, %v5396
      %v5398 = vpop.f32.mrf.mxu0
      %v5399 = vpop.f32.mrf.mxu0
      %v5400 = vadd.f32 0.0, %v5399
      %v5401 = vpop.f32.mrf.mxu0
      %5402 = vmatprep.mubr.bf16.mxu0 0
      %5403 = vmatmul.mubr.bf16.gmra.mxu0 %v4166
      %v5404 = vpop.f32.mrf.mxu0
      %v5405 = vadd.f32 0.0, %v5404
      %v5406 = vpop.f32.mrf.mxu0
      %v5407 = vpop.f32.mrf.mxu0
      %v5408 = vadd.f32 0.0, %v5407
      %v5409 = vpop.f32.mrf.mxu0
      %5410 = vmatprep.mubr.bf16.mxu0 0
      %5411 = vmatmul.mubr.bf16.gmra.mxu0 %v4169
      %v5412 = vpop.f32.mrf.mxu0
      %v5413 = vadd.f32 0.0, %v5412
      %v5414 = vpop.f32.mrf.mxu0
      %v5415 = vpop.f32.mrf.mxu0
      %v5416 = vadd.f32 0.0, %v5415
      %v5417 = vpop.f32.mrf.mxu0
      %5418 = vmatprep.mubr.bf16.mxu0 0
      %5419 = vmatmul.mubr.bf16.gmra.mxu0 %v4172
      %v5420 = vpop.f32.mrf.mxu0
      %v5421 = vadd.f32 0.0, %v5420
      %v5422 = vpop.f32.mrf.mxu0
      %v5423 = vpop.f32.mrf.mxu0
      %v5424 = vadd.f32 0.0, %v5423
      %v5425 = vpop.f32.mrf.mxu0
      %5426 = vmatprep.mubr.bf16.mxu0 0
      %5427 = vmatmul.mubr.bf16.gmra.mxu0 %v4175
      %v5428 = vpop.f32.mrf.mxu0
      %v5429 = vadd.f32 0.0, %v5428
      %v5430 = vpop.f32.mrf.mxu0
      %v5431 = vpop.f32.mrf.mxu0
      %v5432 = vadd.f32 0.0, %v5431
      %v5433 = vpop.f32.mrf.mxu0
      %5434 = vmatprep.mubr.bf16.mxu0 0
      %5435 = vmatmul.mubr.bf16.gmra.mxu0 %v4178
      %v5436 = vpop.f32.mrf.mxu0
      %v5437 = vadd.f32 0.0, %v5436
      %v5438 = vpop.f32.mrf.mxu0
      %v5439 = vpop.f32.mrf.mxu0
      %v5440 = vadd.f32 0.0, %v5439
      %v5441 = vpop.f32.mrf.mxu0
      %5442 = vmatprep.mubr.bf16.mxu0 0
      %5443 = vmatmul.mubr.bf16.gmra.mxu0 %v4181
      %v5444 = vpop.f32.mrf.mxu0
      %v5445 = vadd.f32 0.0, %v5444
      %v5446 = vpop.f32.mrf.mxu0
      %v5447 = vpop.f32.mrf.mxu0
      %v5448 = vadd.f32 0.0, %v5447
      %v5449 = vpop.f32.mrf.mxu0
      %5450 = vmatprep.mubr.bf16.mxu0 0
      %5451 = vmatmul.mubr.bf16.gmra.mxu0 %v4184
      %v5452 = vpop.f32.mrf.mxu0
      %v5453 = vadd.f32 0.0, %v5452
      %v5454 = vpop.f32.mrf.mxu0
      %v5455 = vpop.f32.mrf.mxu0
      %v5456 = vadd.f32 0.0, %v5455
      %v5457 = vpop.f32.mrf.mxu0
      %5458 = vmatprep.mubr.bf16.mxu0 0
      %5459 = vmatmul.mubr.bf16.gmra.mxu0 %v5301
      %v5460 = vpop.f32.mrf.mxu0
      %v5461 = vadd.f32 0.0, %v5460
      %v5462 = vpop.f32.mrf.mxu0
      %v5463 = vpop.f32.mrf.mxu0
      %v5464 = vadd.f32 0.0, %v5463
      %v5465 = vpop.f32.mrf.mxu0
      %5466 = vdwg.mxu0
      %v5467 = vadd.f32 %v5240, %v5341
      %v5468 = vadd.f32 %v5241, %v5344
      %v5469 = vadd.f32 %v5242, %v5349
      %v5470 = vadd.f32 %v5243, %v5352
      %v5471 = vadd.f32 %v5244, %v5357
      %v5472 = vadd.f32 %v5245, %v5360
      %v5473 = vadd.f32 %v5246, %v5365
      %v5474 = vadd.f32 %v5247, %v5368
      %v5475 = vadd.f32 %v5248, %v5373
      %v5476 = vadd.f32 %v5249, %v5376
      %v5477 = vadd.f32 %v5250, %v5381
      %v5478 = vadd.f32 %v5251, %v5384
      %v5479 = vadd.f32 %v5252, %v5389
      %v5480 = vadd.f32 %v5253, %v5392
      %v5481 = vadd.f32 %v5254, %v5397
      %v5482 = vadd.f32 %v5255, %v5400
      %v5483 = vadd.f32 %v5256, %v5405
      %v5484 = vadd.f32 %v5257, %v5408
      %v5485 = vadd.f32 %v5258, %v5413
      %v5486 = vadd.f32 %v5259, %v5416
      %v5487 = vadd.f32 %v5260, %v5421
      %v5488 = vadd.f32 %v5261, %v5424
      %v5489 = vadd.f32 %v5262, %v5429
      %v5490 = vadd.f32 %v5263, %v5432
      %v5491 = vadd.f32 %v5264, %v5437
      %v5492 = vadd.f32 %v5265, %v5440
      %v5493 = vadd.f32 %v5266, %v5445
      %v5494 = vadd.f32 %v5267, %v5448
      %v5495 = vadd.f32 %v5268, %v5453
      %v5496 = vadd.f32 %v5269, %v5456
      %v5497 = vadd.f32 %v5270, %v5461
      %v5498 = vadd.f32 %v5271, %v5464
      %v5500 = vrot.slane %v3694, 5
      %v5501 = vrot.slane %v5500, 4
      %v5502 = vrot.slane %v3695, 5
      %v5503 = vsel %vm1246, %v5501, %v5502
      %v5504 = vrot.slane %v5502, 4
      %v5505 = vrot.slane %v3696, 5
      %v5506 = vsel %vm1246, %v5504, %v5505
      %v5507 = vld [vmem:[%s3 + $0x8] sm:$0xc]
      %v5508 = vunpack.c.l.b16 %v5503
      %v5509 = vunpack.c.l.b16 %v5506
      %v5510 = vpack.c.b16 %v5509, %v5508
      %v5512 = vunpack.c.l.b16 %v5507
      %v5513 = vpack.c.b16 %v5512, %v5512
      %v5514 = vrot.slane %v5513, 2
      %v5516 = vsel %vm722, %v5510, 0
      %v5519 = vsel %vm771, %v5514, 0
      %5521 = vmatprep.subr.bf16.mxu0 0
      %5522 = vmatpush1.bf16.msra.mxu0 0
      %5523 = vmatprep.subr.bf16.mxu0 0
      %5524 = vmatpush1.bf16.msra.mxu0 0
      %5525 = vmatprep.subr.bf16.mxu0 0
      %5526 = vmatpush1.bf16.msra.mxu0 0
      %5527 = vmatprep.subr.bf16.mxu0 0
      %5528 = vmatpush1.bf16.msra.mxu0 0
      %5529 = vmatprep.subr.bf16.mxu0 0
      %5530 = vmatpush1.bf16.msra.mxu0 0
      %5531 = vmatprep.subr.bf16.mxu0 0
      %5532 = vmatpush1.bf16.msra.mxu0 0
      %5533 = vmatprep.subr.bf16.mxu0 0
      %5534 = vmatpush1.bf16.msra.mxu0 0
      %5535 = vmatprep.subr.bf16.mxu0 0
      %5536 = vmatpush1.bf16.msra.mxu0 %v5519
      %5537 = vmatprep.subr.bf16.mxu0 0
      %5538 = vmatpush2.bf16.msra.mxu0 0
      %5539 = vmatprep.subr.bf16.mxu0 0
      %5540 = vmatpush2.bf16.msra.mxu0 0
      %5541 = vmatprep.subr.bf16.mxu0 0
      %5542 = vmatpush2.bf16.msra.mxu0 0
      %5543 = vmatprep.subr.bf16.mxu0 0
      %5544 = vmatpush2.bf16.msra.mxu0 0
      %5545 = vmatprep.subr.bf16.mxu0 0
      %5546 = vmatpush2.bf16.msra.mxu0 0
      %5547 = vmatprep.subr.bf16.mxu0 0
      %5548 = vmatpush2.bf16.msra.mxu0 0
      %5549 = vmatprep.subr.bf16.mxu0 0
      %5550 = vmatpush2.bf16.msra.mxu0 0
      %5551 = vmatprep.subr.bf16.mxu0 0
      %5552 = vmatpush2.bf16.msra.mxu0 0
      %5553 = vmatprep.mubr.bf16.mxu0 0
      %5554 = vmatmul.mubr.bf16.gmra.mxu0 %v4823
      %v5555 = vpop.f32.mrf.mxu0
      %v5556 = vadd.f32 0.0, %v5555
      %v5557 = vpop.f32.mrf.mxu0
      %v5558 = vpop.f32.mrf.mxu0
      %v5559 = vadd.f32 0.0, %v5558
      %v5560 = vpop.f32.mrf.mxu0
      %5561 = vmatprep.mubr.bf16.mxu0 0
      %5562 = vmatmul.mubr.bf16.gmra.mxu0 %v4826
      %v5563 = vpop.f32.mrf.mxu0
      %v5564 = vadd.f32 0.0, %v5563
      %v5565 = vpop.f32.mrf.mxu0
      %v5566 = vpop.f32.mrf.mxu0
      %v5567 = vadd.f32 0.0, %v5566
      %v5568 = vpop.f32.mrf.mxu0
      %5569 = vmatprep.mubr.bf16.mxu0 0
      %5570 = vmatmul.mubr.bf16.gmra.mxu0 %v4829
      %v5571 = vpop.f32.mrf.mxu0
      %v5572 = vadd.f32 0.0, %v5571
      %v5573 = vpop.f32.mrf.mxu0
      %v5574 = vpop.f32.mrf.mxu0
      %v5575 = vadd.f32 0.0, %v5574
      %v5576 = vpop.f32.mrf.mxu0
      %5577 = vmatprep.mubr.bf16.mxu0 0
      %5578 = vmatmul.mubr.bf16.gmra.mxu0 %v4832
      %v5579 = vpop.f32.mrf.mxu0
      %v5580 = vadd.f32 0.0, %v5579
      %v5581 = vpop.f32.mrf.mxu0
      %v5582 = vpop.f32.mrf.mxu0
      %v5583 = vadd.f32 0.0, %v5582
      %v5584 = vpop.f32.mrf.mxu0
      %5585 = vmatprep.mubr.bf16.mxu0 0
      %5586 = vmatmul.mubr.bf16.gmra.mxu0 %v4835
      %v5587 = vpop.f32.mrf.mxu0
      %v5588 = vadd.f32 0.0, %v5587
      %v5589 = vpop.f32.mrf.mxu0
      %v5590 = vpop.f32.mrf.mxu0
      %v5591 = vadd.f32 0.0, %v5590
      %v5592 = vpop.f32.mrf.mxu0
      %5593 = vmatprep.mubr.bf16.mxu0 0
      %5594 = vmatmul.mubr.bf16.gmra.mxu0 %v4838
      %v5595 = vpop.f32.mrf.mxu0
      %v5596 = vadd.f32 0.0, %v5595
      %v5597 = vpop.f32.mrf.mxu0
      %v5598 = vpop.f32.mrf.mxu0
      %v5599 = vadd.f32 0.0, %v5598
      %v5600 = vpop.f32.mrf.mxu0
      %5601 = vmatprep.mubr.bf16.mxu0 0
      %5602 = vmatmul.mubr.bf16.gmra.mxu0 %v4841
      %v5603 = vpop.f32.mrf.mxu0
      %v5604 = vadd.f32 0.0, %v5603
      %v5605 = vpop.f32.mrf.mxu0
      %v5606 = vpop.f32.mrf.mxu0
      %v5607 = vadd.f32 0.0, %v5606
      %v5608 = vpop.f32.mrf.mxu0
      %5609 = vmatprep.mubr.bf16.mxu0 0
      %5610 = vmatmul.mubr.bf16.gmra.mxu0 %v4844
      %v5611 = vpop.f32.mrf.mxu0
      %v5612 = vadd.f32 0.0, %v5611
      %v5613 = vpop.f32.mrf.mxu0
      %v5614 = vpop.f32.mrf.mxu0
      %v5615 = vadd.f32 0.0, %v5614
      %v5616 = vpop.f32.mrf.mxu0
      %5617 = vmatprep.mubr.bf16.mxu0 0
      %5618 = vmatmul.mubr.bf16.gmra.mxu0 %v4847
      %v5619 = vpop.f32.mrf.mxu0
      %v5620 = vadd.f32 0.0, %v5619
      %v5621 = vpop.f32.mrf.mxu0
      %v5622 = vpop.f32.mrf.mxu0
      %v5623 = vadd.f32 0.0, %v5622
      %v5624 = vpop.f32.mrf.mxu0
      %5625 = vmatprep.mubr.bf16.mxu0 0
      %5626 = vmatmul.mubr.bf16.gmra.mxu0 %v4850
      %v5627 = vpop.f32.mrf.mxu0
      %v5628 = vadd.f32 0.0, %v5627
      %v5629 = vpop.f32.mrf.mxu0
      %v5630 = vpop.f32.mrf.mxu0
      %v5631 = vadd.f32 0.0, %v5630
      %v5632 = vpop.f32.mrf.mxu0
      %5633 = vmatprep.mubr.bf16.mxu0 0
      %5634 = vmatmul.mubr.bf16.gmra.mxu0 %v4853
      %v5635 = vpop.f32.mrf.mxu0
      %v5636 = vadd.f32 0.0, %v5635
      %v5637 = vpop.f32.mrf.mxu0
      %v5638 = vpop.f32.mrf.mxu0
      %v5639 = vadd.f32 0.0, %v5638
      %v5640 = vpop.f32.mrf.mxu0
      %5641 = vmatprep.mubr.bf16.mxu0 0
      %5642 = vmatmul.mubr.bf16.gmra.mxu0 %v4856
      %v5643 = vpop.f32.mrf.mxu0
      %v5644 = vadd.f32 0.0, %v5643
      %v5645 = vpop.f32.mrf.mxu0
      %v5646 = vpop.f32.mrf.mxu0
      %v5647 = vadd.f32 0.0, %v5646
      %v5648 = vpop.f32.mrf.mxu0
      %5649 = vmatprep.mubr.bf16.mxu0 0
      %5650 = vmatmul.mubr.bf16.gmra.mxu0 %v4859
      %v5651 = vpop.f32.mrf.mxu0
      %v5652 = vadd.f32 0.0, %v5651
      %v5653 = vpop.f32.mrf.mxu0
      %v5654 = vpop.f32.mrf.mxu0
      %v5655 = vadd.f32 0.0, %v5654
      %v5656 = vpop.f32.mrf.mxu0
      %5657 = vmatprep.mubr.bf16.mxu0 0
      %5658 = vmatmul.mubr.bf16.gmra.mxu0 %v4862
      %v5659 = vpop.f32.mrf.mxu0
      %v5660 = vadd.f32 0.0, %v5659
      %v5661 = vpop.f32.mrf.mxu0
      %v5662 = vpop.f32.mrf.mxu0
      %v5663 = vadd.f32 0.0, %v5662
      %v5664 = vpop.f32.mrf.mxu0
      %5665 = vmatprep.mubr.bf16.mxu0 0
      %5666 = vmatmul.mubr.bf16.gmra.mxu0 %v4865
      %v5667 = vpop.f32.mrf.mxu0
      %v5668 = vadd.f32 0.0, %v5667
      %v5669 = vpop.f32.mrf.mxu0
      %v5670 = vpop.f32.mrf.mxu0
      %v5671 = vadd.f32 0.0, %v5670
      %v5672 = vpop.f32.mrf.mxu0
      %5673 = vmatprep.mubr.bf16.mxu0 0
      %5674 = vmatmul.mubr.bf16.gmra.mxu0 %v5516
      %v5675 = vpop.f32.mrf.mxu0
      %v5676 = vadd.f32 0.0, %v5675
      %v5677 = vpop.f32.mrf.mxu0
      %v5678 = vpop.f32.mrf.mxu0
      %v5679 = vadd.f32 0.0, %v5678
      %v5680 = vpop.f32.mrf.mxu0
      %5681 = vdwg.mxu0
      %v5682 = vadd.f32 %v5467, %v5556
      %v5683 = vadd.f32 %v5468, %v5559
      %v5684 = vadd.f32 %v5469, %v5564
      %v5685 = vadd.f32 %v5470, %v5567
      %v5686 = vadd.f32 %v5471, %v5572
      %v5687 = vadd.f32 %v5472, %v5575
      %v5688 = vadd.f32 %v5473, %v5580
      %v5689 = vadd.f32 %v5474, %v5583
      %v5690 = vadd.f32 %v5475, %v5588
      %v5691 = vadd.f32 %v5476, %v5591
      %v5692 = vadd.f32 %v5477, %v5596
      %v5693 = vadd.f32 %v5478, %v5599
      %v5694 = vadd.f32 %v5479, %v5604
      %v5695 = vadd.f32 %v5480, %v5607
      %v5696 = vadd.f32 %v5481, %v5612
      %v5697 = vadd.f32 %v5482, %v5615
      %v5698 = vadd.f32 %v5483, %v5620
      %v5699 = vadd.f32 %v5484, %v5623
      %v5700 = vadd.f32 %v5485, %v5628
      %v5701 = vadd.f32 %v5486, %v5631
      %v5702 = vadd.f32 %v5487, %v5636
      %v5703 = vadd.f32 %v5488, %v5639
      %v5704 = vadd.f32 %v5489, %v5644
      %v5705 = vadd.f32 %v5490, %v5647
      %v5706 = vadd.f32 %v5491, %v5652
      %v5707 = vadd.f32 %v5492, %v5655
      %v5708 = vadd.f32 %v5493, %v5660
      %v5709 = vadd.f32 %v5494, %v5663
      %v5710 = vadd.f32 %v5495, %v5668
      %v5711 = vadd.f32 %v5496, %v5671
      %v5712 = vadd.f32 %v5497, %v5676
      %v5713 = vadd.f32 %v5498, %v5679
      %v5714 = vld [vmem:[%s3 + $0xc] sm:$0x3]
      %v5717 = vunpack.c.l.b16 %v3697
      %v5718 = vunpack.c.l.b16 %v3698
      %v5719 = vpack.c.b16 %v5718, %v5717
      %v5721 = vsel %vm722, %v5719, 0
      %v5724 = vsel %vm771, %v5714, 0
      %5726 = vmatprep.subr.bf16.mxu0 0
      %5727 = vmatpush1.bf16.msra.mxu0 0
      %5728 = vmatprep.subr.bf16.mxu0 0
      %5729 = vmatpush1.bf16.msra.mxu0 0
      %5730 = vmatprep.subr.bf16.mxu0 0
      %5731 = vmatpush1.bf16.msra.mxu0 0
      %5732 = vmatprep.subr.bf16.mxu0 0
      %5733 = vmatpush1.bf16.msra.mxu0 0
      %5734 = vmatprep.subr.bf16.mxu0 0
      %5735 = vmatpush1.bf16.msra.mxu0 0
      %5736 = vmatprep.subr.bf16.mxu0 0
      %5737 = vmatpush1.bf16.msra.mxu0 0
      %5738 = vmatprep.subr.bf16.mxu0 0
      %5739 = vmatpush1.bf16.msra.mxu0 0
      %5740 = vmatprep.subr.bf16.mxu0 0
      %5741 = vmatpush1.bf16.msra.mxu0 %v5724
      %5742 = vmatprep.subr.bf16.mxu0 0
      %5743 = vmatpush2.bf16.msra.mxu0 0
      %5744 = vmatprep.subr.bf16.mxu0 0
      %5745 = vmatpush2.bf16.msra.mxu0 0
      %5746 = vmatprep.subr.bf16.mxu0 0
      %5747 = vmatpush2.bf16.msra.mxu0 0
      %5748 = vmatprep.subr.bf16.mxu0 0
      %5749 = vmatpush2.bf16.msra.mxu0 0
      %5750 = vmatprep.subr.bf16.mxu0 0
      %5751 = vmatpush2.bf16.msra.mxu0 0
      %5752 = vmatprep.subr.bf16.mxu0 0
      %5753 = vmatpush2.bf16.msra.mxu0 0
      %5754 = vmatprep.subr.bf16.mxu0 0
      %5755 = vmatpush2.bf16.msra.mxu0 0
      %5756 = vmatprep.subr.bf16.mxu0 0
      %5757 = vmatpush2.bf16.msra.mxu0 0
      %5758 = vmatprep.mubr.bf16.mxu0 0
      %5759 = vmatmul.mubr.bf16.gmra.mxu0 %v4437
      %v5760 = vpop.f32.mrf.mxu0
      %v5761 = vadd.f32 0.0, %v5760
      %v5762 = vpop.f32.mrf.mxu0
      %v5763 = vpop.f32.mrf.mxu0
      %v5764 = vadd.f32 0.0, %v5763
      %v5765 = vpop.f32.mrf.mxu0
      %5766 = vmatprep.mubr.bf16.mxu0 0
      %5767 = vmatmul.mubr.bf16.gmra.mxu0 %v4440
      %v5768 = vpop.f32.mrf.mxu0
      %v5769 = vadd.f32 0.0, %v5768
      %v5770 = vpop.f32.mrf.mxu0
      %v5771 = vpop.f32.mrf.mxu0
      %v5772 = vadd.f32 0.0, %v5771
      %v5773 = vpop.f32.mrf.mxu0
      %5774 = vmatprep.mubr.bf16.mxu0 0
      %5775 = vmatmul.mubr.bf16.gmra.mxu0 %v4443
      %v5776 = vpop.f32.mrf.mxu0
      %v5777 = vadd.f32 0.0, %v5776
      %v5778 = vpop.f32.mrf.mxu0
      %v5779 = vpop.f32.mrf.mxu0
      %v5780 = vadd.f32 0.0, %v5779
      %v5781 = vpop.f32.mrf.mxu0
      %5782 = vmatprep.mubr.bf16.mxu0 0
      %5783 = vmatmul.mubr.bf16.gmra.mxu0 %v4446
      %v5784 = vpop.f32.mrf.mxu0
      %v5785 = vadd.f32 0.0, %v5784
      %v5786 = vpop.f32.mrf.mxu0
      %v5787 = vpop.f32.mrf.mxu0
      %v5788 = vadd.f32 0.0, %v5787
      %v5789 = vpop.f32.mrf.mxu0
      %5790 = vmatprep.mubr.bf16.mxu0 0
      %5791 = vmatmul.mubr.bf16.gmra.mxu0 %v4449
      %v5792 = vpop.f32.mrf.mxu0
      %v5793 = vadd.f32 0.0, %v5792
      %v5794 = vpop.f32.mrf.mxu0
      %v5795 = vpop.f32.mrf.mxu0
      %v5796 = vadd.f32 0.0, %v5795
      %v5797 = vpop.f32.mrf.mxu0
      %5798 = vmatprep.mubr.bf16.mxu0 0
      %5799 = vmatmul.mubr.bf16.gmra.mxu0 %v4452
      %v5800 = vpop.f32.mrf.mxu0
      %v5801 = vadd.f32 0.0, %v5800
      %v5802 = vpop.f32.mrf.mxu0
      %v5803 = vpop.f32.mrf.mxu0
      %v5804 = vadd.f32 0.0, %v5803
      %v5805 = vpop.f32.mrf.mxu0
      %5806 = vmatprep.mubr.bf16.mxu0 0
      %5807 = vmatmul.mubr.bf16.gmra.mxu0 %v4455
      %v5808 = vpop.f32.mrf.mxu0
      %v5809 = vadd.f32 0.0, %v5808
      %v5810 = vpop.f32.mrf.mxu0
      %v5811 = vpop.f32.mrf.mxu0
      %v5812 = vadd.f32 0.0, %v5811
      %v5813 = vpop.f32.mrf.mxu0
      %5814 = vmatprep.mubr.bf16.mxu0 0
      %5815 = vmatmul.mubr.bf16.gmra.mxu0 %v4458
      %v5816 = vpop.f32.mrf.mxu0
      %v5817 = vadd.f32 0.0, %v5816
      %v5818 = vpop.f32.mrf.mxu0
      %v5819 = vpop.f32.mrf.mxu0
      %v5820 = vadd.f32 0.0, %v5819
      %v5821 = vpop.f32.mrf.mxu0
      %5822 = vmatprep.mubr.bf16.mxu0 0
      %5823 = vmatmul.mubr.bf16.gmra.mxu0 %v4461
      %v5824 = vpop.f32.mrf.mxu0
      %v5825 = vadd.f32 0.0, %v5824
      %v5826 = vpop.f32.mrf.mxu0
      %v5827 = vpop.f32.mrf.mxu0
      %v5828 = vadd.f32 0.0, %v5827
      %v5829 = vpop.f32.mrf.mxu0
      %5830 = vmatprep.mubr.bf16.mxu0 0
      %5831 = vmatmul.mubr.bf16.gmra.mxu0 %v4464
      %v5832 = vpop.f32.mrf.mxu0
      %v5833 = vadd.f32 0.0, %v5832
      %v5834 = vpop.f32.mrf.mxu0
      %v5835 = vpop.f32.mrf.mxu0
      %v5836 = vadd.f32 0.0, %v5835
      %v5837 = vpop.f32.mrf.mxu0
      %5838 = vmatprep.mubr.bf16.mxu0 0
      %5839 = vmatmul.mubr.bf16.gmra.mxu0 %v4467
      %v5840 = vpop.f32.mrf.mxu0
      %v5841 = vadd.f32 0.0, %v5840
      %v5842 = vpop.f32.mrf.mxu0
      %v5843 = vpop.f32.mrf.mxu0
      %v5844 = vadd.f32 0.0, %v5843
      %v5845 = vpop.f32.mrf.mxu0
      %5846 = vmatprep.mubr.bf16.mxu0 0
      %5847 = vmatmul.mubr.bf16.gmra.mxu0 %v4470
      %v5848 = vpop.f32.mrf.mxu0
      %v5849 = vadd.f32 0.0, %v5848
      %v5850 = vpop.f32.mrf.mxu0
      %v5851 = vpop.f32.mrf.mxu0
      %v5852 = vadd.f32 0.0, %v5851
      %v5853 = vpop.f32.mrf.mxu0
      %5854 = vmatprep.mubr.bf16.mxu0 0
      %5855 = vmatmul.mubr.bf16.gmra.mxu0 %v4473
      %v5856 = vpop.f32.mrf.mxu0
      %v5857 = vadd.f32 0.0, %v5856
      %v5858 = vpop.f32.mrf.mxu0
      %v5859 = vpop.f32.mrf.mxu0
      %v5860 = vadd.f32 0.0, %v5859
      %v5861 = vpop.f32.mrf.mxu0
      %5862 = vmatprep.mubr.bf16.mxu0 0
      %5863 = vmatmul.mubr.bf16.gmra.mxu0 %v4476
      %v5864 = vpop.f32.mrf.mxu0
      %v5865 = vadd.f32 0.0, %v5864
      %v5866 = vpop.f32.mrf.mxu0
      %v5867 = vpop.f32.mrf.mxu0
      %v5868 = vadd.f32 0.0, %v5867
      %v5869 = vpop.f32.mrf.mxu0
      %5870 = vmatprep.mubr.bf16.mxu0 0
      %5871 = vmatmul.mubr.bf16.gmra.mxu0 %v5074
      %v5872 = vpop.f32.mrf.mxu0
      %v5873 = vadd.f32 0.0, %v5872
      %v5874 = vpop.f32.mrf.mxu0
      %v5875 = vpop.f32.mrf.mxu0
      %v5876 = vadd.f32 0.0, %v5875
      %v5877 = vpop.f32.mrf.mxu0
      %5878 = vmatprep.mubr.bf16.mxu0 0
      %5879 = vmatmul.mubr.bf16.gmra.mxu0 %v5721
      %v5880 = vpop.f32.mrf.mxu0
      %v5881 = vadd.f32 0.0, %v5880
      %v5882 = vpop.f32.mrf.mxu0
      %v5883 = vpop.f32.mrf.mxu0
      %v5884 = vadd.f32 0.0, %v5883
      %v5885 = vpop.f32.mrf.mxu0
      %5886 = vdwg.mxu0
      %v5887 = vadd.f32 %v5682, %v5761
      %v5888 = vadd.f32 %v5683, %v5764
      %v5889 = vadd.f32 %v5684, %v5769
      %v5890 = vadd.f32 %v5685, %v5772
      %v5891 = vadd.f32 %v5686, %v5777
      %v5892 = vadd.f32 %v5687, %v5780
      %v5893 = vadd.f32 %v5688, %v5785
      %v5894 = vadd.f32 %v5689, %v5788
      %v5895 = vadd.f32 %v5690, %v5793
      %v5896 = vadd.f32 %v5691, %v5796
      %v5897 = vadd.f32 %v5692, %v5801
      %v5898 = vadd.f32 %v5693, %v5804
      %v5899 = vadd.f32 %v5694, %v5809
      %v5900 = vadd.f32 %v5695, %v5812
      %v5901 = vadd.f32 %v5696, %v5817
      %v5902 = vadd.f32 %v5697, %v5820
      %v5903 = vadd.f32 %v5698, %v5825
      %v5904 = vadd.f32 %v5699, %v5828
      %v5905 = vadd.f32 %v5700, %v5833
      %v5906 = vadd.f32 %v5701, %v5836
      %v5907 = vadd.f32 %v5702, %v5841
      %v5908 = vadd.f32 %v5703, %v5844
      %v5909 = vadd.f32 %v5704, %v5849
      %v5910 = vadd.f32 %v5705, %v5852
      %v5911 = vadd.f32 %v5706, %v5857
      %v5912 = vadd.f32 %v5707, %v5860
      %v5913 = vadd.f32 %v5708, %v5865
      %v5914 = vadd.f32 %v5709, %v5868
      %v5915 = vadd.f32 %v5710, %v5873
      %v5916 = vadd.f32 %v5711, %v5876
      %v5917 = vadd.f32 %v5712, %v5881
      %v5918 = vadd.f32 %v5713, %v5884
      %v5920 = vshrl.u32 %v3697, 16
      %v5922 = vrot.slane %v5920, 4
      %v5923 = vshll.u32 %v3697, 16
      %v5925 = vrot.slane %v5923, 5
      %v5926 = vor.u32 %v5922, %v5925
      %v5927 = vrot.slane %v5926, 4
      %v5929 = vshll.u32 %v3698, 16
      %v5931 = vrot.slane %v5929, 5
      %v5932 = vsel %vm284, %v5927, %v5931
      %v5933 = vshrl.u32 %v3698, 16
      %v5935 = vrot.slane %v5933, 4
      %v5936 = vor.u32 %v5935, %v5931
      %v5937 = vrot.slane %v5936, 4
      %v5939 = vshll.u32 %v3699, 16
      %v5941 = vrot.slane %v5939, 5
      %v5942 = vsel %vm284, %v5937, %v5941
      %v5943 = vld [vmem:[%s3 + $0xc] sm:$0xc]
      %v5944 = vunpack.c.l.b16 %v5932
      %v5945 = vunpack.c.l.b16 %v5942
      %v5946 = vpack.c.b16 %v5945, %v5944
      %v5948 = vunpack.c.l.b16 %v5943
      %v5949 = vpack.c.b16 %v5948, %v5948
      %v5950 = vrot.slane %v5949, 2
      %v5952 = vsel %vm722, %v5946, 0
      %v5955 = vsel %vm771, %v5950, 0
      %5957 = vmatprep.subr.bf16.mxu0 0
      %5958 = vmatpush1.bf16.msra.mxu0 0
      %5959 = vmatprep.subr.bf16.mxu0 0
      %5960 = vmatpush1.bf16.msra.mxu0 0
      %5961 = vmatprep.subr.bf16.mxu0 0
      %5962 = vmatpush1.bf16.msra.mxu0 0
      %5963 = vmatprep.subr.bf16.mxu0 0
      %5964 = vmatpush1.bf16.msra.mxu0 0
      %5965 = vmatprep.subr.bf16.mxu0 0
      %5966 = vmatpush1.bf16.msra.mxu0 0
      %5967 = vmatprep.subr.bf16.mxu0 0
      %5968 = vmatpush1.bf16.msra.mxu0 0
      %5969 = vmatprep.subr.bf16.mxu0 0
      %5970 = vmatpush1.bf16.msra.mxu0 0
      %5971 = vmatprep.subr.bf16.mxu0 0
      %5972 = vmatpush1.bf16.msra.mxu0 %v5955
      %5973 = vmatprep.subr.bf16.mxu0 0
      %5974 = vmatpush2.bf16.msra.mxu0 0
      %5975 = vmatprep.subr.bf16.mxu0 0
      %5976 = vmatpush2.bf16.msra.mxu0 0
      %5977 = vmatprep.subr.bf16.mxu0 0
      %5978 = vmatpush2.bf16.msra.mxu0 0
      %5979 = vmatprep.subr.bf16.mxu0 0
      %5980 = vmatpush2.bf16.msra.mxu0 0
      %5981 = vmatprep.subr.bf16.mxu0 0
      %5982 = vmatpush2.bf16.msra.mxu0 0
      %5983 = vmatprep.subr.bf16.mxu0 0
      %5984 = vmatpush2.bf16.msra.mxu0 0
      %5985 = vmatprep.subr.bf16.mxu0 0
      %5986 = vmatpush2.bf16.msra.mxu0 0
      %5987 = vmatprep.subr.bf16.mxu0 0
      %5988 = vmatpush2.bf16.msra.mxu0 0
      %5989 = vmatprep.mubr.bf16.mxu0 0
      %5990 = vmatmul.mubr.bf16.gmra.mxu0 %v4145
      %v5991 = vpop.f32.mrf.mxu0
      %v5992 = vadd.f32 0.0, %v5991
      %v5993 = vpop.f32.mrf.mxu0
      %v5994 = vpop.f32.mrf.mxu0
      %v5995 = vadd.f32 0.0, %v5994
      %v5996 = vpop.f32.mrf.mxu0
      %5997 = vmatprep.mubr.bf16.mxu0 0
      %5998 = vmatmul.mubr.bf16.gmra.mxu0 %v4148
      %v5999 = vpop.f32.mrf.mxu0
      %v6000 = vadd.f32 0.0, %v5999
      %v6001 = vpop.f32.mrf.mxu0
      %v6002 = vpop.f32.mrf.mxu0
      %v6003 = vadd.f32 0.0, %v6002
      %v6004 = vpop.f32.mrf.mxu0
      %6005 = vmatprep.mubr.bf16.mxu0 0
      %6006 = vmatmul.mubr.bf16.gmra.mxu0 %v4151
      %v6007 = vpop.f32.mrf.mxu0
      %v6008 = vadd.f32 0.0, %v6007
      %v6009 = vpop.f32.mrf.mxu0
      %v6010 = vpop.f32.mrf.mxu0
      %v6011 = vadd.f32 0.0, %v6010
      %v6012 = vpop.f32.mrf.mxu0
      %6013 = vmatprep.mubr.bf16.mxu0 0
      %6014 = vmatmul.mubr.bf16.gmra.mxu0 %v4154
      %v6015 = vpop.f32.mrf.mxu0
      %v6016 = vadd.f32 0.0, %v6015
      %v6017 = vpop.f32.mrf.mxu0
      %v6018 = vpop.f32.mrf.mxu0
      %v6019 = vadd.f32 0.0, %v6018
      %v6020 = vpop.f32.mrf.mxu0
      %6021 = vmatprep.mubr.bf16.mxu0 0
      %6022 = vmatmul.mubr.bf16.gmra.mxu0 %v4157
      %v6023 = vpop.f32.mrf.mxu0
      %v6024 = vadd.f32 0.0, %v6023
      %v6025 = vpop.f32.mrf.mxu0
      %v6026 = vpop.f32.mrf.mxu0
      %v6027 = vadd.f32 0.0, %v6026
      %v6028 = vpop.f32.mrf.mxu0
      %6029 = vmatprep.mubr.bf16.mxu0 0
      %6030 = vmatmul.mubr.bf16.gmra.mxu0 %v4160
      %v6031 = vpop.f32.mrf.mxu0
      %v6032 = vadd.f32 0.0, %v6031
      %v6033 = vpop.f32.mrf.mxu0
      %v6034 = vpop.f32.mrf.mxu0
      %v6035 = vadd.f32 0.0, %v6034
      %v6036 = vpop.f32.mrf.mxu0
      %6037 = vmatprep.mubr.bf16.mxu0 0
      %6038 = vmatmul.mubr.bf16.gmra.mxu0 %v4163
      %v6039 = vpop.f32.mrf.mxu0
      %v6040 = vadd.f32 0.0, %v6039
      %v6041 = vpop.f32.mrf.mxu0
      %v6042 = vpop.f32.mrf.mxu0
      %v6043 = vadd.f32 0.0, %v6042
      %v6044 = vpop.f32.mrf.mxu0
      %6045 = vmatprep.mubr.bf16.mxu0 0
      %6046 = vmatmul.mubr.bf16.gmra.mxu0 %v4166
      %v6047 = vpop.f32.mrf.mxu0
      %v6048 = vadd.f32 0.0, %v6047
      %v6049 = vpop.f32.mrf.mxu0
      %v6050 = vpop.f32.mrf.mxu0
      %v6051 = vadd.f32 0.0, %v6050
      %v6052 = vpop.f32.mrf.mxu0
      %6053 = vmatprep.mubr.bf16.mxu0 0
      %6054 = vmatmul.mubr.bf16.gmra.mxu0 %v4169
      %v6055 = vpop.f32.mrf.mxu0
      %v6056 = vadd.f32 0.0, %v6055
      %v6057 = vpop.f32.mrf.mxu0
      %v6058 = vpop.f32.mrf.mxu0
      %v6059 = vadd.f32 0.0, %v6058
      %v6060 = vpop.f32.mrf.mxu0
      %6061 = vmatprep.mubr.bf16.mxu0 0
      %6062 = vmatmul.mubr.bf16.gmra.mxu0 %v4172
      %v6063 = vpop.f32.mrf.mxu0
      %v6064 = vadd.f32 0.0, %v6063
      %v6065 = vpop.f32.mrf.mxu0
      %v6066 = vpop.f32.mrf.mxu0
      %v6067 = vadd.f32 0.0, %v6066
      %v6068 = vpop.f32.mrf.mxu0
      %6069 = vmatprep.mubr.bf16.mxu0 0
      %6070 = vmatmul.mubr.bf16.gmra.mxu0 %v4175
      %v6071 = vpop.f32.mrf.mxu0
      %v6072 = vadd.f32 0.0, %v6071
      %v6073 = vpop.f32.mrf.mxu0
      %v6074 = vpop.f32.mrf.mxu0
      %v6075 = vadd.f32 0.0, %v6074
      %v6076 = vpop.f32.mrf.mxu0
      %6077 = vmatprep.mubr.bf16.mxu0 0
      %6078 = vmatmul.mubr.bf16.gmra.mxu0 %v4178
      %v6079 = vpop.f32.mrf.mxu0
      %v6080 = vadd.f32 0.0, %v6079
      %v6081 = vpop.f32.mrf.mxu0
      %v6082 = vpop.f32.mrf.mxu0
      %v6083 = vadd.f32 0.0, %v6082
      %v6084 = vpop.f32.mrf.mxu0
      %6085 = vmatprep.mubr.bf16.mxu0 0
      %6086 = vmatmul.mubr.bf16.gmra.mxu0 %v4181
      %v6087 = vpop.f32.mrf.mxu0
      %v6088 = vadd.f32 0.0, %v6087
      %v6089 = vpop.f32.mrf.mxu0
      %v6090 = vpop.f32.mrf.mxu0
      %v6091 = vadd.f32 0.0, %v6090
      %v6092 = vpop.f32.mrf.mxu0
      %6093 = vmatprep.mubr.bf16.mxu0 0
      %6094 = vmatmul.mubr.bf16.gmra.mxu0 %v4184
      %v6095 = vpop.f32.mrf.mxu0
      %v6096 = vadd.f32 0.0, %v6095
      %v6097 = vpop.f32.mrf.mxu0
      %v6098 = vpop.f32.mrf.mxu0
      %v6099 = vadd.f32 0.0, %v6098
      %v6100 = vpop.f32.mrf.mxu0
      %6101 = vmatprep.mubr.bf16.mxu0 0
      %6102 = vmatmul.mubr.bf16.gmra.mxu0 %v5301
      %v6103 = vpop.f32.mrf.mxu0
      %v6104 = vadd.f32 0.0, %v6103
      %v6105 = vpop.f32.mrf.mxu0
      %v6106 = vpop.f32.mrf.mxu0
      %v6107 = vadd.f32 0.0, %v6106
      %v6108 = vpop.f32.mrf.mxu0
      %6109 = vmatprep.mubr.bf16.mxu0 0
      %6110 = vmatmul.mubr.bf16.gmra.mxu0 %v5952
      %v6111 = vpop.f32.mrf.mxu0
      %v6112 = vadd.f32 0.0, %v6111
      %v6113 = vpop.f32.mrf.mxu0
      %v6114 = vpop.f32.mrf.mxu0
      %v6115 = vadd.f32 0.0, %v6114
      %v6116 = vpop.f32.mrf.mxu0
      %6117 = vdwg.mxu0
      %v6118 = vadd.f32 %v5887, %v5992
      %v6119 = vadd.f32 %v5888, %v5995
      %v6120 = vadd.f32 %v5889, %v6000
      %v6121 = vadd.f32 %v5890, %v6003
      %v6122 = vadd.f32 %v5891, %v6008
      %v6123 = vadd.f32 %v5892, %v6011
      %v6124 = vadd.f32 %v5893, %v6016
      %v6125 = vadd.f32 %v5894, %v6019
      %v6126 = vadd.f32 %v5895, %v6024
      %v6127 = vadd.f32 %v5896, %v6027
      %v6128 = vadd.f32 %v5897, %v6032
      %v6129 = vadd.f32 %v5898, %v6035
      %v6130 = vadd.f32 %v5899, %v6040
      %v6131 = vadd.f32 %v5900, %v6043
      %v6132 = vadd.f32 %v5901, %v6048
      %v6133 = vadd.f32 %v5902, %v6051
      %v6134 = vadd.f32 %v5903, %v6056
      %v6135 = vadd.f32 %v5904, %v6059
      %v6136 = vadd.f32 %v5905, %v6064
      %v6137 = vadd.f32 %v5906, %v6067
      %v6138 = vadd.f32 %v5907, %v6072
      %v6139 = vadd.f32 %v5908, %v6075
      %v6140 = vadd.f32 %v5909, %v6080
      %v6141 = vadd.f32 %v5910, %v6083
      %v6142 = vadd.f32 %v5911, %v6088
      %v6143 = vadd.f32 %v5912, %v6091
      %v6144 = vadd.f32 %v5913, %v6096
      %v6145 = vadd.f32 %v5914, %v6099
      %v6146 = vadd.f32 %v5915, %v6104
      %v6147 = vadd.f32 %v5916, %v6107
      %v6148 = vadd.f32 %v5917, %v6112
      %v6149 = vadd.f32 %v5918, %v6115
      %v6151 = vrot.slane %v3697, 5
      %v6152 = vrot.slane %v6151, 4
      %v6153 = vrot.slane %v3698, 5
      %v6154 = vsel %vm1246, %v6152, %v6153
      %v6155 = vrot.slane %v6153, 4
      %v6156 = vrot.slane %v3699, 5
      %v6157 = vsel %vm1246, %v6155, %v6156
      %v6158 = vld [vmem:[%s3 + $0x10] sm:$0x3]
      %v6159 = vunpack.c.l.b16 %v6154
      %v6160 = vunpack.c.l.b16 %v6157
      %v6161 = vpack.c.b16 %v6160, %v6159
      %v6163 = vsel %vm722, %v6161, 0
      %v6166 = vsel %vm771, %v6158, 0
      %6168 = vmatprep.subr.bf16.mxu0 0
      %6169 = vmatpush1.bf16.msra.mxu0 0
      %6170 = vmatprep.subr.bf16.mxu0 0
      %6171 = vmatpush1.bf16.msra.mxu0 0
      %6172 = vmatprep.subr.bf16.mxu0 0
      %6173 = vmatpush1.bf16.msra.mxu0 0
      %6174 = vmatprep.subr.bf16.mxu0 0
      %6175 = vmatpush1.bf16.msra.mxu0 0
      %6176 = vmatprep.subr.bf16.mxu0 0
      %6177 = vmatpush1.bf16.msra.mxu0 0
      %6178 = vmatprep.subr.bf16.mxu0 0
      %6179 = vmatpush1.bf16.msra.mxu0 0
      %6180 = vmatprep.subr.bf16.mxu0 0
      %6181 = vmatpush1.bf16.msra.mxu0 0
      %6182 = vmatprep.subr.bf16.mxu0 0
      %6183 = vmatpush1.bf16.msra.mxu0 %v6166
      %6184 = vmatprep.subr.bf16.mxu0 0
      %6185 = vmatpush2.bf16.msra.mxu0 0
      %6186 = vmatprep.subr.bf16.mxu0 0
      %6187 = vmatpush2.bf16.msra.mxu0 0
      %6188 = vmatprep.subr.bf16.mxu0 0
      %6189 = vmatpush2.bf16.msra.mxu0 0
      %6190 = vmatprep.subr.bf16.mxu0 0
      %6191 = vmatpush2.bf16.msra.mxu0 0
      %6192 = vmatprep.subr.bf16.mxu0 0
      %6193 = vmatpush2.bf16.msra.mxu0 0
      %6194 = vmatprep.subr.bf16.mxu0 0
      %6195 = vmatpush2.bf16.msra.mxu0 0
      %6196 = vmatprep.subr.bf16.mxu0 0
      %6197 = vmatpush2.bf16.msra.mxu0 0
      %6198 = vmatprep.subr.bf16.mxu0 0
      %6199 = vmatpush2.bf16.msra.mxu0 0
      %6200 = vmatprep.mubr.bf16.mxu0 0
      %6201 = vmatmul.mubr.bf16.gmra.mxu0 %v4826
      %v6202 = vpop.f32.mrf.mxu0
      %v6203 = vadd.f32 0.0, %v6202
      %v6204 = vpop.f32.mrf.mxu0
      %v6205 = vpop.f32.mrf.mxu0
      %v6206 = vadd.f32 0.0, %v6205
      %v6207 = vpop.f32.mrf.mxu0
      %6208 = vmatprep.mubr.bf16.mxu0 0
      %6209 = vmatmul.mubr.bf16.gmra.mxu0 %v4829
      %v6210 = vpop.f32.mrf.mxu0
      %v6211 = vadd.f32 0.0, %v6210
      %v6212 = vpop.f32.mrf.mxu0
      %v6213 = vpop.f32.mrf.mxu0
      %v6214 = vadd.f32 0.0, %v6213
      %v6215 = vpop.f32.mrf.mxu0
      %6216 = vmatprep.mubr.bf16.mxu0 0
      %6217 = vmatmul.mubr.bf16.gmra.mxu0 %v4832
      %v6218 = vpop.f32.mrf.mxu0
      %v6219 = vadd.f32 0.0, %v6218
      %v6220 = vpop.f32.mrf.mxu0
      %v6221 = vpop.f32.mrf.mxu0
      %v6222 = vadd.f32 0.0, %v6221
      %v6223 = vpop.f32.mrf.mxu0
      %6224 = vmatprep.mubr.bf16.mxu0 0
      %6225 = vmatmul.mubr.bf16.gmra.mxu0 %v4835
      %v6226 = vpop.f32.mrf.mxu0
      %v6227 = vadd.f32 0.0, %v6226
      %v6228 = vpop.f32.mrf.mxu0
      %v6229 = vpop.f32.mrf.mxu0
      %v6230 = vadd.f32 0.0, %v6229
      %v6231 = vpop.f32.mrf.mxu0
      %6232 = vmatprep.mubr.bf16.mxu0 0
      %6233 = vmatmul.mubr.bf16.gmra.mxu0 %v4838
      %v6234 = vpop.f32.mrf.mxu0
      %v6235 = vadd.f32 0.0, %v6234
      %v6236 = vpop.f32.mrf.mxu0
      %v6237 = vpop.f32.mrf.mxu0
      %v6238 = vadd.f32 0.0, %v6237
      %v6239 = vpop.f32.mrf.mxu0
      %6240 = vmatprep.mubr.bf16.mxu0 0
      %6241 = vmatmul.mubr.bf16.gmra.mxu0 %v4841
      %v6242 = vpop.f32.mrf.mxu0
      %v6243 = vadd.f32 0.0, %v6242
      %v6244 = vpop.f32.mrf.mxu0
      %v6245 = vpop.f32.mrf.mxu0
      %v6246 = vadd.f32 0.0, %v6245
      %v6247 = vpop.f32.mrf.mxu0
      %6248 = vmatprep.mubr.bf16.mxu0 0
      %6249 = vmatmul.mubr.bf16.gmra.mxu0 %v4844
      %v6250 = vpop.f32.mrf.mxu0
      %v6251 = vadd.f32 0.0, %v6250
      %v6252 = vpop.f32.mrf.mxu0
      %v6253 = vpop.f32.mrf.mxu0
      %v6254 = vadd.f32 0.0, %v6253
      %v6255 = vpop.f32.mrf.mxu0
      %6256 = vmatprep.mubr.bf16.mxu0 0
      %6257 = vmatmul.mubr.bf16.gmra.mxu0 %v4847
      %v6258 = vpop.f32.mrf.mxu0
      %v6259 = vadd.f32 0.0, %v6258
      %v6260 = vpop.f32.mrf.mxu0
      %v6261 = vpop.f32.mrf.mxu0
      %v6262 = vadd.f32 0.0, %v6261
      %v6263 = vpop.f32.mrf.mxu0
      %6264 = vmatprep.mubr.bf16.mxu0 0
      %6265 = vmatmul.mubr.bf16.gmra.mxu0 %v4850
      %v6266 = vpop.f32.mrf.mxu0
      %v6267 = vadd.f32 0.0, %v6266
      %v6268 = vpop.f32.mrf.mxu0
      %v6269 = vpop.f32.mrf.mxu0
      %v6270 = vadd.f32 0.0, %v6269
      %v6271 = vpop.f32.mrf.mxu0
      %6272 = vmatprep.mubr.bf16.mxu0 0
      %6273 = vmatmul.mubr.bf16.gmra.mxu0 %v4853
      %v6274 = vpop.f32.mrf.mxu0
      %v6275 = vadd.f32 0.0, %v6274
      %v6276 = vpop.f32.mrf.mxu0
      %v6277 = vpop.f32.mrf.mxu0
      %v6278 = vadd.f32 0.0, %v6277
      %v6279 = vpop.f32.mrf.mxu0
      %6280 = vmatprep.mubr.bf16.mxu0 0
      %6281 = vmatmul.mubr.bf16.gmra.mxu0 %v4856
      %v6282 = vpop.f32.mrf.mxu0
      %v6283 = vadd.f32 0.0, %v6282
      %v6284 = vpop.f32.mrf.mxu0
      %v6285 = vpop.f32.mrf.mxu0
      %v6286 = vadd.f32 0.0, %v6285
      %v6287 = vpop.f32.mrf.mxu0
      %6288 = vmatprep.mubr.bf16.mxu0 0
      %6289 = vmatmul.mubr.bf16.gmra.mxu0 %v4859
      %v6290 = vpop.f32.mrf.mxu0
      %v6291 = vadd.f32 0.0, %v6290
      %v6292 = vpop.f32.mrf.mxu0
      %v6293 = vpop.f32.mrf.mxu0
      %v6294 = vadd.f32 0.0, %v6293
      %v6295 = vpop.f32.mrf.mxu0
      %6296 = vmatprep.mubr.bf16.mxu0 0
      %6297 = vmatmul.mubr.bf16.gmra.mxu0 %v4862
      %v6298 = vpop.f32.mrf.mxu0
      %v6299 = vadd.f32 0.0, %v6298
      %v6300 = vpop.f32.mrf.mxu0
      %v6301 = vpop.f32.mrf.mxu0
      %v6302 = vadd.f32 0.0, %v6301
      %v6303 = vpop.f32.mrf.mxu0
      %6304 = vmatprep.mubr.bf16.mxu0 0
      %6305 = vmatmul.mubr.bf16.gmra.mxu0 %v4865
      %v6306 = vpop.f32.mrf.mxu0
      %v6307 = vadd.f32 0.0, %v6306
      %v6308 = vpop.f32.mrf.mxu0
      %v6309 = vpop.f32.mrf.mxu0
      %v6310 = vadd.f32 0.0, %v6309
      %v6311 = vpop.f32.mrf.mxu0
      %6312 = vmatprep.mubr.bf16.mxu0 0
      %6313 = vmatmul.mubr.bf16.gmra.mxu0 %v5516
      %v6314 = vpop.f32.mrf.mxu0
      %v6315 = vadd.f32 0.0, %v6314
      %v6316 = vpop.f32.mrf.mxu0
      %v6317 = vpop.f32.mrf.mxu0
      %v6318 = vadd.f32 0.0, %v6317
      %v6319 = vpop.f32.mrf.mxu0
      %6320 = vmatprep.mubr.bf16.mxu0 0
      %6321 = vmatmul.mubr.bf16.gmra.mxu0 %v6163
      %v6322 = vpop.f32.mrf.mxu0
      %v6323 = vadd.f32 0.0, %v6322
      %v6324 = vpop.f32.mrf.mxu0
      %v6325 = vpop.f32.mrf.mxu0
      %v6326 = vadd.f32 0.0, %v6325
      %v6327 = vpop.f32.mrf.mxu0
      %6328 = vdwg.mxu0
      %v6329 = vadd.f32 %v6118, %v6203
      %v6330 = vadd.f32 %v6119, %v6206
      %v6331 = vadd.f32 %v6120, %v6211
      %v6332 = vadd.f32 %v6121, %v6214
      %v6333 = vadd.f32 %v6122, %v6219
      %v6334 = vadd.f32 %v6123, %v6222
      %v6335 = vadd.f32 %v6124, %v6227
      %v6336 = vadd.f32 %v6125, %v6230
      %v6337 = vadd.f32 %v6126, %v6235
      %v6338 = vadd.f32 %v6127, %v6238
      %v6339 = vadd.f32 %v6128, %v6243
      %v6340 = vadd.f32 %v6129, %v6246
      %v6341 = vadd.f32 %v6130, %v6251
      %v6342 = vadd.f32 %v6131, %v6254
      %v6343 = vadd.f32 %v6132, %v6259
      %v6344 = vadd.f32 %v6133, %v6262
      %v6345 = vadd.f32 %v6134, %v6267
      %v6346 = vadd.f32 %v6135, %v6270
      %v6347 = vadd.f32 %v6136, %v6275
      %v6348 = vadd.f32 %v6137, %v6278
      %v6349 = vadd.f32 %v6138, %v6283
      %v6350 = vadd.f32 %v6139, %v6286
      %v6351 = vadd.f32 %v6140, %v6291
      %v6352 = vadd.f32 %v6141, %v6294
      %v6353 = vadd.f32 %v6142, %v6299
      %v6354 = vadd.f32 %v6143, %v6302
      %v6355 = vadd.f32 %v6144, %v6307
      %v6356 = vadd.f32 %v6145, %v6310
      %v6357 = vadd.f32 %v6146, %v6315
      %v6358 = vadd.f32 %v6147, %v6318
      %v6359 = vadd.f32 %v6148, %v6323
      %v6360 = vadd.f32 %v6149, %v6326
      %v6361 = vunpack.c.l.bf16 %v322
      %v6362 = vunpack.c.l.bf16 %v332
      %v6363 = vunpack.c.l.bf16 %v346
      %v6364 = vunpack.c.l.bf16 %v356
      %v6365 = vunpack.c.l.bf16 %v370
      %v6366 = vunpack.c.l.bf16 %v380
      %v6367 = vunpack.c.l.bf16 %v394
      %v6368 = vunpack.c.l.bf16 %v404
      %v6369 = vunpack.c.l.bf16 %v418
      %v6370 = vunpack.c.l.bf16 %v428
      %v6371 = vunpack.c.l.bf16 %v442
      %v6372 = vunpack.c.l.bf16 %v452
      %v6373 = vunpack.c.l.bf16 %v466
      %v6374 = vunpack.c.l.bf16 %v476
      %v6375 = vunpack.c.l.bf16 %v490
      %v6376 = vunpack.c.l.bf16 %v500
      %v6377 = vunpack.c.l.bf16 %v514
      %v6378 = vunpack.c.l.bf16 %v524
      %v6379 = vunpack.c.l.bf16 %v538
      %v6380 = vunpack.c.l.bf16 %v548
      %v6381 = vunpack.c.l.bf16 %v562
      %v6382 = vunpack.c.l.bf16 %v572
      %v6383 = vunpack.c.l.bf16 %v586
      %v6384 = vunpack.c.l.bf16 %v596
      %v6385 = vunpack.c.l.bf16 %v610
      %v6386 = vunpack.c.l.bf16 %v620
      %v6387 = vunpack.c.l.bf16 %v634
      %v6388 = vunpack.c.l.bf16 %v644
      %v6389 = vunpack.c.l.bf16 %v658
      %v6390 = vunpack.c.l.bf16 %v668
      %v6391 = vunpack.c.l.bf16 %v1874
      %v6392 = vunpack.c.l.bf16 %v1884
      %v6393 = vld [vmem:[%s4] sm:$0x1]
      %v6395 = vlaneseq
      %v6396 = vshrl.u32 %v6395, 7
      %v6397 = vsub.s32 0, %v6396
      %v6398 = vrot.slane %v6393, %v6397
      %v6400 = vadd.f32 %v6329, %v6398
      %v6401 = vadd.f32 %v6330, %v6398
      %v6402 = vadd.f32 %v6331, %v6398
      %v6403 = vadd.f32 %v6332, %v6398
      %v6404 = vadd.f32 %v6333, %v6398
      %v6405 = vadd.f32 %v6334, %v6398
      %v6406 = vadd.f32 %v6335, %v6398
      %v6407 = vadd.f32 %v6336, %v6398
      %v6408 = vadd.f32 %v6337, %v6398
      %v6409 = vadd.f32 %v6338, %v6398
      %v6410 = vadd.f32 %v6339, %v6398
      %v6411 = vadd.f32 %v6340, %v6398
      %v6412 = vadd.f32 %v6341, %v6398
      %v6413 = vadd.f32 %v6342, %v6398
      %v6414 = vadd.f32 %v6343, %v6398
      %v6415 = vadd.f32 %v6344, %v6398
      %v6416 = vadd.f32 %v6345, %v6398
      %v6417 = vadd.f32 %v6346, %v6398
      %v6418 = vadd.f32 %v6347, %v6398
      %v6419 = vadd.f32 %v6348, %v6398
      %v6420 = vadd.f32 %v6349, %v6398
      %v6421 = vadd.f32 %v6350, %v6398
      %v6422 = vadd.f32 %v6351, %v6398
      %v6423 = vadd.f32 %v6352, %v6398
      %v6424 = vadd.f32 %v6353, %v6398
      %v6425 = vadd.f32 %v6354, %v6398
      %v6426 = vadd.f32 %v6355, %v6398
      %v6427 = vadd.f32 %v6356, %v6398
      %v6428 = vadd.f32 %v6357, %v6398
      %v6429 = vadd.f32 %v6358, %v6398
      %v6430 = vadd.f32 %v6359, %v6398
      %v6431 = vadd.f32 %v6360, %v6398
      %v6432 = vadd.f32 %v6400, %v6361
      %v6433 = vadd.f32 %v6401, %v6362
      %v6434 = vadd.f32 %v6402, %v6363
      %v6435 = vadd.f32 %v6403, %v6364
      %v6436 = vadd.f32 %v6404, %v6365
      %v6437 = vadd.f32 %v6405, %v6366
      %v6438 = vadd.f32 %v6406, %v6367
      %v6439 = vadd.f32 %v6407, %v6368
      %v6440 = vadd.f32 %v6408, %v6369
      %v6441 = vadd.f32 %v6409, %v6370
      %v6442 = vadd.f32 %v6410, %v6371
      %v6443 = vadd.f32 %v6411, %v6372
      %v6444 = vadd.f32 %v6412, %v6373
      %v6445 = vadd.f32 %v6413, %v6374
      %v6446 = vadd.f32 %v6414, %v6375
      %v6447 = vadd.f32 %v6415, %v6376
      %v6448 = vadd.f32 %v6416, %v6377
      %v6449 = vadd.f32 %v6417, %v6378
      %v6450 = vadd.f32 %v6418, %v6379
      %v6451 = vadd.f32 %v6419, %v6380
      %v6452 = vadd.f32 %v6420, %v6381
      %v6453 = vadd.f32 %v6421, %v6382
      %v6454 = vadd.f32 %v6422, %v6383
      %v6455 = vadd.f32 %v6423, %v6384
      %v6456 = vadd.f32 %v6424, %v6385
      %v6457 = vadd.f32 %v6425, %v6386
      %v6458 = vadd.f32 %v6426, %v6387
      %v6459 = vadd.f32 %v6427, %v6388
      %v6460 = vadd.f32 %v6428, %v6389
      %v6461 = vadd.f32 %v6429, %v6390
      %v6462 = vadd.f32 %v6430, %v6391
      %v6463 = vadd.f32 %v6431, %v6392
      %v6464 = vmax.f32 %v6432, 0.0
      %v6465 = vmax.f32 %v6433, 0.0
      %v6466 = vmax.f32 %v6434, 0.0
      %v6467 = vmax.f32 %v6435, 0.0
      %v6468 = vmax.f32 %v6436, 0.0
      %v6469 = vmax.f32 %v6437, 0.0
      %v6470 = vmax.f32 %v6438, 0.0
      %v6471 = vmax.f32 %v6439, 0.0
      %v6472 = vmax.f32 %v6440, 0.0
      %v6473 = vmax.f32 %v6441, 0.0
      %v6474 = vmax.f32 %v6442, 0.0
      %v6475 = vmax.f32 %v6443, 0.0
      %v6476 = vmax.f32 %v6444, 0.0
      %v6477 = vmax.f32 %v6445, 0.0
      %v6478 = vmax.f32 %v6446, 0.0
      %v6479 = vmax.f32 %v6447, 0.0
      %v6480 = vmax.f32 %v6448, 0.0
      %v6481 = vmax.f32 %v6449, 0.0
      %v6482 = vmax.f32 %v6450, 0.0
      %v6483 = vmax.f32 %v6451, 0.0
      %v6484 = vmax.f32 %v6452, 0.0
      %v6485 = vmax.f32 %v6453, 0.0
      %v6486 = vmax.f32 %v6454, 0.0
      %v6487 = vmax.f32 %v6455, 0.0
      %v6488 = vmax.f32 %v6456, 0.0
      %v6489 = vmax.f32 %v6457, 0.0
      %v6490 = vmax.f32 %v6458, 0.0
      %v6491 = vmax.f32 %v6459, 0.0
      %v6492 = vmax.f32 %v6460, 0.0
      %v6493 = vmax.f32 %v6461, 0.0
      %v6494 = vmax.f32 %v6462, 0.0
      %v6495 = vmax.f32 %v6463, 0.0
      %6496 = vst.msk [vmem:[%s224] sm:$0xff] %vm722, %v6464
      %6497 = vst.msk [vmem:[%s224 + $0x8] sm:$0xff] %vm722, %v6465
      %6498 = vst.msk [vmem:[%s224 + $0x10] sm:$0xff] %vm722, %v6466
      %6499 = vst.msk [vmem:[%s224 + $0x18] sm:$0xff] %vm722, %v6467
      %6500 = vst.msk [vmem:[%s224 + $0x20] sm:$0xff] %vm722, %v6468
      %6501 = vst.msk [vmem:[%s224 + $0x28] sm:$0xff] %vm722, %v6469
      %6502 = vst.msk [vmem:[%s224 + $0x30] sm:$0xff] %vm722, %v6470
      %6503 = vst.msk [vmem:[%s224 + $0x38] sm:$0xff] %vm722, %v6471
      %6504 = vst.msk [vmem:[%s224 + $0x40] sm:$0xff] %vm722, %v6472
      %6505 = vst.msk [vmem:[%s224 + $0x48] sm:$0xff] %vm722, %v6473
      %6506 = vst.msk [vmem:[%s224 + $0x50] sm:$0xff] %vm722, %v6474
      %6507 = vst.msk [vmem:[%s224 + $0x58] sm:$0xff] %vm722, %v6475
      %6508 = vst.msk [vmem:[%s224 + $0x60] sm:$0xff] %vm722, %v6476
      %6509 = vst.msk [vmem:[%s224 + $0x68] sm:$0xff] %vm722, %v6477
      %6510 = vst.msk [vmem:[%s224 + $0x70] sm:$0xff] %vm722, %v6478
      %6511 = vst.msk [vmem:[%s224 + $0x78] sm:$0xff] %vm722, %v6479
      %6512 = vst.msk [vmem:[%s224 + $0x80] sm:$0xff] %vm722, %v6480
      %6513 = vst.msk [vmem:[%s224 + $0x88] sm:$0xff] %vm722, %v6481
      %6514 = vst.msk [vmem:[%s224 + $0x90] sm:$0xff] %vm722, %v6482
      %6515 = vst.msk [vmem:[%s224 + $0x98] sm:$0xff] %vm722, %v6483
      %6516 = vst.msk [vmem:[%s224 + $0xa0] sm:$0xff] %vm722, %v6484
      %6517 = vst.msk [vmem:[%s224 + $0xa8] sm:$0xff] %vm722, %v6485
      %6518 = vst.msk [vmem:[%s224 + $0xb0] sm:$0xff] %vm722, %v6486
      %6519 = vst.msk [vmem:[%s224 + $0xb8] sm:$0xff] %vm722, %v6487
      %6520 = vst.msk [vmem:[%s224 + $0xc0] sm:$0xff] %vm722, %v6488
      %6521 = vst.msk [vmem:[%s224 + $0xc8] sm:$0xff] %vm722, %v6489
      %6522 = vst.msk [vmem:[%s224 + $0xd0] sm:$0xff] %vm722, %v6490
      %6523 = vst.msk [vmem:[%s224 + $0xd8] sm:$0xff] %vm722, %v6491
      %6524 = vst.msk [vmem:[%s224 + $0xe0] sm:$0xff] %vm722, %v6492
      %6525 = vst.msk [vmem:[%s224 + $0xe8] sm:$0xff] %vm722, %v6493
      %6526 = vst.msk [vmem:[%s224 + $0xf0] sm:$0xff] %vm722, %v6494
      %6527 = vst.msk [vmem:[%s224 + $0xf8] sm:$0xff] %vm722, %v6495
      %s6528 = smul.u32 32, %s16
      %p6529 = scmp.lt.s32.totalorder %s6528, 63
      %s6530 = scalar_select %p6529, %s6528, 63
      %s6531 = smul.addr %s6530, 8
      %s6532 = scalar_lea.vmem %s5, %s6531
      // Predicated region
      $region41: #{resblock_forward.1} parent=39 // pred_check
        %p6533 = pneg %p144
      $region42: #{resblock_forward.1} parent=39 // pred_check_branch
        %6535 = sbr.rel (%p6533) target = $region44
      $region43: #{resblock_forward.1} parent=39 // pred_region
        %s6536 = smul.u32 32, %s16
      $region44: #{resblock_forward.1} parent=39 // pred_fallthru
        _
    $region40: #{resblock_forward.1} parent=5 // pred_fallthru
      _
    %p6537 = scmp.le.s32.totalorder 2, %s11
    // Predicated region
    $region45: #{resblock_forward.1} parent=5 // pred_check
      %p6538 = pneg %p6537
    $region46: #{resblock_forward.1} parent=5 // pred_check_branch
      %6540 = sbr.rel (%p6538) target = $region48
    $region47: #{resblock_forward.1} parent=5 // pred_region
      %s6541 = ssub.s32 %s11, 2
      // Predicated region
      $region49: #{resblock_forward.1} parent=47 // pred_check
        %p6542 = pneg %p150
      $region50: #{resblock_forward.1} parent=47 // pred_check_branch
        %6544 = sbr.rel (%p6542) target = $region52
      $region51: #{resblock_forward.1} parent=47 // pred_region
        %s6545 = smul.u32 32, %s17
        %p6546 = scmp.lt.s32.totalorder %s6545, 63
        %s6547 = scalar_select %p6546, %s6545, 63
        %s6548 = smul.addr %s6547, 8
        %s6549 = scalar_lea.vmem %s5, %s6548
      $region52: #{resblock_forward.1} parent=47 // pred_fallthru
        _
    $region48: #{resblock_forward.1} parent=5 // pred_fallthru
      _
  $region6: #{resblock_forward.1} parent=0 // loop_footer
    %s15 = sadd.s32 1, %s11
  $region7: #{resblock_forward.1} parent=0 // loop_footer_branch
    %10 = sbr.rel target = $region3
  $region8: #{resblock_forward.1} parent=0 // loop_exit
    _

</llo_original>
